<compile_context>
chip_gen: v7x
topology: tpu7x:2x2x1
jax: 0.10.0
libtpu: 0.0.40
codegen_flags: <defaults>
</compile_context>

<pallas_src>
import functools

import jax
import jax.numpy as jnp
from jax import lax
from jax.experimental import pallas as pl
from jax.experimental.pallas import tpu as pltpu

EPS = 1e-5  # nn.LayerNorm default eps


def _round_up(v, m):
    return (v + m - 1) // m * m


def _conv1d_block_kernel(x_hbm, w1_ref, g1_ref, b1_ref, dw_ref, g2_ref, b2_ref,
                         w3_ref, prelu_ref, out_ref, xwin, ybuf, dma_sem, *,
                         kernel_size, dilation, block_t, w_rows, pad_l_buf,
                         delta, head_n, tail_start, t_total, c_conv):
    """One (batch, time-tile) grid step.

    x_hbm : full padded (N, T_pad, Cin_p) activation in HBM (pl.ANY)
    xwin  : (w_rows, Cin_p) VMEM scratch -- halo window of this tile
    ybuf  : (w_rows, Cconv_p) VMEM scratch -- normalized conv1x1 activations
    out_ref: (block_t, Cin_p) central rows of this tile
    """
    bi = pl.program_id(0)
    tj = pl.program_id(1)

    # ---- DMA the overlapping (halo) x window for this tile: HBM -> VMEM ----
    start = pl.multiple_of(tj * block_t, 8)
    cp = pltpu.make_async_copy(x_hbm.at[bi, pl.ds(start, w_rows), :], xwin, dma_sem)
    cp.start()
    cp.wait()

    a1 = prelu_ref[0]                      # shared PReLU slopes (SMEM scalars)
    a2 = prelu_ref[1]
    inv_c = jnp.float32(1.0 / c_conv)      # divide by the *real* channel count

    def cln(v, gamma, beta):
        # Channel sums on the (otherwise idle) MXU instead of XLU lane-reduces.
        ones = jnp.ones((v.shape[1], 1), jnp.float32)
        s1 = jnp.dot(v, ones, preferred_element_type=jnp.float32)
        s2 = jnp.dot(v * v, ones, preferred_element_type=jnp.float32)
        mean = s1 * inv_c
        var = jnp.maximum(s2 * inv_c - mean * mean, 0.0)
        return (v - mean) * lax.rsqrt(var + EPS) * gamma + beta

    xw = xwin[...]                                              # (W, Cin_p) f32

    # ---- conv1x1 (pointwise, no bias) on the whole window: MXU matmul ----
    y = jnp.dot(xw.astype(w1_ref.dtype), w1_ref[...],
                preferred_element_type=jnp.float32)             # (W, Cconv_p)
    y = jnp.where(y >= 0, y, a1 * y)                            # PReLU 1
    y = cln(y, g1_ref[...], b1_ref[...])                        # cLN 1
    ybuf[...] = y

    # ---- zero rows outside the real sequence (depthwise conv zero padding +
    #      last-tile tail).  Only the static head/tail row-slabs are touched;
    #      interior rows of every tile skip the select entirely. ----
    if head_n > 0:
        wrow = lax.broadcasted_iota(jnp.int32, (head_n, 1), 0)
        keep = (tj * block_t + wrow - pad_l_buf) >= 0
        ybuf[0:head_n, :] = jnp.where(keep, ybuf[0:head_n, :], 0.0)
    tail_n = w_rows - tail_start
    if tail_n > 0:
        wrow = tail_start + lax.broadcasted_iota(jnp.int32, (tail_n, 1), 0)
        keep = (tj * block_t + wrow - pad_l_buf) < t_total
        ybuf[tail_start:w_rows, :] = jnp.where(keep, ybuf[tail_start:w_rows, :], 0.0)

    # ---- depthwise dilated conv: out[r] = sum_k dw[k] * y[r + delta + k*dil] ----
    dwv = dw_ref[...]                                           # (K, Cconv_p)
    acc = ybuf[delta:delta + block_t, :] * dwv[0:1, :]
    for k in range(1, kernel_size):                             # static, small
        off = delta + k * dilation
        acc = acc + ybuf[off:off + block_t, :] * dwv[k:k + 1, :]
    yd = jnp.where(acc >= 0, acc, a2 * acc)                     # PReLU 2
    yd = cln(yd, g2_ref[...], b2_ref[...])                      # cLN 2

    # ---- sconv (pointwise, no bias) + residual on the central rows ----
    # (central slice is 8-row aligned: pad_l_buf % 8 == 0, block_t % 8 == 0)
    x_c = xw[pad_l_buf:pad_l_buf + block_t, :]
    out = x_c + jnp.dot(yd.astype(w3_ref.dtype), w3_ref[...],
                        preferred_element_type=jnp.float32)
    out_ref[...] = out.astype(out_ref.dtype)


def conv1d_block(x, params, *, kernel_size=3, dilation=1, causal=False,
                 block_t=None, use_bf16_matmul=True):
    """x: (N, Cin, T) float32 (PyTorch NCL layout). Returns (N, Cin, T)."""
    n, cin, t = x.shape
    cconv = params["w1"].shape[0]

    full_pad = dilation * (kernel_size - 1)
    pad_l = full_pad if causal else full_pad // 2
    pad_r = full_pad - pad_l

    # Time tile: big + dilation-aware (halo fraction <= ~25%), capped for VMEM.
    if block_t is None:
        block_t = max(1024, 4 * full_pad)
        if n == 1:
            # keep >= 2 grid steps so both v7x TensorCores have work
            block_t = min(block_t, max(8, _round_up(-(-t // 2), 8)))
    block_t = max(8, min(_round_up(block_t, 8), _round_up(t, 8), 2048))

    num_tiles = -(-t // block_t)
    t_grid = num_tiles * block_t

    pad_l_buf = _round_up(pad_l, 8)             # aligned residual/central slice
    delta = pad_l_buf - pad_l                   # extra (zero) left rows in window
    w_rows = _round_up(pad_l_buf + block_t + pad_r, 8)
    t_padded = (num_tiles - 1) * block_t + w_rows

    last_rows = t - (num_tiles - 1) * block_t   # valid rows in the last tile
    head_n = pad_l_buf                          # rows that may fall before t=0
    tail_start = (pad_l_buf + last_rows) // 8 * 8  # first row that may be >= t (aligned)

    # Lane-dense channel padding (multiples of 128); padded channels stay
    # exactly zero (zero weight rows/cols, zero gamma/beta).
    cin_p = _round_up(cin, 128)
    cconv_p = _round_up(cconv, 128)

    f32 = jnp.float32
    mm_dtype = jnp.bfloat16 if use_bf16_matmul else f32

    # Layout: NCL -> NTC so channels land on the lane axis; pad time so every
    # tile's halo window is in-bounds (left pad_l_buf zeros, right tail zeros).
    x_ntc = jnp.transpose(x, (0, 2, 1)).astype(f32)
    x_ntc = jnp.pad(x_ntc, ((0, 0),
                            (pad_l_buf, t_padded - pad_l_buf - t),
                            (0, cin_p - cin)))

    dc = cconv_p - cconv
    w1t = jnp.pad(jnp.transpose(params["w1"]).astype(f32),
                  ((0, cin_p - cin), (0, dc))).astype(mm_dtype)
    w3t = jnp.pad(jnp.transpose(params["w3"]).astype(f32),
                  ((0, dc), (0, cin_p - cin))).astype(mm_dtype)
    dwt = jnp.pad(jnp.transpose(params["dconv_w"]).astype(f32), ((0, 0), (0, dc)))
    g1 = jnp.pad(params["gamma1"].astype(f32), (0, dc)).reshape(1, cconv_p)
    b1 = jnp.pad(params["beta1"].astype(f32), (0, dc)).reshape(1, cconv_p)
    g2 = jnp.pad(params["gamma2"].astype(f32), (0, dc)).reshape(1, cconv_p)
    b2 = jnp.pad(params["beta2"].astype(f32), (0, dc)).reshape(1, cconv_p)
    prelu = jnp.stack([jnp.asarray(params["a1"]), jnp.asarray(params["a2"])]).astype(f32)

    kernel = functools.partial(
        _conv1d_block_kernel, kernel_size=kernel_size, dilation=dilation,
        block_t=block_t, w_rows=w_rows, pad_l_buf=pad_l_buf, delta=delta,
        head_n=head_n, tail_start=tail_start, t_total=t, c_conv=cconv)

    out_ntc = pl.pallas_call(
        kernel,
        out_shape=jax.ShapeDtypeStruct((n, t_grid, cin_p), f32),
        grid=(n, num_tiles),
        in_specs=[
            pl.BlockSpec(memory_space=pl.ANY),                       # x (stays in HBM)
            pl.BlockSpec((cin_p, cconv_p), lambda b, j: (0, 0)),     # w1^T
            pl.BlockSpec((1, cconv_p), lambda b, j: (0, 0)),         # gamma1
            pl.BlockSpec((1, cconv_p), lambda b, j: (0, 0)),         # beta1
            pl.BlockSpec((kernel_size, cconv_p), lambda b, j: (0, 0)),  # dconv taps
            pl.BlockSpec((1, cconv_p), lambda b, j: (0, 0)),         # gamma2
            pl.BlockSpec((1, cconv_p), lambda b, j: (0, 0)),         # beta2
            pl.BlockSpec((cconv_p, cin_p), lambda b, j: (0, 0)),     # w3^T
            pl.BlockSpec(memory_space=pltpu.MemorySpace.SMEM),       # PReLU scalars
        ],
        out_specs=pl.BlockSpec((None, block_t, cin_p), lambda b, j: (b, j, 0)),
        scratch_shapes=[
            pltpu.VMEM((w_rows, cin_p), f32),      # x halo window
            pltpu.VMEM((w_rows, cconv_p), f32),    # normalized conv1x1 activations
            pltpu.SemaphoreType.DMA,               # window DMA semaphore
        ],
        compiler_params=pltpu.CompilerParams(
            dimension_semantics=("parallel", "parallel"),
            vmem_limit_bytes=48 * 1024 * 1024),
    )(x_ntc, w1t, g1, b1, dwt, g2, b2, w3t, prelu)

    # NOTE: for stacked TCN blocks, keep activations in padded NTC between
    # blocks and fuse this slice/transpose into the consumer.
    out = jnp.transpose(out_ntc[:, :t, :cin], (0, 2, 1))
    return out.astype(x.dtype)


# ----------------------- pure-JAX reference (for checking) -----------------------
def conv1d_block_ref(x, params, *, kernel_size=3, dilation=1, causal=False,
                     bf16_matmul=False):
    pad = dilation * (kernel_size - 1) // 2 if not causal else dilation * (kernel_size - 1)

    def mm_cast(v):  # emulate bf16 matmul inputs (f32 accumulation)
        return v.astype(jnp.bfloat16).astype(jnp.float32) if bf16_matmul else v

    def prelu(v, a):
        return jnp.where(v >= 0, v, a * v)

    def cln(v, g, b):  # channel-wise LayerNorm over C of (N, C, T)
        mean = jnp.mean(v, axis=1, keepdims=True)
        var = jnp.mean((v - mean) ** 2, axis=1, keepdims=True)
        return (v - mean) / jnp.sqrt(var + EPS) * g[None, :, None] + b[None, :, None]

    y = jnp.einsum("ncl,oc->nol", mm_cast(x), mm_cast(params["w1"]))
    y = cln(prelu(y, params["a1"]), params["gamma1"], params["beta1"])
    dw = params["dconv_w"][:, None, :]  # (Cconv, 1, K)
    y = jax.lax.conv_general_dilated(
        y, dw, window_strides=(1,), padding=[(pad, pad)],
        rhs_dilation=(dilation,), dimension_numbers=("NCH", "OIH", "NCH"),
        feature_group_count=dw.shape[0])
    if causal:
        y = y[:, :, :-pad]
    y = cln(prelu(y, params["a2"]), params["gamma2"], params["beta2"])
    y = jnp.einsum("ncl,oc->nol", mm_cast(y), mm_cast(params["w3"]))
    return x + y


if __name__ == "__main__":
    key = jax.random.PRNGKey(0)
    N, Cin, Cconv, T = 2, 64, 160, 200     # exercises channel padding + time tiling
    K = 3
    ks = jax.random.split(key, 8)

    x = jax.random.normal(ks[0], (N, Cin, T), jnp.float32)
    params = {
        "w1": 0.1 * jax.random.normal(ks[1], (Cconv, Cin), jnp.float32),     # conv1x1
        "w3": 0.1 * jax.random.normal(ks[2], (Cin, Cconv), jnp.float32),     # sconv
        "dconv_w": 0.3 * jax.random.normal(ks[3], (Cconv, K), jnp.float32),  # depthwise
        "gamma1": 1.0 + 0.1 * jax.random.normal(ks[4], (Cconv,), jnp.float32),
        "beta1": 0.1 * jax.random.normal(ks[5], (Cconv,), jnp.float32),
        "gamma2": 1.0 + 0.1 * jax.random.normal(ks[6], (Cconv,), jnp.float32),
        "beta2": 0.1 * jax.random.normal(ks[7], (Cconv,), jnp.float32),
        "a1": jnp.float32(0.25),  # nn.PReLU() default shared slope
        "a2": jnp.float32(0.25),
    }

    # 1) Default settings (big tile, bf16 matmul inputs), non-causal.
    out = conv1d_block(x, params, kernel_size=K, dilation=2, causal=False)
    out = jax.block_until_ready(out)
    ref = conv1d_block_ref(x, params, kernel_size=K, dilation=2, causal=False,
                           bf16_matmul=True)
    assert out.shape == x.shape and out.dtype == x.dtype
    err = float(jnp.max(jnp.abs(out - ref)))
    assert jnp.allclose(out, ref, atol=5e-3, rtol=5e-3), err

    # 2) Causal, larger dilation, small tile (multi-tile halo path), exact f32.
    out_c = conv1d_block(x, params, kernel_size=K, dilation=4, causal=True,
                         block_t=64, use_bf16_matmul=False)
    out_c = jax.block_until_ready(out_c)
    ref_c = conv1d_block_ref(x, params, kernel_size=K, dilation=4, causal=True)
    err_c = float(jnp.max(jnp.abs(out_c - ref_c)))
    assert jnp.allclose(out_c, ref_c, atol=2e-3, rtol=2e-3), err_c

    # 3) Non-causal multi-tile with misaligned pad (delta > 0 path), exact f32.
    out_n = conv1d_block(x, params, kernel_size=K, dilation=2, causal=False,
                         block_t=64, use_bf16_matmul=False)
    out_n = jax.block_until_ready(out_n)
    ref_n = conv1d_block_ref(x, params, kernel_size=K, dilation=2, causal=False)
    err_n = float(jnp.max(jnp.abs(out_n - ref_n)))
    assert jnp.allclose(out_n, ref_n, atol=2e-3, rtol=2e-3), err_n

    print("KERNEL_OK")
</pallas_src>

<mosaic_0001>
module attributes {stable_mosaic.version = 11 : i64} {
  func.func @_conv1d_block_kernel(%arg0: i32, %arg1: i32, %arg2: memref<2x216x128xf32, #tpu.memory_space<any>>, %arg3: memref<128x256xbf16, #tpu.memory_space<vmem>>, %arg4: memref<1x256xf32, #tpu.memory_space<vmem>>, %arg5: memref<1x256xf32, #tpu.memory_space<vmem>>, %arg6: memref<3x256xf32, #tpu.memory_space<vmem>>, %arg7: memref<1x256xf32, #tpu.memory_space<vmem>>, %arg8: memref<1x256xf32, #tpu.memory_space<vmem>>, %arg9: memref<256x128xbf16, #tpu.memory_space<vmem>>, %arg10: memref<2xf32, #tpu.memory_space<smem>>, %arg11: memref<1x200x128xf32, #tpu.memory_space<vmem>>, %arg12: memref<216x128xf32, #tpu.memory_space<vmem>>, %arg13: memref<216x256xf32, #tpu.memory_space<vmem>>, %arg14: memref<!tpu.dma_semaphore, #tpu.memory_space<semaphore_mem>>) attributes {dimension_semantics = [#tpu.dimension_semantics<parallel>, #tpu.dimension_semantics<parallel>], iteration_bounds = array<i64: 2, 1>, scalar_prefetch = 0 : i64, scratch_operands = 3 : i64, tpu.core_type = #tpu.core_type<tc>, window_params = [{}, {pipeline_mode = #tpu.pipeline_mode<synchronous>, transform_indices = @transform_1, window_bounds = array<i64: 128, 256>}, {pipeline_mode = #tpu.pipeline_mode<synchronous>, transform_indices = @transform_2, window_bounds = array<i64: 1, 256>}, {pipeline_mode = #tpu.pipeline_mode<synchronous>, transform_indices = @transform_3, window_bounds = array<i64: 1, 256>}, {pipeline_mode = #tpu.pipeline_mode<synchronous>, transform_indices = @transform_4, window_bounds = array<i64: 3, 256>}, {pipeline_mode = #tpu.pipeline_mode<synchronous>, transform_indices = @transform_5, window_bounds = array<i64: 1, 256>}, {pipeline_mode = #tpu.pipeline_mode<synchronous>, transform_indices = @transform_6, window_bounds = array<i64: 1, 256>}, {pipeline_mode = #tpu.pipeline_mode<synchronous>, transform_indices = @transform_7, window_bounds = array<i64: 256, 128>}, {transform_indices = @transform_8, window_bounds = array<i64: 2>}, {transform_indices = @transform_9, window_bounds = array<i64: 1, 200, 128>}]} {
    %c200_i32 = arith.constant 200 : i32
    %0 = arith.muli %arg1, %c200_i32 : i32
    %1 = tpu.assume_multiple %0, 8 : i32
    %c0_i32 = arith.constant 0 : i32
    %2 = tpu.memref_slice %arg2[%arg0, %1, %c0_i32] : memref<2x216x128xf32, #tpu.memory_space<any>> -> memref<1x216x128xf32, #tpu.memory_space<any>>
    %3 = tpu.memref_squeeze %2 : memref<1x216x128xf32, #tpu.memory_space<any>> -> memref<216x128xf32, #tpu.memory_space<any>>
    tpu.enqueue_dma source(%3 : memref<216x128xf32, #tpu.memory_space<any>>) target(%arg12 : memref<216x128xf32, #tpu.memory_space<vmem>>) target_semaphore(%arg14 : memref<!tpu.dma_semaphore, #tpu.memory_space<semaphore_mem>>)
    %c0_i32_0 = arith.constant 0 : i32
    %4 = tpu.memref_slice %arg2[%arg0, %1, %c0_i32_0] : memref<2x216x128xf32, #tpu.memory_space<any>> -> memref<1x216x128xf32, #tpu.memory_space<any>>
    %5 = tpu.memref_squeeze %4 : memref<1x216x128xf32, #tpu.memory_space<any>> -> memref<216x128xf32, #tpu.memory_space<any>>
    tpu.wait_dma2 semaphore(%arg14 : memref<!tpu.dma_semaphore, #tpu.memory_space<semaphore_mem>>) src(%5 : memref<216x128xf32, #tpu.memory_space<any>>) dst(%arg12 : memref<216x128xf32, #tpu.memory_space<vmem>>)
    %c0 = arith.constant 0 : index
    %6 = memref.load %arg10[%c0] : memref<2xf32, #tpu.memory_space<smem>>
    %c1 = arith.constant 1 : index
    %7 = memref.load %arg10[%c1] : memref<2xf32, #tpu.memory_space<smem>>
    %c0_1 = arith.constant 0 : index
    %c0_2 = arith.constant 0 : index
    %8 = vector.load %arg12[%c0_1, %c0_2] : memref<216x128xf32, #tpu.memory_space<vmem>>, vector<216x128xf32>
    %9 = arith.truncf %8 : vector<216x128xf32> to vector<216x128xbf16>
    %c0_3 = arith.constant 0 : index
    %c0_4 = arith.constant 0 : index
    %10 = vector.load %arg3[%c0_3, %c0_4] : memref<128x256xbf16, #tpu.memory_space<vmem>>, vector<128x256xbf16>
    %cst = arith.constant dense<0.000000e+00> : vector<216x256xf32>
    %11 = tpu.matmul %9, %10, %cst {dimension_numbers = #tpu.dot_dimension_numbers<[1], [0], [0], [1], [0, 0, 1, 1], [], []>} : vector<216x128xbf16>, vector<128x256xbf16>, vector<216x256xf32> -> vector<216x256xf32>
    %cst_5 = arith.constant 0.000000e+00 : f32
    %12 = vector.broadcast %cst_5 : f32 to vector<216x256xf32>
    %13 = arith.cmpf oge, %11, %12 : vector<216x256xf32>
    %14 = vector.broadcast %6 : f32 to vector<216x256xf32>
    %15 = arith.mulf %14, %11 : vector<216x256xf32>
    %16 = arith.select %13, %11, %15 : vector<216x256xi1>, vector<216x256xf32>
    %c0_6 = arith.constant 0 : index
    %c0_7 = arith.constant 0 : index
    %17 = vector.load %arg4[%c0_6, %c0_7] : memref<1x256xf32, #tpu.memory_space<vmem>>, vector<1x256xf32>
    %c0_8 = arith.constant 0 : index
    %c0_9 = arith.constant 0 : index
    %18 = vector.load %arg5[%c0_8, %c0_9] : memref<1x256xf32, #tpu.memory_space<vmem>>, vector<1x256xf32>
    %cst_10 = arith.constant 1.000000e+00 : f32
    %19 = vector.broadcast %cst_10 : f32 to vector<256x1xf32>
    %cst_11 = arith.constant dense<0.000000e+00> : vector<216x1xf32>
    %20 = tpu.matmul %16, %19, %cst_11 {dimension_numbers = #tpu.dot_dimension_numbers<[1], [0], [0], [1], [0, 0, 1, 1], [], []>} : vector<216x256xf32>, vector<256x1xf32>, vector<216x1xf32> -> vector<216x1xf32>
    %21 = arith.mulf %16, %16 : vector<216x256xf32>
    %cst_12 = arith.constant dense<0.000000e+00> : vector<216x1xf32>
    %22 = tpu.matmul %21, %19, %cst_12 {dimension_numbers = #tpu.dot_dimension_numbers<[1], [0], [0], [1], [0, 0, 1, 1], [], []>} : vector<216x256xf32>, vector<256x1xf32>, vector<216x1xf32> -> vector<216x1xf32>
    %cst_13 = arith.constant 6.250000e-03 : f32
    %23 = vector.broadcast %cst_13 : f32 to vector<216x1xf32>
    %24 = arith.mulf %20, %23 : vector<216x1xf32>
    %cst_14 = arith.constant 6.250000e-03 : f32
    %25 = vector.broadcast %cst_14 : f32 to vector<216x1xf32>
    %26 = arith.mulf %22, %25 : vector<216x1xf32>
    %27 = arith.mulf %24, %24 : vector<216x1xf32>
    %28 = arith.subf %26, %27 : vector<216x1xf32>
    %cst_15 = arith.constant 0.000000e+00 : f32
    %29 = vector.broadcast %cst_15 : f32 to vector<216x1xf32>
    %30 = arith.maximumf %28, %29 : vector<216x1xf32>
    %31 = vector.broadcast %24 : vector<216x1xf32> to vector<216x256xf32>
    %32 = arith.subf %16, %31 : vector<216x256xf32>
    %cst_16 = arith.constant 9.99999974E-6 : f32
    %33 = vector.broadcast %cst_16 : f32 to vector<216x1xf32>
    %34 = arith.addf %30, %33 : vector<216x1xf32>
    %35 = math.rsqrt %34 : vector<216x1xf32>
    %36 = vector.broadcast %35 : vector<216x1xf32> to vector<216x256xf32>
    %37 = arith.mulf %32, %36 : vector<216x256xf32>
    %38 = vector.broadcast %17 : vector<1x256xf32> to vector<216x256xf32>
    %39 = arith.mulf %37, %38 : vector<216x256xf32>
    %40 = vector.broadcast %18 : vector<1x256xf32> to vector<216x256xf32>
    %41 = arith.addf %39, %40 : vector<216x256xf32>
    %c0_17 = arith.constant 0 : index
    %c0_18 = arith.constant 0 : index
    %42 = vector.load %arg13[%c0_17, %c0_18] : memref<216x256xf32, #tpu.memory_space<vmem>>, vector<216x256xf32>
    tpu.vector_store %arg13[%c0_17, %c0_18], %41 {strides = array<i32>} : memref<216x256xf32, #tpu.memory_space<vmem>>, vector<216x256xf32>,
    %43 = tpu.iota {dimensions = array<i32: 0>} : vector<8x1xi32>
    %c200_i32_19 = arith.constant 200 : i32
    %44 = arith.muli %arg1, %c200_i32_19 : i32
    %45 = vector.broadcast %44 : i32 to vector<8x1xi32>
    %46 = arith.addi %45, %43 : vector<8x1xi32>
    %c8_i32 = arith.constant 8 : i32
    %47 = vector.broadcast %c8_i32 : i32 to vector<8x1xi32>
    %48 = arith.subi %46, %47 : vector<8x1xi32>
    %c0_i32_20 = arith.constant 0 : i32
    %49 = vector.broadcast %c0_i32_20 : i32 to vector<8x1xi32>
    %50 = arith.cmpi sge, %48, %49 : vector<8x1xi32>
    %c0_21 = arith.constant 0 : index
    %c0_22 = arith.constant 0 : index
    %51 = vector.load %arg13[%c0_21, %c0_22] : memref<216x256xf32, #tpu.memory_space<vmem>>, vector<8x256xf32>
    %cst_23 = arith.constant 0.000000e+00 : f32
    %52 = vector.shape_cast %50 : vector<8x1xi1> to vector<8x1xi1>
    %53 = vector.broadcast %52 : vector<8x1xi1> to vector<8x256xi1>
    %54 = vector.broadcast %cst_23 : f32 to vector<8x256xf32>
    %55 = arith.select %53, %51, %54 : vector<8x256xi1>, vector<8x256xf32>
    %c0_24 = arith.constant 0 : index
    %c0_25 = arith.constant 0 : index
    %56 = vector.load %arg13[%c0_24, %c0_25] : memref<216x256xf32, #tpu.memory_space<vmem>>, vector<8x256xf32>
    tpu.vector_store %arg13[%c0_24, %c0_25], %55 {strides = array<i32>} : memref<216x256xf32, #tpu.memory_space<vmem>>, vector<8x256xf32>,
    %57 = tpu.iota {dimensions = array<i32: 0>} : vector<8x1xi32>
    %c208_i32 = arith.constant 208 : i32
    %58 = vector.broadcast %c208_i32 : i32 to vector<8x1xi32>
    %59 = arith.addi %58, %57 : vector<8x1xi32>
    %c200_i32_26 = arith.constant 200 : i32
    %60 = arith.muli %arg1, %c200_i32_26 : i32
    %61 = vector.broadcast %60 : i32 to vector<8x1xi32>
    %62 = arith.addi %61, %59 : vector<8x1xi32>
    %c8_i32_27 = arith.constant 8 : i32
    %63 = vector.broadcast %c8_i32_27 : i32 to vector<8x1xi32>
    %64 = arith.subi %62, %63 : vector<8x1xi32>
    %c200_i32_28 = arith.constant 200 : i32
    %65 = vector.broadcast %c200_i32_28 : i32 to vector<8x1xi32>
    %66 = arith.cmpi slt, %64, %65 : vector<8x1xi32>
    %c208 = arith.constant 208 : index
    %c0_29 = arith.constant 0 : index
    %67 = vector.load %arg13[%c208, %c0_29] : memref<216x256xf32, #tpu.memory_space<vmem>>, vector<8x256xf32>
    %cst_30 = arith.constant 0.000000e+00 : f32
    %68 = vector.shape_cast %66 : vector<8x1xi1> to vector<8x1xi1>
    %69 = vector.broadcast %68 : vector<8x1xi1> to vector<8x256xi1>
    %70 = vector.broadcast %cst_30 : f32 to vector<8x256xf32>
    %71 = arith.select %69, %67, %70 : vector<8x256xi1>, vector<8x256xf32>
    %c208_31 = arith.constant 208 : index
    %c0_32 = arith.constant 0 : index
    %72 = vector.load %arg13[%c208_31, %c0_32] : memref<216x256xf32, #tpu.memory_space<vmem>>, vector<8x256xf32>
    tpu.vector_store %arg13[%c208_31, %c0_32], %71 {strides = array<i32>} : memref<216x256xf32, #tpu.memory_space<vmem>>, vector<8x256xf32>,
    %c0_33 = arith.constant 0 : index
    %c0_34 = arith.constant 0 : index
    %73 = vector.load %arg6[%c0_33, %c0_34] : memref<3x256xf32, #tpu.memory_space<vmem>>, vector<3x256xf32>
    %c6 = arith.constant 6 : index
    %c0_35 = arith.constant 0 : index
    %74 = vector.load %arg13[%c6, %c0_35] : memref<216x256xf32, #tpu.memory_space<vmem>>, vector<200x256xf32>
    %75 = vector.extract_strided_slice %73 {offsets = [0, 0], sizes = [1, 256], strides = [1, 1]} : vector<3x256xf32> to vector<1x256xf32>
    %76 = vector.broadcast %75 : vector<1x256xf32> to vector<200x256xf32>
    %77 = arith.mulf %74, %76 : vector<200x256xf32>
    %c8 = arith.constant 8 : index
    %c0_36 = arith.constant 0 : index
    %78 = vector.load %arg13[%c8, %c0_36] : memref<216x256xf32, #tpu.memory_space<vmem>>, vector<200x256xf32>
    %79 = vector.extract_strided_slice %73 {offsets = [1, 0], sizes = [1, 256], strides = [1, 1]} : vector<3x256xf32> to vector<1x256xf32>
    %80 = vector.broadcast %79 : vector<1x256xf32> to vector<200x256xf32>
    %81 = arith.mulf %78, %80 : vector<200x256xf32>
    %82 = arith.addf %77, %81 : vector<200x256xf32>
    %c10 = arith.constant 10 : index
    %c0_37 = arith.constant 0 : index
    %83 = vector.load %arg13[%c10, %c0_37] : memref<216x256xf32, #tpu.memory_space<vmem>>, vector<200x256xf32>
    %84 = vector.extract_strided_slice %73 {offsets = [2, 0], sizes = [1, 256], strides = [1, 1]} : vector<3x256xf32> to vector<1x256xf32>
    %85 = vector.broadcast %84 : vector<1x256xf32> to vector<200x256xf32>
    %86 = arith.mulf %83, %85 : vector<200x256xf32>
    %87 = arith.addf %82, %86 : vector<200x256xf32>
    %cst_38 = arith.constant 0.000000e+00 : f32
    %88 = vector.broadcast %cst_38 : f32 to vector<200x256xf32>
    %89 = arith.cmpf oge, %87, %88 : vector<200x256xf32>
    %90 = vector.broadcast %7 : f32 to vector<200x256xf32>
    %91 = arith.mulf %90, %87 : vector<200x256xf32>
    %92 = arith.select %89, %87, %91 : vector<200x256xi1>, vector<200x256xf32>
    %c0_39 = arith.constant 0 : index
    %c0_40 = arith.constant 0 : index
    %93 = vector.load %arg7[%c0_39, %c0_40] : memref<1x256xf32, #tpu.memory_space<vmem>>, vector<1x256xf32>
    %c0_41 = arith.constant 0 : index
    %c0_42 = arith.constant 0 : index
    %94 = vector.load %arg8[%c0_41, %c0_42] : memref<1x256xf32, #tpu.memory_space<vmem>>, vector<1x256xf32>
    %cst_43 = arith.constant 1.000000e+00 : f32
    %95 = vector.broadcast %cst_43 : f32 to vector<256x1xf32>
    %cst_44 = arith.constant dense<0.000000e+00> : vector<200x1xf32>
    %96 = tpu.matmul %92, %95, %cst_44 {dimension_numbers = #tpu.dot_dimension_numbers<[1], [0], [0], [1], [0, 0, 1, 1], [], []>} : vector<200x256xf32>, vector<256x1xf32>, vector<200x1xf32> -> vector<200x1xf32>
    %97 = arith.mulf %92, %92 : vector<200x256xf32>
    %cst_45 = arith.constant dense<0.000000e+00> : vector<200x1xf32>
    %98 = tpu.matmul %97, %95, %cst_45 {dimension_numbers = #tpu.dot_dimension_numbers<[1], [0], [0], [1], [0, 0, 1, 1], [], []>} : vector<200x256xf32>, vector<256x1xf32>, vector<200x1xf32> -> vector<200x1xf32>
    %cst_46 = arith.constant 6.250000e-03 : f32
    %99 = vector.broadcast %cst_46 : f32 to vector<200x1xf32>
    %100 = arith.mulf %96, %99 : vector<200x1xf32>
    %cst_47 = arith.constant 6.250000e-03 : f32
    %101 = vector.broadcast %cst_47 : f32 to vector<200x1xf32>
    %102 = arith.mulf %98, %101 : vector<200x1xf32>
    %103 = arith.mulf %100, %100 : vector<200x1xf32>
    %104 = arith.subf %102, %103 : vector<200x1xf32>
    %cst_48 = arith.constant 0.000000e+00 : f32
    %105 = vector.broadcast %cst_48 : f32 to vector<200x1xf32>
    %106 = arith.maximumf %104, %105 : vector<200x1xf32>
    %107 = vector.broadcast %100 : vector<200x1xf32> to vector<200x256xf32>
    %108 = arith.subf %92, %107 : vector<200x256xf32>
    %cst_49 = arith.constant 9.99999974E-6 : f32
    %109 = vector.broadcast %cst_49 : f32 to vector<200x1xf32>
    %110 = arith.addf %106, %109 : vector<200x1xf32>
    %111 = math.rsqrt %110 : vector<200x1xf32>
    %112 = vector.broadcast %111 : vector<200x1xf32> to vector<200x256xf32>
    %113 = arith.mulf %108, %112 : vector<200x256xf32>
    %114 = vector.broadcast %93 : vector<1x256xf32> to vector<200x256xf32>
    %115 = arith.mulf %113, %114 : vector<200x256xf32>
    %116 = vector.broadcast %94 : vector<1x256xf32> to vector<200x256xf32>
    %117 = arith.addf %115, %116 : vector<200x256xf32>
    %118 = vector.extract_strided_slice %8 {offsets = [8, 0], sizes = [200, 128], strides = [1, 1]} : vector<216x128xf32> to vector<200x128xf32>
    %119 = arith.truncf %117 : vector<200x256xf32> to vector<200x256xbf16>
    %c0_50 = arith.constant 0 : index
    %c0_51 = arith.constant 0 : index
    %120 = vector.load %arg9[%c0_50, %c0_51] : memref<256x128xbf16, #tpu.memory_space<vmem>>, vector<256x128xbf16>
    %cst_52 = arith.constant dense<0.000000e+00> : vector<200x128xf32>
    %121 = tpu.matmul %119, %120, %cst_52 {dimension_numbers = #tpu.dot_dimension_numbers<[1], [0], [0], [1], [0, 0, 1, 1], [], []>} : vector<200x256xbf16>, vector<256x128xbf16>, vector<200x128xf32> -> vector<200x128xf32>
    %122 = arith.addf %118, %121 : vector<200x128xf32>
    %c0_53 = arith.constant 0 : index
    %c0_54 = arith.constant 0 : index
    %c0_55 = arith.constant 0 : index
    %123 = vector.load %arg11[%c0_53, %c0_54, %c0_55] : memref<1x200x128xf32, #tpu.memory_space<vmem>>, vector<1x200x128xf32>
    %124 = vector.shape_cast %123 : vector<1x200x128xf32> to vector<200x128xf32>
    %125 = vector.shape_cast %122 : vector<200x128xf32> to vector<1x200x128xf32>
    tpu.vector_store %arg11[%c0_53, %c0_54, %c0_55], %125 {strides = array<i32>} : memref<1x200x128xf32, #tpu.memory_space<vmem>>, vector<1x200x128xf32>,
    return
  }
  func.func @transform_1(%arg0: i32, %arg1: i32) -> (i32, i32) {
    %c0_i32 = arith.constant 0 : i32
    %c0_i32_0 = arith.constant 0 : i32
    %c0_i32_1 = arith.constant 0 : i32
    return %c0_i32, %c0_i32_0 : i32, i32
  }
  func.func @transform_2(%arg0: i32, %arg1: i32) -> (i32, i32) {
    %c0_i32 = arith.constant 0 : i32
    %c0_i32_0 = arith.constant 0 : i32
    %c0_i32_1 = arith.constant 0 : i32
    return %c0_i32, %c0_i32_0 : i32, i32
  }
  func.func @transform_3(%arg0: i32, %arg1: i32) -> (i32, i32) {
    %c0_i32 = arith.constant 0 : i32
    %c0_i32_0 = arith.constant 0 : i32
    %c0_i32_1 = arith.constant 0 : i32
    return %c0_i32, %c0_i32_0 : i32, i32
  }
  func.func @transform_4(%arg0: i32, %arg1: i32) -> (i32, i32) {
    %c0_i32 = arith.constant 0 : i32
    %c0_i32_0 = arith.constant 0 : i32
    %c0_i32_1 = arith.constant 0 : i32
    return %c0_i32, %c0_i32_0 : i32, i32
  }
  func.func @transform_5(%arg0: i32, %arg1: i32) -> (i32, i32) {
    %c0_i32 = arith.constant 0 : i32
    %c0_i32_0 = arith.constant 0 : i32
    %c0_i32_1 = arith.constant 0 : i32
    return %c0_i32, %c0_i32_0 : i32, i32
  }
  func.func @transform_6(%arg0: i32, %arg1: i32) -> (i32, i32) {
    %c0_i32 = arith.constant 0 : i32
    %c0_i32_0 = arith.constant 0 : i32
    %c0_i32_1 = arith.constant 0 : i32
    return %c0_i32, %c0_i32_0 : i32, i32
  }
  func.func @transform_7(%arg0: i32, %arg1: i32) -> (i32, i32) {
    %c0_i32 = arith.constant 0 : i32
    %c0_i32_0 = arith.constant 0 : i32
    %c0_i32_1 = arith.constant 0 : i32
    return %c0_i32, %c0_i32_0 : i32, i32
  }
  func.func @transform_8(%arg0: i32, %arg1: i32) -> i32 {
    %c0_i32 = arith.constant 0 : i32
    %c0_i32_0 = arith.constant 0 : i32
    return %c0_i32 : i32
  }
  func.func @transform_9(%arg0: i32, %arg1: i32) -> (i32, i32, i32) {
    %c0_i32 = arith.constant 0 : i32
    %c0_i32_0 = arith.constant 0 : i32
    return %arg0, %arg1, %c0_i32 : i32, i32, i32
  }
}

</mosaic_0001>

<llo_original>
// kernel: tpu_custom_call.1
$region0: #{tpu_custom_call.1}
  #allocation0 [shape = 'u32[]', space=smem, size = 0x4, offset = 0x4, fixed_abs, tag = 'smem constant byte address 0x4 - core index']
  #allocation1 [shape = 'u32[144,128]{1,0:T(1,128)}', space=vmem, size = 0x12000, scoped, tag = 'internal scratch']
  #allocation2 [shape = 'f32[216,128]{1,0:T(8,128)}', space=vmem, size = 0x1b000, scoped, tag = 'scratch operand']
  #allocation3 [shape = 'f32[216,256]{1,0:T(8,128)}', space=vmem, size = 0x36000, scoped, tag = 'scratch operand']
  #allocation4 [shape = 's32[1]{0}', space=sflag, size = 0x4, scoped, tag = 'scratch operand']
  #allocation13 [shape = 's32[]', space=sflag, size = 0x4, offset = 0, fixed_abs, tag = 'sflag constant byte address 0x0 - dummy sync flag']
  #allocation14 [shape = 's32[]', space=sflag, size = 0x4, offset = 0, fixed_abs, tag = 'sflag constant byte address 0x0 - dummy sync flag']
  #allocation15 [shape = 'u32[]', space=smem, size = 0x4, offset = 0x44, fixed_abs, tag = 'smem constant byte address 0x44 - assertion arg 0']
  #allocation16 [shape = 'u32[]', space=smem, size = 0x4, offset = 0x48, fixed_abs, tag = 'smem constant byte address 0x48 - assertion arg 1']
  %s0 = inlined_call_operand.hbm [shape: f32[2,216,128], index: 0, kind: input, shape index: {}]
  %s1 = inlined_call_operand.hbm [shape: bf16[128,256], index: 1, kind: input, shape index: {}]
  %s2 = inlined_call_operand.vmem [shape: f32[1,256], index: 2, kind: input, shape index: {}]
  %s3 = inlined_call_operand.vmem [shape: f32[1,256], index: 3, kind: input, shape index: {}]
  %s4 = inlined_call_operand.vmem [shape: f32[3,256], index: 4, kind: input, shape index: {}]
  %s5 = inlined_call_operand.vmem [shape: f32[1,256], index: 5, kind: input, shape index: {}]
  %s6 = inlined_call_operand.vmem [shape: f32[1,256], index: 6, kind: input, shape index: {}]
  %s7 = inlined_call_operand.hbm [shape: bf16[256,128], index: 7, kind: input, shape index: {}]
  %s8 = inlined_call_operand.vmem [shape: f32[2], index: 8, kind: input, shape index: {}]
  %s9 = inlined_call_operand.hbm [shape: f32[2,200,128], index: 9, kind: output, shape index: {}]
  %s10 = sld [smem:[#allocation0]]
  $region81: #{tpu_custom_call.1} parent=0
    _
  %s12 = ssub.s32 1, %s10
  %s13 = scalar_select 0, %s12, %s10
  $region1: #{tpu_custom_call.1} parent=0
    #allocation5 [shape = 'u8[65536]{0}', space=vmem, size = 0x10000, scoped, tag = 'input window, operand 1, single buffered']
    #allocation6 [shape = 's32[2]{0}', space=sflag, size = 0x8, scoped, tag = 'scoped memory for tpu_custom_call.1']
    #allocation7 [shape = 's32[2]{0}', space=sflag, size = 0x8, scoped, tag = 'scoped memory for tpu_custom_call.1']
    #allocation8 [shape = 's32[2]{0}', space=sflag, size = 0x8, scoped, tag = 'scoped memory for tpu_custom_call.1']
    #allocation9 [shape = 'u8[65536]{0}', space=vmem, size = 0x10000, scoped, tag = 'input window, operand 7, single buffered']
    #allocation10 [shape = 's32[1]{0}', space=sflag, size = 0x4, scoped, tag = 'scoped memory for tpu_custom_call.1']
    #allocation11 [shape = 'u8[512]{0}', space=smem, size = 0x200, scoped, tag = 'input window, operand 8, single buffered']
    #allocation12 [shape = 'u8[204800]{0}', space=vmem, size = 0x32000, scoped, tag = 'output window, operand 0']
    %14 = vsyncpa [#allocation6], 0
    %15 = vsyncpa [#allocation10], 0
    %16 = vsyncpa [#allocation8], 0
    %17 = vsyncpa [#allocation7], 0
    %s18 = scalar_lea.sflag [#allocation7], 1
    %19 = vsyncpa %s18, 0
    loop: start=0, step=1, limit=4
    $region2: #{tpu_custom_call.1} parent=1 // loop_pre_header
      _
    $region3: #{tpu_custom_call.1} parent=1 // loop_header
      %s21 = sphi 0, %s25
      %p22 = scmp.ge.s32.totalorder %s21, 4
      %s28 = sphi 0, %s40
      %s29 = sphi 0, %s36
      %s30 = sphi 0, %s28
      %s31 = sphi 0, %s29
      %s32 = sphi 0, %s30
      %s33 = sphi 0, %s31
      %s41 = sphi 0, %s41
      %s43 = sphi 0, %s41
      %s44 = sphi 0, %s43
      %s58 = sphi 0, %s44
      %s62 = sphi 0, %s62
      %s64 = sphi 0, %s62
      %s65 = sphi 0, %s64
      %s79 = sphi 0, %s65
      %s83 = sphi 0, %s83
      %s85 = sphi 0, %s83
      %s86 = sphi 0, %s85
      %s100 = sphi 0, %s86
      %s104 = sphi 0, %s104
      %s106 = sphi 0, %s104
      %s107 = sphi 0, %s106
      %s121 = sphi 0, %s107
      %s125 = sphi 0, %s125
      %s127 = sphi 0, %s125
      %s128 = sphi 0, %s127
      %s142 = sphi 0, %s128
      %s146 = sphi 0, %s146
      %s148 = sphi 0, %s146
      %s149 = sphi 0, %s148
      %s163 = sphi 0, %s149
      %s167 = sphi 0, %s167
      %s169 = sphi 0, %s167
      %s170 = sphi 0, %s169
      %s184 = sphi 0, %s170
      %s188 = sphi 0, %s188
      %s190 = sphi 0, %s188
      %s191 = sphi 0, %s190
      %s205 = sphi 0, %s191
      %s213 = sphi 0, %s215
      %s216 = sphi 0, %s213
      %s217 = sphi 0, %s216
      %s233 = sphi 0, %s217
    $region4: #{tpu_custom_call.1} parent=1 // loop_header_branch
      %24 = sbr.rel (%p22) target = $region8
    $region5: #{tpu_custom_call.1} parent=1 // loop_body
      %s26 = ssub.s32 %s21, 1
      %s27 = ssub.s32 %s21, 2
      %s34 = sadd.s32 1, %s29
      %p35 = scmp.ge.s32.totalorder %s34, 1
      %s36 = scalar_select %p35, 0, %s34
      %s37 = sadd.s32 1, %s28
      %s38 = scalar_select %p35, %s37, %s28
      %p39 = scmp.ge.s32.totalorder %s38, 2
      %s40 = scalar_select %p39, 0, %s38
      %s42 = sadd.s32 %s41, 1
      %p45 = scmp.eq.s32.totalorder %s21, 1
      %p46 = scmp.ne.s32.totalorder %s41, %s43
      %p47 = scmp.eq.s32.totalorder %s21, 0
      %p48 = por %p46, %p47
      %p49 = scmp.ne.s32.totalorder %s41, %s43
      %p50 = scmp.eq.s32.totalorder %s26, 1
      %p51 = por %p49, %p50
      %p52 = scmp.ne.s32.totalorder %s43, %s44
      %p53 = scmp.eq.s32.totalorder %s26, 0
      %p54 = por %p52, %p53
      %p55 = scmp.ne.s32.totalorder %s43, %s44
      %p56 = scmp.eq.s32.totalorder %s27, 1
      %p57 = por %p55, %p56
      %p59 = scmp.ne.s32.totalorder %s44, %s58
      %p60 = scmp.eq.s32.totalorder %s27, 0
      %p61 = por %p59, %p60
      %s63 = sadd.s32 %s62, 1
      %p66 = scmp.eq.s32.totalorder %s21, 1
      %p67 = scmp.ne.s32.totalorder %s62, %s64
      %p68 = scmp.eq.s32.totalorder %s21, 0
      %p69 = por %p67, %p68
      %p70 = scmp.ne.s32.totalorder %s62, %s64
      %p71 = scmp.eq.s32.totalorder %s26, 1
      %p72 = por %p70, %p71
      %p73 = scmp.ne.s32.totalorder %s64, %s65
      %p74 = scmp.eq.s32.totalorder %s26, 0
      %p75 = por %p73, %p74
      %p76 = scmp.ne.s32.totalorder %s64, %s65
      %p77 = scmp.eq.s32.totalorder %s27, 1
      %p78 = por %p76, %p77
      %p80 = scmp.ne.s32.totalorder %s65, %s79
      %p81 = scmp.eq.s32.totalorder %s27, 0
      %p82 = por %p80, %p81
      %s84 = sadd.s32 %s83, 1
      %p87 = scmp.eq.s32.totalorder %s21, 1
      %p88 = scmp.ne.s32.totalorder %s83, %s85
      %p89 = scmp.eq.s32.totalorder %s21, 0
      %p90 = por %p88, %p89
      %p91 = scmp.ne.s32.totalorder %s83, %s85
      %p92 = scmp.eq.s32.totalorder %s26, 1
      %p93 = por %p91, %p92
      %p94 = scmp.ne.s32.totalorder %s85, %s86
      %p95 = scmp.eq.s32.totalorder %s26, 0
      %p96 = por %p94, %p95
      %p97 = scmp.ne.s32.totalorder %s85, %s86
      %p98 = scmp.eq.s32.totalorder %s27, 1
      %p99 = por %p97, %p98
      %p101 = scmp.ne.s32.totalorder %s86, %s100
      %p102 = scmp.eq.s32.totalorder %s27, 0
      %p103 = por %p101, %p102
      %s105 = sadd.s32 %s104, 1
      %p108 = scmp.eq.s32.totalorder %s21, 1
      %p109 = scmp.ne.s32.totalorder %s104, %s106
      %p110 = scmp.eq.s32.totalorder %s21, 0
      %p111 = por %p109, %p110
      %p112 = scmp.ne.s32.totalorder %s104, %s106
      %p113 = scmp.eq.s32.totalorder %s26, 1
      %p114 = por %p112, %p113
      %p115 = scmp.ne.s32.totalorder %s106, %s107
      %p116 = scmp.eq.s32.totalorder %s26, 0
      %p117 = por %p115, %p116
      %p118 = scmp.ne.s32.totalorder %s106, %s107
      %p119 = scmp.eq.s32.totalorder %s27, 1
      %p120 = por %p118, %p119
      %p122 = scmp.ne.s32.totalorder %s107, %s121
      %p123 = scmp.eq.s32.totalorder %s27, 0
      %p124 = por %p122, %p123
      %s126 = sadd.s32 %s125, 1
      %p129 = scmp.eq.s32.totalorder %s21, 1
      %p130 = scmp.ne.s32.totalorder %s125, %s127
      %p131 = scmp.eq.s32.totalorder %s21, 0
      %p132 = por %p130, %p131
      %p133 = scmp.ne.s32.totalorder %s125, %s127
      %p134 = scmp.eq.s32.totalorder %s26, 1
      %p135 = por %p133, %p134
      %p136 = scmp.ne.s32.totalorder %s127, %s128
      %p137 = scmp.eq.s32.totalorder %s26, 0
      %p138 = por %p136, %p137
      %p139 = scmp.ne.s32.totalorder %s127, %s128
      %p140 = scmp.eq.s32.totalorder %s27, 1
      %p141 = por %p139, %p140
      %p143 = scmp.ne.s32.totalorder %s128, %s142
      %p144 = scmp.eq.s32.totalorder %s27, 0
      %p145 = por %p143, %p144
      %s147 = sadd.s32 %s146, 1
      %p150 = scmp.eq.s32.totalorder %s21, 1
      %p151 = scmp.ne.s32.totalorder %s146, %s148
      %p152 = scmp.eq.s32.totalorder %s21, 0
      %p153 = por %p151, %p152
      %p154 = scmp.ne.s32.totalorder %s146, %s148
      %p155 = scmp.eq.s32.totalorder %s26, 1
      %p156 = por %p154, %p155
      %p157 = scmp.ne.s32.totalorder %s148, %s149
      %p158 = scmp.eq.s32.totalorder %s26, 0
      %p159 = por %p157, %p158
      %p160 = scmp.ne.s32.totalorder %s148, %s149
      %p161 = scmp.eq.s32.totalorder %s27, 1
      %p162 = por %p160, %p161
      %p164 = scmp.ne.s32.totalorder %s149, %s163
      %p165 = scmp.eq.s32.totalorder %s27, 0
      %p166 = por %p164, %p165
      %s168 = sadd.s32 %s167, 1
      %p171 = scmp.eq.s32.totalorder %s21, 1
      %p172 = scmp.ne.s32.totalorder %s167, %s169
      %p173 = scmp.eq.s32.totalorder %s21, 0
      %p174 = por %p172, %p173
      %p175 = scmp.ne.s32.totalorder %s167, %s169
      %p176 = scmp.eq.s32.totalorder %s26, 1
      %p177 = por %p175, %p176
      %p178 = scmp.ne.s32.totalorder %s169, %s170
      %p179 = scmp.eq.s32.totalorder %s26, 0
      %p180 = por %p178, %p179
      %p181 = scmp.ne.s32.totalorder %s169, %s170
      %p182 = scmp.eq.s32.totalorder %s27, 1
      %p183 = por %p181, %p182
      %p185 = scmp.ne.s32.totalorder %s170, %s184
      %p186 = scmp.eq.s32.totalorder %s27, 0
      %p187 = por %p185, %p186
      %s189 = sadd.s32 %s188, 1
      %p192 = scmp.eq.s32.totalorder %s21, 1
      %p193 = scmp.ne.s32.totalorder %s188, %s190
      %p194 = scmp.eq.s32.totalorder %s21, 0
      %p195 = por %p193, %p194
      %p196 = scmp.ne.s32.totalorder %s188, %s190
      %p197 = scmp.eq.s32.totalorder %s26, 1
      %p198 = por %p196, %p197
      %p199 = scmp.ne.s32.totalorder %s190, %s191
      %p200 = scmp.eq.s32.totalorder %s26, 0
      %p201 = por %p199, %p200
      %p202 = scmp.ne.s32.totalorder %s190, %s191
      %p203 = scmp.eq.s32.totalorder %s27, 1
      %p204 = por %p202, %p203
      %p206 = scmp.ne.s32.totalorder %s191, %s205
      %p207 = scmp.eq.s32.totalorder %s27, 0
      %p208 = por %p206, %p207
      %s209 = ssub.s32 %s28, %s40
      %s210 = ssub.s32 %s29, %s36
      %s211 = sor.u32 %s209, %s210
      %p212 = scmp.eq.s32.totalorder %s211, 0
      %s214 = sadd.s32 %s213, 1
      %s215 = scalar_select %p212, %s213, %s214
      %p218 = pneg %p212
      %p219 = scmp.eq.s32.totalorder %s21, 1
      %p220 = por %p218, %p219
      %p221 = scmp.ne.s32.totalorder %s213, %s216
      %p222 = scmp.eq.s32.totalorder %s21, 0
      %p223 = por %p221, %p222
      %p224 = scmp.ne.s32.totalorder %s213, %s216
      %p225 = scmp.eq.s32.totalorder %s26, 1
      %p226 = por %p224, %p225
      %p227 = scmp.ne.s32.totalorder %s216, %s217
      %p228 = scmp.eq.s32.totalorder %s26, 0
      %p229 = por %p227, %p228
      %p230 = scmp.ne.s32.totalorder %s216, %s217
      %p231 = scmp.eq.s32.totalorder %s27, 1
      %p232 = por %p230, %p231
      %p234 = scmp.ne.s32.totalorder %s217, %s233
      %p235 = scmp.eq.s32.totalorder %s27, 0
      %p236 = por %p234, %p235
      %p237 = scmp.le.s32.totalorder 1, %s21
      %p238 = scmp.lt.s32.totalorder %s21, 3
      %p239 = pnand %p237, %p238
      %p240 = pneg %p239
      // Predicated region
      $region9: #{tpu_custom_call.1} parent=5 // pred_check
        _
      $region10: #{tpu_custom_call.1} parent=5 // pred_check_branch
        %242 = sbr.rel (%p239) target = $region12
      $region11: #{tpu_custom_call.1} parent=5 // pred_region
        %s243 = ssub.s32 %s21, 1
        // Predicated region
        $region13: #{tpu_custom_call.1} parent=11 // pred_check
          %p244 = pneg %p54
        $region14: #{tpu_custom_call.1} parent=11 // pred_check_branch
          %246 = sbr.rel (%p244) target = $region16
        $region15: #{tpu_custom_call.1} parent=11 // pred_region
          %s248 = ssub.s32 2048, 2048
          %249 = vsyncadd [#allocation6], %s248
          %s250 = sshll.u32 [#allocation5], 4
          %s251 = int_to_ptr.vmem [resolvable:$true] %s250
          %256 = dma.hbm_to_vmem [thread:$0]  %s1, 2048, %s251, [#allocation6], 128, 128, 8
        $region16: #{tpu_custom_call.1} parent=11 // pred_fallthru
          _
        // Predicated region
        $region17: #{tpu_custom_call.1} parent=11 // pred_check
          %p257 = pneg %p75
        $region18: #{tpu_custom_call.1} parent=11 // pred_check_branch
          %259 = sbr.rel (%p257) target = $region20
        $region19: #{tpu_custom_call.1} parent=11 // pred_region
          _
        $region20: #{tpu_custom_call.1} parent=11 // pred_fallthru
          _
        // Predicated region
        $region21: #{tpu_custom_call.1} parent=11 // pred_check
          %p260 = pneg %p96
        $region22: #{tpu_custom_call.1} parent=11 // pred_check_branch
          %262 = sbr.rel (%p260) target = $region24
        $region23: #{tpu_custom_call.1} parent=11 // pred_region
          _
        $region24: #{tpu_custom_call.1} parent=11 // pred_fallthru
          _
        // Predicated region
        $region25: #{tpu_custom_call.1} parent=11 // pred_check
          %p263 = pneg %p117
        $region26: #{tpu_custom_call.1} parent=11 // pred_check_branch
          %265 = sbr.rel (%p263) target = $region28
        $region27: #{tpu_custom_call.1} parent=11 // pred_region
          _
        $region28: #{tpu_custom_call.1} parent=11 // pred_fallthru
          _
        // Predicated region
        $region29: #{tpu_custom_call.1} parent=11 // pred_check
          %p266 = pneg %p138
        $region30: #{tpu_custom_call.1} parent=11 // pred_check_branch
          %268 = sbr.rel (%p266) target = $region32
        $region31: #{tpu_custom_call.1} parent=11 // pred_region
          _
        $region32: #{tpu_custom_call.1} parent=11 // pred_fallthru
          _
        // Predicated region
        $region33: #{tpu_custom_call.1} parent=11 // pred_check
          %p269 = pneg %p159
        $region34: #{tpu_custom_call.1} parent=11 // pred_check_branch
          %271 = sbr.rel (%p269) target = $region36
        $region35: #{tpu_custom_call.1} parent=11 // pred_region
          _
        $region36: #{tpu_custom_call.1} parent=11 // pred_fallthru
          _
        // Predicated region
        $region37: #{tpu_custom_call.1} parent=11 // pred_check
          %p272 = pneg %p180
        $region38: #{tpu_custom_call.1} parent=11 // pred_check_branch
          %274 = sbr.rel (%p272) target = $region40
        $region39: #{tpu_custom_call.1} parent=11 // pred_region
          %s276 = ssub.s32 2048, 2048
          %277 = vsyncadd [#allocation10], %s276
          %s278 = sshll.u32 [#allocation9], 4
          %s279 = int_to_ptr.vmem [resolvable:$true] %s278
          %284 = dma.hbm_to_vmem [thread:$0]  %s7, 2048, %s279, [#allocation10], 64, 64, 4
        $region40: #{tpu_custom_call.1} parent=11 // pred_fallthru
          _
        // Predicated region
        $region41: #{tpu_custom_call.1} parent=11 // pred_check
          %p285 = pneg %p201
        $region42: #{tpu_custom_call.1} parent=11 // pred_check_branch
          %287 = sbr.rel (%p285) target = $region44
        $region43: #{tpu_custom_call.1} parent=11 // pred_region
          %s289 = ssub.s32 16, 16
          %290 = vsyncadd [#allocation8], %s289
          %s292 = sshll.u32 %s8, 4
          %s293 = int_to_ptr.vmem [resolvable:$true] %s292
          %295 = dma.vmem_to_smem %s293, 16, [#allocation11], [#allocation8]
        $region44: #{tpu_custom_call.1} parent=11 // pred_fallthru
          _
      $region12: #{tpu_custom_call.1} parent=5 // pred_fallthru
        _
      %p296 = scmp.lt.s32.totalorder %s21, 2
      // Predicated region
      $region45: #{tpu_custom_call.1} parent=5 // pred_check
        %p297 = pneg %p296
      $region46: #{tpu_custom_call.1} parent=5 // pred_check_branch
        %299 = sbr.rel (%p297) target = $region48
      $region47: #{tpu_custom_call.1} parent=5 // pred_region
        _
      $region48: #{tpu_custom_call.1} parent=5 // pred_fallthru
        _
      %p300 = scmp.le.s32.totalorder 1, %s21
      %p301 = scmp.lt.s32.totalorder %s21, 3
      %p302 = pnand %p300, %p301
      %p303 = pneg %p302
      // Predicated region
      $region49: #{tpu_custom_call.1} parent=5 // pred_check
        _
      $region50: #{tpu_custom_call.1} parent=5 // pred_check_branch
        %305 = sbr.rel (%p302) target = $region52
      $region51: #{tpu_custom_call.1} parent=5 // pred_region
        %s306 = ssub.s32 %s21, 1
        // Predicated region
        $region53: #{tpu_custom_call.1} parent=51 // pred_check
          %p307 = pneg %p54
        $region54: #{tpu_custom_call.1} parent=51 // pred_check_branch
          %309 = sbr.rel (%p307) target = $region56
        $region55: #{tpu_custom_call.1} parent=51 // pred_region
          %310 = dma.done [#allocation6], 2048
        $region56: #{tpu_custom_call.1} parent=51 // pred_fallthru
          _
        // Predicated region
        $region57: #{tpu_custom_call.1} parent=51 // pred_check
          %p311 = pneg %p180
        $region58: #{tpu_custom_call.1} parent=51 // pred_check_branch
          %313 = sbr.rel (%p311) target = $region60
        $region59: #{tpu_custom_call.1} parent=51 // pred_region
          %314 = dma.done [#allocation10], 2048
        $region60: #{tpu_custom_call.1} parent=51 // pred_fallthru
          _
        // Predicated region
        $region61: #{tpu_custom_call.1} parent=51 // pred_check
          %p315 = pneg %p201
        $region62: #{tpu_custom_call.1} parent=51 // pred_check_branch
          %317 = sbr.rel (%p315) target = $region64
        $region63: #{tpu_custom_call.1} parent=51 // pred_region
          %318 = dma.done [#allocation8], 16
        $region64: #{tpu_custom_call.1} parent=51 // pred_fallthru
          _
        %319 = sfence
        %p320 = pneg %p54
        %p321 = pneg %p51
        %p322 = pneg %p75
        %p323 = pneg %p72
        %p324 = pneg %p96
        %p325 = pneg %p93
        %p326 = pneg %p117
        %p327 = pneg %p114
        %p328 = pneg %p138
        %p329 = pneg %p135
        %p330 = pneg %p159
        %p331 = pneg %p156
        %p332 = pneg %p180
        %p333 = pneg %p177
        %p334 = pneg %p201
        %p335 = pneg %p198
        %p336 = pneg %p229
        %p337 = pneg %p226
        %s338 = sand.u32 %s216, 1
        %s339 = scalar_lea.sflag [#allocation7], %s338
        %s340 = sand.u32 %s216, 1
        %s341 = smul.addr %s340, 200
        %s342 = scalar_lea.vmem [#allocation12], %s341
        %s343 = smul.u32 25, %s31
        %s345 = smul.u32 %s31, 200
        %s346 = smul.u32 %s30, 216
        %s347 = sadd.s32 %s345, %s346
        %s348 = smul.addr %s347, 16
        %s349 = scalar_lea.hbm %s0, %s348
        // Predicated region
        $region65: #{tpu_custom_call.1} parent=51 // pred_check
          _
        $region66: #{tpu_custom_call.1} parent=51 // pred_check_branch
          %351 = sbr.rel target = $region68
        $region67: #{tpu_custom_call.1} parent=51 // pred_region
          %352 = sst [smem:[#allocation15]] [#allocation14]
          %353 = sst [smem:[#allocation16]] [#allocation13]
        $region68: #{tpu_custom_call.1} parent=51 // pred_fallthru
          _
        %355 = shalt.err (0)
        %s357 = sshll.u32 [#allocation2], 4
        %s358 = int_to_ptr.vmem [resolvable:$true] %s357
        %360 = dma.hbm_to_vmem [thread:$0]  %s349, 3456, %s358, [#allocation4]
        %s361 = smul.u32 216, 1
        %s362 = sshll.u32 %s361, 4
        %363 = dma.done [#allocation4], %s362
        %s364 = sld [smem:[#allocation11]]
        %s365 = sld [smem:[#allocation11 + $0x1]]
        %v366 = vld [vmem:[#allocation2] sm:$0xff]
        %v367 = vld [vmem:[#allocation2 + $0x8] sm:$0xff]
        %v368 = vld [vmem:[#allocation2 + $0x10] sm:$0xff]
        %v369 = vld [vmem:[#allocation2 + $0x18] sm:$0xff]
        %v370 = vld [vmem:[#allocation2 + $0x20] sm:$0xff]
        %v371 = vld [vmem:[#allocation2 + $0x28] sm:$0xff]
        %v372 = vld [vmem:[#allocation2 + $0x30] sm:$0xff]
        %v373 = vld [vmem:[#allocation2 + $0x38] sm:$0xff]
        %v374 = vld [vmem:[#allocation2 + $0x40] sm:$0xff]
        %v375 = vld [vmem:[#allocation2 + $0x48] sm:$0xff]
        %v376 = vld [vmem:[#allocation2 + $0x50] sm:$0xff]
        %v377 = vld [vmem:[#allocation2 + $0x58] sm:$0xff]
        %v378 = vld [vmem:[#allocation2 + $0x60] sm:$0xff]
        %v379 = vld [vmem:[#allocation2 + $0x68] sm:$0xff]
        %v380 = vld [vmem:[#allocation2 + $0x70] sm:$0xff]
        %v381 = vld [vmem:[#allocation2 + $0x78] sm:$0xff]
        %v382 = vld [vmem:[#allocation2 + $0x80] sm:$0xff]
        %v383 = vld [vmem:[#allocation2 + $0x88] sm:$0xff]
        %v384 = vld [vmem:[#allocation2 + $0x90] sm:$0xff]
        %v385 = vld [vmem:[#allocation2 + $0x98] sm:$0xff]
        %v386 = vld [vmem:[#allocation2 + $0xa0] sm:$0xff]
        %v387 = vld [vmem:[#allocation2 + $0xa8] sm:$0xff]
        %v388 = vld [vmem:[#allocation2 + $0xb0] sm:$0xff]
        %v389 = vld [vmem:[#allocation2 + $0xb8] sm:$0xff]
        %v390 = vld [vmem:[#allocation2 + $0xc0] sm:$0xff]
        %v391 = vld [vmem:[#allocation2 + $0xc8] sm:$0xff]
        %v392 = vld [vmem:[#allocation2 + $0xd0] sm:$0xff]
        %v393 = vpack.c.bf16 %v367, %v366
        %v394 = vpack.c.bf16 %v369, %v368
        %v395 = vpack.c.bf16 %v371, %v370
        %v396 = vpack.c.bf16 %v373, %v372
        %v397 = vpack.c.bf16 %v375, %v374
        %v398 = vpack.c.bf16 %v377, %v376
        %v399 = vpack.c.bf16 %v379, %v378
        %v400 = vpack.c.bf16 %v381, %v380
        %v401 = vpack.c.bf16 %v383, %v382
        %v402 = vpack.c.bf16 %v385, %v384
        %v403 = vpack.c.bf16 %v387, %v386
        %v404 = vpack.c.bf16 %v389, %v388
        %v405 = vpack.c.bf16 %v391, %v390
        %v406 = vpack.c.bf16 %v392, %v392
        %v407 = vld [vmem:[#allocation5] sm:$0xff]
        %v408 = vld [vmem:[#allocation5 + $0x8] sm:$0xff]
        %v409 = vld [vmem:[#allocation5 + $0x10] sm:$0xff]
        %v410 = vld [vmem:[#allocation5 + $0x18] sm:$0xff]
        %v411 = vld [vmem:[#allocation5 + $0x20] sm:$0xff]
        %v412 = vld [vmem:[#allocation5 + $0x28] sm:$0xff]
        %v413 = vld [vmem:[#allocation5 + $0x30] sm:$0xff]
        %v414 = vld [vmem:[#allocation5 + $0x38] sm:$0xff]
        %v415 = vld [vmem:[#allocation5 + $0x40] sm:$0xff]
        %v416 = vld [vmem:[#allocation5 + $0x48] sm:$0xff]
        %v417 = vld [vmem:[#allocation5 + $0x50] sm:$0xff]
        %v418 = vld [vmem:[#allocation5 + $0x58] sm:$0xff]
        %v419 = vld [vmem:[#allocation5 + $0x60] sm:$0xff]
        %v420 = vld [vmem:[#allocation5 + $0x68] sm:$0xff]
        %v421 = vld [vmem:[#allocation5 + $0x70] sm:$0xff]
        %v422 = vld [vmem:[#allocation5 + $0x78] sm:$0xff]
        %v439 = vunpack.c.l.b16 %v407
        %v440 = vunpack.c.h.b16 %v407
        %v441 = vunpack.c.l.b16 %v408
        %v442 = vunpack.c.h.b16 %v408
        %v443 = vunpack.c.l.b16 %v409
        %v444 = vunpack.c.h.b16 %v409
        %v445 = vunpack.c.l.b16 %v410
        %v446 = vunpack.c.h.b16 %v410
        %v447 = vunpack.c.l.b16 %v411
        %v448 = vunpack.c.h.b16 %v411
        %v449 = vunpack.c.l.b16 %v412
        %v450 = vunpack.c.h.b16 %v412
        %v451 = vunpack.c.l.b16 %v413
        %v452 = vunpack.c.h.b16 %v413
        %v453 = vunpack.c.l.b16 %v414
        %v454 = vunpack.c.h.b16 %v414
        %v455 = vunpack.c.l.b16 %v415
        %v456 = vunpack.c.h.b16 %v415
        %v457 = vunpack.c.l.b16 %v416
        %v458 = vunpack.c.h.b16 %v416
        %v459 = vunpack.c.l.b16 %v417
        %v460 = vunpack.c.h.b16 %v417
        %v461 = vunpack.c.l.b16 %v418
        %v462 = vunpack.c.h.b16 %v418
        %v463 = vunpack.c.l.b16 %v419
        %v464 = vunpack.c.h.b16 %v419
        %v465 = vunpack.c.l.b16 %v420
        %v466 = vunpack.c.h.b16 %v420
        %v467 = vunpack.c.l.b16 %v421
        %v468 = vunpack.c.h.b16 %v421
        %v469 = vunpack.c.l.b16 %v422
        %v470 = vunpack.c.h.b16 %v422
        %v471 = vpack.c.b16 %v441, %v439
        %v472 = vpack.c.b16 %v442, %v440
        %v473 = vpack.c.b16 %v445, %v443
        %v474 = vpack.c.b16 %v446, %v444
        %v475 = vpack.c.b16 %v449, %v447
        %v476 = vpack.c.b16 %v450, %v448
        %v477 = vpack.c.b16 %v453, %v451
        %v478 = vpack.c.b16 %v454, %v452
        %v479 = vpack.c.b16 %v457, %v455
        %v480 = vpack.c.b16 %v458, %v456
        %v481 = vpack.c.b16 %v461, %v459
        %v482 = vpack.c.b16 %v462, %v460
        %v483 = vpack.c.b16 %v465, %v463
        %v484 = vpack.c.b16 %v466, %v464
        %v485 = vpack.c.b16 %v469, %v467
        %v486 = vpack.c.b16 %v470, %v468
        %503 = vmatprep.subr.bf16.mxu0 %v472
        %504 = vmatpush1.bf16.msra.mxu0 %v471
        %505 = vmatprep.subr.bf16.mxu0 %v474
        %506 = vmatpush1.bf16.msra.mxu0 %v473
        %507 = vmatprep.subr.bf16.mxu0 %v476
        %508 = vmatpush1.bf16.msra.mxu0 %v475
        %509 = vmatprep.subr.bf16.mxu0 %v478
        %510 = vmatpush1.bf16.msra.mxu0 %v477
        %511 = vmatprep.subr.bf16.mxu0 %v480
        %512 = vmatpush1.bf16.msra.mxu0 %v479
        %513 = vmatprep.subr.bf16.mxu0 %v482
        %514 = vmatpush1.bf16.msra.mxu0 %v481
        %515 = vmatprep.subr.bf16.mxu0 %v484
        %516 = vmatpush1.bf16.msra.mxu0 %v483
        %517 = vmatprep.subr.bf16.mxu0 %v486
        %518 = vmatpush1.bf16.msra.mxu0 %v485
        %519 = vmatprep.subr.bf16.mxu0 0
        %520 = vmatpush1.bf16.msra.mxu0 0
        %521 = vmatprep.subr.bf16.mxu0 0
        %522 = vmatpush1.bf16.msra.mxu0 0
        %523 = vmatprep.subr.bf16.mxu0 0
        %524 = vmatpush1.bf16.msra.mxu0 0
        %525 = vmatprep.subr.bf16.mxu0 0
        %526 = vmatpush1.bf16.msra.mxu0 0
        %527 = vmatprep.subr.bf16.mxu0 0
        %528 = vmatpush1.bf16.msra.mxu0 0
        %529 = vmatprep.subr.bf16.mxu0 0
        %530 = vmatpush1.bf16.msra.mxu0 0
        %531 = vmatprep.subr.bf16.mxu0 0
        %532 = vmatpush1.bf16.msra.mxu0 0
        %533 = vmatprep.subr.bf16.mxu0 0
        %534 = vmatpush1.bf16.msra.mxu0 0
        %535 = vmatprep.mubr.bf16.mxu0 0
        %536 = vmatmul.mubr.bf16.gmra.mrb[0].mxu0 %v393
        %v537 = vpop.f32.mrb[0].mxu0
        %v538 = vadd.f32 0.0, %v537
        %v539 = vpop.f32.mrb[0].mxu0
        %v540 = vadd.f32 0.0, %v539
        %v541 = vpop.f32.mrb[0].mxu0
        %v542 = vadd.f32 0.0, %v541
        %v543 = vpop.f32.mrb[0].mxu0
        %v544 = vadd.f32 0.0, %v543
        %545 = vmatprep.mubr.bf16.mxu0 0
        %546 = vmatmul.mubr.bf16.gmra.mrb[0].mxu0 %v394
        %v547 = vpop.f32.mrb[0].mxu0
        %v548 = vadd.f32 0.0, %v547
        %v549 = vpop.f32.mrb[0].mxu0
        %v550 = vadd.f32 0.0, %v549
        %v551 = vpop.f32.mrb[0].mxu0
        %v552 = vadd.f32 0.0, %v551
        %v553 = vpop.f32.mrb[0].mxu0
        %v554 = vadd.f32 0.0, %v553
        %555 = vmatprep.mubr.bf16.mxu0 0
        %556 = vmatmul.mubr.bf16.gmra.mrb[0].mxu0 %v395
        %v557 = vpop.f32.mrb[0].mxu0
        %v558 = vadd.f32 0.0, %v557
        %v559 = vpop.f32.mrb[0].mxu0
        %v560 = vadd.f32 0.0, %v559
        %v561 = vpop.f32.mrb[0].mxu0
        %v562 = vadd.f32 0.0, %v561
        %v563 = vpop.f32.mrb[0].mxu0
        %v564 = vadd.f32 0.0, %v563
        %565 = vmatprep.mubr.bf16.mxu0 0
        %566 = vmatmul.mubr.bf16.gmra.mrb[0].mxu0 %v396
        %v567 = vpop.f32.mrb[0].mxu0
        %v568 = vadd.f32 0.0, %v567
        %v569 = vpop.f32.mrb[0].mxu0
        %v570 = vadd.f32 0.0, %v569
        %v571 = vpop.f32.mrb[0].mxu0
        %v572 = vadd.f32 0.0, %v571
        %v573 = vpop.f32.mrb[0].mxu0
        %v574 = vadd.f32 0.0, %v573
        %575 = vmatprep.mubr.bf16.mxu0 0
        %576 = vmatmul.mubr.bf16.gmra.mrb[0].mxu0 %v397
        %v577 = vpop.f32.mrb[0].mxu0
        %v578 = vadd.f32 0.0, %v577
        %v579 = vpop.f32.mrb[0].mxu0
        %v580 = vadd.f32 0.0, %v579
        %v581 = vpop.f32.mrb[0].mxu0
        %v582 = vadd.f32 0.0, %v581
        %v583 = vpop.f32.mrb[0].mxu0
        %v584 = vadd.f32 0.0, %v583
        %585 = vmatprep.mubr.bf16.mxu0 0
        %586 = vmatmul.mubr.bf16.gmra.mrb[0].mxu0 %v398
        %v587 = vpop.f32.mrb[0].mxu0
        %v588 = vadd.f32 0.0, %v587
        %v589 = vpop.f32.mrb[0].mxu0
        %v590 = vadd.f32 0.0, %v589
        %v591 = vpop.f32.mrb[0].mxu0
        %v592 = vadd.f32 0.0, %v591
        %v593 = vpop.f32.mrb[0].mxu0
        %v594 = vadd.f32 0.0, %v593
        %595 = vmatprep.mubr.bf16.mxu0 0
        %596 = vmatmul.mubr.bf16.gmra.mrb[0].mxu0 %v399
        %v597 = vpop.f32.mrb[0].mxu0
        %v598 = vadd.f32 0.0, %v597
        %v599 = vpop.f32.mrb[0].mxu0
        %v600 = vadd.f32 0.0, %v599
        %v601 = vpop.f32.mrb[0].mxu0
        %v602 = vadd.f32 0.0, %v601
        %v603 = vpop.f32.mrb[0].mxu0
        %v604 = vadd.f32 0.0, %v603
        %605 = vmatprep.mubr.bf16.mxu0 0
        %606 = vmatmul.mubr.bf16.gmra.mrb[0].mxu0 %v400
        %v607 = vpop.f32.mrb[0].mxu0
        %v608 = vadd.f32 0.0, %v607
        %v609 = vpop.f32.mrb[0].mxu0
        %v610 = vadd.f32 0.0, %v609
        %v611 = vpop.f32.mrb[0].mxu0
        %v612 = vadd.f32 0.0, %v611
        %v613 = vpop.f32.mrb[0].mxu0
        %v614 = vadd.f32 0.0, %v613
        %615 = vmatprep.mubr.bf16.mxu0 0
        %616 = vmatmul.mubr.bf16.gmra.mrb[0].mxu0 %v401
        %v617 = vpop.f32.mrb[0].mxu0
        %v618 = vadd.f32 0.0, %v617
        %v619 = vpop.f32.mrb[0].mxu0
        %v620 = vadd.f32 0.0, %v619
        %v621 = vpop.f32.mrb[0].mxu0
        %v622 = vadd.f32 0.0, %v621
        %v623 = vpop.f32.mrb[0].mxu0
        %v624 = vadd.f32 0.0, %v623
        %625 = vmatprep.mubr.bf16.mxu0 0
        %626 = vmatmul.mubr.bf16.gmra.mrb[0].mxu0 %v402
        %v627 = vpop.f32.mrb[0].mxu0
        %v628 = vadd.f32 0.0, %v627
        %v629 = vpop.f32.mrb[0].mxu0
        %v630 = vadd.f32 0.0, %v629
        %v631 = vpop.f32.mrb[0].mxu0
        %v632 = vadd.f32 0.0, %v631
        %v633 = vpop.f32.mrb[0].mxu0
        %v634 = vadd.f32 0.0, %v633
        %635 = vmatprep.mubr.bf16.mxu0 0
        %636 = vmatmul.mubr.bf16.gmra.mrb[0].mxu0 %v403
        %v637 = vpop.f32.mrb[0].mxu0
        %v638 = vadd.f32 0.0, %v637
        %v639 = vpop.f32.mrb[0].mxu0
        %v640 = vadd.f32 0.0, %v639
        %v641 = vpop.f32.mrb[0].mxu0
        %v642 = vadd.f32 0.0, %v641
        %v643 = vpop.f32.mrb[0].mxu0
        %v644 = vadd.f32 0.0, %v643
        %645 = vmatprep.mubr.bf16.mxu0 0
        %646 = vmatmul.mubr.bf16.gmra.mrb[0].mxu0 %v404
        %v647 = vpop.f32.mrb[0].mxu0
        %v648 = vadd.f32 0.0, %v647
        %v649 = vpop.f32.mrb[0].mxu0
        %v650 = vadd.f32 0.0, %v649
        %v651 = vpop.f32.mrb[0].mxu0
        %v652 = vadd.f32 0.0, %v651
        %v653 = vpop.f32.mrb[0].mxu0
        %v654 = vadd.f32 0.0, %v653
        %655 = vmatprep.mubr.bf16.mxu0 0
        %656 = vmatmul.mubr.bf16.gmra.mrb[0].mxu0 %v405
        %v657 = vpop.f32.mrb[0].mxu0
        %v658 = vadd.f32 0.0, %v657
        %v659 = vpop.f32.mrb[0].mxu0
        %v660 = vadd.f32 0.0, %v659
        %v661 = vpop.f32.mrb[0].mxu0
        %v662 = vadd.f32 0.0, %v661
        %v663 = vpop.f32.mrb[0].mxu0
        %v664 = vadd.f32 0.0, %v663
        %665 = vmatprep.mubr.bf16.mxu0 0
        %666 = vmatmul.mubr.bf16.gmra.mrb[0].mxu0 %v406
        %v667 = vpop.f32.mrb[0].mxu0
        %v668 = vadd.f32 0.0, %v667
        %v669 = vpop.f32.mrb[0].mxu0
        %v670 = vadd.f32 0.0, %v669
        %v671 = vpop.f32.mrb[0].mxu0
        %v672 = vpop.f32.mrb[0].mxu0
        %673 = vdwg.mxu0
        %vm674 = vcmp.ge.f32.partialorder %v538, 0.0
        %vm675 = vcmp.ge.f32.partialorder %v540, 0.0
        %vm676 = vcmp.ge.f32.partialorder %v542, 0.0
        %vm677 = vcmp.ge.f32.partialorder %v544, 0.0
        %vm678 = vcmp.ge.f32.partialorder %v548, 0.0
        %vm679 = vcmp.ge.f32.partialorder %v550, 0.0
        %vm680 = vcmp.ge.f32.partialorder %v552, 0.0
        %vm681 = vcmp.ge.f32.partialorder %v554, 0.0
        %vm682 = vcmp.ge.f32.partialorder %v558, 0.0
        %vm683 = vcmp.ge.f32.partialorder %v560, 0.0
        %vm684 = vcmp.ge.f32.partialorder %v562, 0.0
        %vm685 = vcmp.ge.f32.partialorder %v564, 0.0
        %vm686 = vcmp.ge.f32.partialorder %v568, 0.0
        %vm687 = vcmp.ge.f32.partialorder %v570, 0.0
        %vm688 = vcmp.ge.f32.partialorder %v572, 0.0
        %vm689 = vcmp.ge.f32.partialorder %v574, 0.0
        %vm690 = vcmp.ge.f32.partialorder %v578, 0.0
        %vm691 = vcmp.ge.f32.partialorder %v580, 0.0
        %vm692 = vcmp.ge.f32.partialorder %v582, 0.0
        %vm693 = vcmp.ge.f32.partialorder %v584, 0.0
        %vm694 = vcmp.ge.f32.partialorder %v588, 0.0
        %vm695 = vcmp.ge.f32.partialorder %v590, 0.0
        %vm696 = vcmp.ge.f32.partialorder %v592, 0.0
        %vm697 = vcmp.ge.f32.partialorder %v594, 0.0
        %vm698 = vcmp.ge.f32.partialorder %v598, 0.0
        %vm699 = vcmp.ge.f32.partialorder %v600, 0.0
        %vm700 = vcmp.ge.f32.partialorder %v602, 0.0
        %vm701 = vcmp.ge.f32.partialorder %v604, 0.0
        %vm702 = vcmp.ge.f32.partialorder %v608, 0.0
        %vm703 = vcmp.ge.f32.partialorder %v610, 0.0
        %vm704 = vcmp.ge.f32.partialorder %v612, 0.0
        %vm705 = vcmp.ge.f32.partialorder %v614, 0.0
        %vm706 = vcmp.ge.f32.partialorder %v618, 0.0
        %vm707 = vcmp.ge.f32.partialorder %v620, 0.0
        %vm708 = vcmp.ge.f32.partialorder %v622, 0.0
        %vm709 = vcmp.ge.f32.partialorder %v624, 0.0
        %vm710 = vcmp.ge.f32.partialorder %v628, 0.0
        %vm711 = vcmp.ge.f32.partialorder %v630, 0.0
        %vm712 = vcmp.ge.f32.partialorder %v632, 0.0
        %vm713 = vcmp.ge.f32.partialorder %v634, 0.0
        %vm714 = vcmp.ge.f32.partialorder %v638, 0.0
        %vm715 = vcmp.ge.f32.partialorder %v640, 0.0
        %vm716 = vcmp.ge.f32.partialorder %v642, 0.0
        %vm717 = vcmp.ge.f32.partialorder %v644, 0.0
        %vm718 = vcmp.ge.f32.partialorder %v648, 0.0
        %vm719 = vcmp.ge.f32.partialorder %v650, 0.0
        %vm720 = vcmp.ge.f32.partialorder %v652, 0.0
        %vm721 = vcmp.ge.f32.partialorder %v654, 0.0
        %vm722 = vcmp.ge.f32.partialorder %v658, 0.0
        %vm723 = vcmp.ge.f32.partialorder %v660, 0.0
        %vm724 = vcmp.ge.f32.partialorder %v662, 0.0
        %vm725 = vcmp.ge.f32.partialorder %v664, 0.0
        %vm726 = vcmp.ge.f32.partialorder %v668, 0.0
        %vm727 = vcmp.ge.f32.partialorder %v670, 0.0
        %v728 = vstv %s364
        %v729 = vmul.f32 %v728, %v538
        %v730 = vmul.f32 %v728, %v540
        %v731 = vmul.f32 %v728, %v542
        %v732 = vmul.f32 %v728, %v544
        %v733 = vmul.f32 %v728, %v548
        %v734 = vmul.f32 %v728, %v550
        %v735 = vmul.f32 %v728, %v552
        %v736 = vmul.f32 %v728, %v554
        %v737 = vmul.f32 %v728, %v558
        %v738 = vmul.f32 %v728, %v560
        %v739 = vmul.f32 %v728, %v562
        %v740 = vmul.f32 %v728, %v564
        %v741 = vmul.f32 %v728, %v568
        %v742 = vmul.f32 %v728, %v570
        %v743 = vmul.f32 %v728, %v572
        %v744 = vmul.f32 %v728, %v574
        %v745 = vmul.f32 %v728, %v578
        %v746 = vmul.f32 %v728, %v580
        %v747 = vmul.f32 %v728, %v582
        %v748 = vmul.f32 %v728, %v584
        %v749 = vmul.f32 %v728, %v588
        %v750 = vmul.f32 %v728, %v590
        %v751 = vmul.f32 %v728, %v592
        %v752 = vmul.f32 %v728, %v594
        %v753 = vmul.f32 %v728, %v598
        %v754 = vmul.f32 %v728, %v600
        %v755 = vmul.f32 %v728, %v602
        %v756 = vmul.f32 %v728, %v604
        %v757 = vmul.f32 %v728, %v608
        %v758 = vmul.f32 %v728, %v610
        %v759 = vmul.f32 %v728, %v612
        %v760 = vmul.f32 %v728, %v614
        %v761 = vmul.f32 %v728, %v618
        %v762 = vmul.f32 %v728, %v620
        %v763 = vmul.f32 %v728, %v622
        %v764 = vmul.f32 %v728, %v624
        %v765 = vmul.f32 %v728, %v628
        %v766 = vmul.f32 %v728, %v630
        %v767 = vmul.f32 %v728, %v632
        %v768 = vmul.f32 %v728, %v634
        %v769 = vmul.f32 %v728, %v638
        %v770 = vmul.f32 %v728, %v640
        %v771 = vmul.f32 %v728, %v642
        %v772 = vmul.f32 %v728, %v644
        %v773 = vmul.f32 %v728, %v648
        %v774 = vmul.f32 %v728, %v650
        %v775 = vmul.f32 %v728, %v652
        %v776 = vmul.f32 %v728, %v654
        %v777 = vmul.f32 %v728, %v658
        %v778 = vmul.f32 %v728, %v660
        %v779 = vmul.f32 %v728, %v662
        %v780 = vmul.f32 %v728, %v664
        %v781 = vmul.f32 %v728, %v668
        %v782 = vmul.f32 %v728, %v670
        %v783 = vsel %vm674, %v538, %v729
        %v784 = vsel %vm675, %v540, %v730
        %v785 = vsel %vm676, %v542, %v731
        %v786 = vsel %vm677, %v544, %v732
        %v787 = vsel %vm678, %v548, %v733
        %v788 = vsel %vm679, %v550, %v734
        %v789 = vsel %vm680, %v552, %v735
        %v790 = vsel %vm681, %v554, %v736
        %v791 = vsel %vm682, %v558, %v737
        %v792 = vsel %vm683, %v560, %v738
        %v793 = vsel %vm684, %v562, %v739
        %v794 = vsel %vm685, %v564, %v740
        %v795 = vsel %vm686, %v568, %v741
        %v796 = vsel %vm687, %v570, %v742
        %v797 = vsel %vm688, %v572, %v743
        %v798 = vsel %vm689, %v574, %v744
        %v799 = vsel %vm690, %v578, %v745
        %v800 = vsel %vm691, %v580, %v746
        %v801 = vsel %vm692, %v582, %v747
        %v802 = vsel %vm693, %v584, %v748
        %v803 = vsel %vm694, %v588, %v749
        %v804 = vsel %vm695, %v590, %v750
        %v805 = vsel %vm696, %v592, %v751
        %v806 = vsel %vm697, %v594, %v752
        %v807 = vsel %vm698, %v598, %v753
        %v808 = vsel %vm699, %v600, %v754
        %v809 = vsel %vm700, %v602, %v755
        %v810 = vsel %vm701, %v604, %v756
        %v811 = vsel %vm702, %v608, %v757
        %v812 = vsel %vm703, %v610, %v758
        %v813 = vsel %vm704, %v612, %v759
        %v814 = vsel %vm705, %v614, %v760
        %v815 = vsel %vm706, %v618, %v761
        %v816 = vsel %vm707, %v620, %v762
        %v817 = vsel %vm708, %v622, %v763
        %v818 = vsel %vm709, %v624, %v764
        %v819 = vsel %vm710, %v628, %v765
        %v820 = vsel %vm711, %v630, %v766
        %v821 = vsel %vm712, %v632, %v767
        %v822 = vsel %vm713, %v634, %v768
        %v823 = vsel %vm714, %v638, %v769
        %v824 = vsel %vm715, %v640, %v770
        %v825 = vsel %vm716, %v642, %v771
        %v826 = vsel %vm717, %v644, %v772
        %v827 = vsel %vm718, %v648, %v773
        %v828 = vsel %vm719, %v650, %v774
        %v829 = vsel %vm720, %v652, %v775
        %v830 = vsel %vm721, %v654, %v776
        %v831 = vsel %vm722, %v658, %v777
        %v832 = vsel %vm723, %v660, %v778
        %v833 = vsel %vm724, %v662, %v779
        %v834 = vsel %vm725, %v664, %v780
        %v835 = vsel %vm726, %v668, %v781
        %v836 = vsel %vm727, %v670, %v782
        %v837 = vld [vmem:[%s2] sm:$0x3]
        %v838 = vld [vmem:[%s3] sm:$0x3]
        %839 = vmatprep.subr.mxu0 0.0
        %840 = vmatpush1.msra.mxu0 1.0
        %841 = vmatprep.subr.mxu0 0.0
        %842 = vmatpush1.msra.mxu0 1.0
        %843 = vmatprep.subr.mxu0 0.0
        %844 = vmatpush1.msra.mxu0 1.0
        %845 = vmatprep.subr.mxu0 0.0
        %846 = vmatpush1.msra.mxu0 1.0
        %847 = vmatprep.subr.mxu0 0.0
        %848 = vmatpush1.msra.mxu0 1.0
        %849 = vmatprep.subr.mxu0 0.0
        %850 = vmatpush1.msra.mxu0 1.0
        %851 = vmatprep.subr.mxu0 0.0
        %852 = vmatpush1.msra.mxu0 1.0
        %853 = vmatprep.subr.mxu0 0.0
        %854 = vmatpush1.msra.mxu0 1.0
        %855 = vmatprep.subr.mxu0 0.0
        %856 = vmatpush1.msra.mxu0 1.0
        %857 = vmatprep.subr.mxu0 0.0
        %858 = vmatpush1.msra.mxu0 1.0
        %859 = vmatprep.subr.mxu0 0.0
        %860 = vmatpush1.msra.mxu0 1.0
        %861 = vmatprep.subr.mxu0 0.0
        %862 = vmatpush1.msra.mxu0 1.0
        %863 = vmatprep.subr.mxu0 0.0
        %864 = vmatpush1.msra.mxu0 1.0
        %865 = vmatprep.subr.mxu0 0.0
        %866 = vmatpush1.msra.mxu0 1.0
        %867 = vmatprep.subr.mxu0 0.0
        %868 = vmatpush1.msra.mxu0 1.0
        %869 = vmatprep.subr.mxu0 0.0
        %870 = vmatpush1.msra.mxu0 1.0
        %871 = vmatprep.subr.mxu0 0.0
        %872 = vmatpush1.msra.mxu0 1.0
        %873 = vmatprep.subr.mxu0 0.0
        %874 = vmatpush1.msra.mxu0 1.0
        %875 = vmatprep.subr.mxu0 0.0
        %876 = vmatpush1.msra.mxu0 1.0
        %877 = vmatprep.subr.mxu0 0.0
        %878 = vmatpush1.msra.mxu0 1.0
        %879 = vmatprep.subr.mxu0 0.0
        %880 = vmatpush1.msra.mxu0 1.0
        %881 = vmatprep.subr.mxu0 0.0
        %882 = vmatpush1.msra.mxu0 1.0
        %883 = vmatprep.subr.mxu0 0.0
        %884 = vmatpush1.msra.mxu0 1.0
        %885 = vmatprep.subr.mxu0 0.0
        %886 = vmatpush1.msra.mxu0 1.0
        %887 = vmatprep.subr.mxu0 0.0
        %888 = vmatpush1.msra.mxu0 1.0
        %889 = vmatprep.subr.mxu0 0.0
        %890 = vmatpush1.msra.mxu0 1.0
        %891 = vmatprep.subr.mxu0 0.0
        %892 = vmatpush1.msra.mxu0 1.0
        %893 = vmatprep.subr.mxu0 0.0
        %894 = vmatpush1.msra.mxu0 1.0
        %895 = vmatprep.subr.mxu0 0.0
        %896 = vmatpush1.msra.mxu0 1.0
        %897 = vmatprep.subr.mxu0 0.0
        %898 = vmatpush1.msra.mxu0 1.0
        %899 = vmatprep.subr.mxu0 0.0
        %900 = vmatpush1.msra.mxu0 1.0
        %901 = vmatprep.subr.mxu0 0.0
        %902 = vmatpush1.msra.mxu0 1.0
        %903 = vmatprep.mubr.f32.mxu0 %v784
        %904 = vmatmul.mubr.f32.gmra.mrb[0].mxu0 %v783
        %v905 = vpop.f32.mrb[0].mxu0
        %v906 = vadd.f32 0.0, %v905
        %v907 = vpop.f32.mrb[0].mxu0
        %908 = vmatprep.mubr.f32.mxu0 %v786
        %909 = vmatmul.mubr.f32.gmra.mrb[0].mxu0 %v785
        %v910 = vpop.f32.mrb[0].mxu0
        %v911 = vadd.f32 0.0, %v910
        %v912 = vpop.f32.mrb[0].mxu0
        %913 = vmatprep.mubr.f32.mxu0 %v788
        %914 = vmatmul.mubr.f32.gmra.mrb[0].mxu0 %v787
        %v915 = vpop.f32.mrb[0].mxu0
        %v916 = vadd.f32 0.0, %v915
        %v917 = vpop.f32.mrb[0].mxu0
        %918 = vmatprep.mubr.f32.mxu0 %v790
        %919 = vmatmul.mubr.f32.gmra.mrb[0].mxu0 %v789
        %v920 = vpop.f32.mrb[0].mxu0
        %v921 = vadd.f32 0.0, %v920
        %v922 = vpop.f32.mrb[0].mxu0
        %923 = vmatprep.mubr.f32.mxu0 %v792
        %924 = vmatmul.mubr.f32.gmra.mrb[0].mxu0 %v791
        %v925 = vpop.f32.mrb[0].mxu0
        %v926 = vadd.f32 0.0, %v925
        %v927 = vpop.f32.mrb[0].mxu0
        %928 = vmatprep.mubr.f32.mxu0 %v794
        %929 = vmatmul.mubr.f32.gmra.mrb[0].mxu0 %v793
        %v930 = vpop.f32.mrb[0].mxu0
        %v931 = vadd.f32 0.0, %v930
        %v932 = vpop.f32.mrb[0].mxu0
        %933 = vmatprep.mubr.f32.mxu0 %v796
        %934 = vmatmul.mubr.f32.gmra.mrb[0].mxu0 %v795
        %v935 = vpop.f32.mrb[0].mxu0
        %v936 = vadd.f32 0.0, %v935
        %v937 = vpop.f32.mrb[0].mxu0
        %938 = vmatprep.mubr.f32.mxu0 %v798
        %939 = vmatmul.mubr.f32.gmra.mrb[0].mxu0 %v797
        %v940 = vpop.f32.mrb[0].mxu0
        %v941 = vadd.f32 0.0, %v940
        %v942 = vpop.f32.mrb[0].mxu0
        %943 = vmatprep.mubr.f32.mxu0 %v800
        %944 = vmatmul.mubr.f32.gmra.mrb[0].mxu0 %v799
        %v945 = vpop.f32.mrb[0].mxu0
        %v946 = vadd.f32 0.0, %v945
        %v947 = vpop.f32.mrb[0].mxu0
        %948 = vmatprep.mubr.f32.mxu0 %v802
        %949 = vmatmul.mubr.f32.gmra.mrb[0].mxu0 %v801
        %v950 = vpop.f32.mrb[0].mxu0
        %v951 = vadd.f32 0.0, %v950
        %v952 = vpop.f32.mrb[0].mxu0
        %953 = vmatprep.mubr.f32.mxu0 %v804
        %954 = vmatmul.mubr.f32.gmra.mrb[0].mxu0 %v803
        %v955 = vpop.f32.mrb[0].mxu0
        %v956 = vadd.f32 0.0, %v955
        %v957 = vpop.f32.mrb[0].mxu0
        %958 = vmatprep.mubr.f32.mxu0 %v806
        %959 = vmatmul.mubr.f32.gmra.mrb[0].mxu0 %v805
        %v960 = vpop.f32.mrb[0].mxu0
        %v961 = vadd.f32 0.0, %v960
        %v962 = vpop.f32.mrb[0].mxu0
        %963 = vmatprep.mubr.f32.mxu0 %v808
        %964 = vmatmul.mubr.f32.gmra.mrb[0].mxu0 %v807
        %v965 = vpop.f32.mrb[0].mxu0
        %v966 = vadd.f32 0.0, %v965
        %v967 = vpop.f32.mrb[0].mxu0
        %968 = vmatprep.mubr.f32.mxu0 %v810
        %969 = vmatmul.mubr.f32.gmra.mrb[0].mxu0 %v809
        %v970 = vpop.f32.mrb[0].mxu0
        %v971 = vadd.f32 0.0, %v970
        %v972 = vpop.f32.mrb[0].mxu0
        %973 = vmatprep.mubr.f32.mxu0 %v812
        %974 = vmatmul.mubr.f32.gmra.mrb[0].mxu0 %v811
        %v975 = vpop.f32.mrb[0].mxu0
        %v976 = vadd.f32 0.0, %v975
        %v977 = vpop.f32.mrb[0].mxu0
        %978 = vmatprep.mubr.f32.mxu0 %v814
        %979 = vmatmul.mubr.f32.gmra.mrb[0].mxu0 %v813
        %v980 = vpop.f32.mrb[0].mxu0
        %v981 = vadd.f32 0.0, %v980
        %v982 = vpop.f32.mrb[0].mxu0
        %983 = vmatprep.mubr.f32.mxu0 %v816
        %984 = vmatmul.mubr.f32.gmra.mrb[0].mxu0 %v815
        %v985 = vpop.f32.mrb[0].mxu0
        %v986 = vadd.f32 0.0, %v985
        %v987 = vpop.f32.mrb[0].mxu0
        %988 = vmatprep.mubr.f32.mxu0 %v818
        %989 = vmatmul.mubr.f32.gmra.mrb[0].mxu0 %v817
        %v990 = vpop.f32.mrb[0].mxu0
        %v991 = vadd.f32 0.0, %v990
        %v992 = vpop.f32.mrb[0].mxu0
        %993 = vmatprep.mubr.f32.mxu0 %v820
        %994 = vmatmul.mubr.f32.gmra.mrb[0].mxu0 %v819
        %v995 = vpop.f32.mrb[0].mxu0
        %v996 = vadd.f32 0.0, %v995
        %v997 = vpop.f32.mrb[0].mxu0
        %998 = vmatprep.mubr.f32.mxu0 %v822
        %999 = vmatmul.mubr.f32.gmra.mrb[0].mxu0 %v821
        %v1000 = vpop.f32.mrb[0].mxu0
        %v1001 = vadd.f32 0.0, %v1000
        %v1002 = vpop.f32.mrb[0].mxu0
        %1003 = vmatprep.mubr.f32.mxu0 %v824
        %1004 = vmatmul.mubr.f32.gmra.mrb[0].mxu0 %v823
        %v1005 = vpop.f32.mrb[0].mxu0
        %v1006 = vadd.f32 0.0, %v1005
        %v1007 = vpop.f32.mrb[0].mxu0
        %1008 = vmatprep.mubr.f32.mxu0 %v826
        %1009 = vmatmul.mubr.f32.gmra.mrb[0].mxu0 %v825
        %v1010 = vpop.f32.mrb[0].mxu0
        %v1011 = vadd.f32 0.0, %v1010
        %v1012 = vpop.f32.mrb[0].mxu0
        %1013 = vmatprep.mubr.f32.mxu0 %v828
        %1014 = vmatmul.mubr.f32.gmra.mrb[0].mxu0 %v827
        %v1015 = vpop.f32.mrb[0].mxu0
        %v1016 = vadd.f32 0.0, %v1015
        %v1017 = vpop.f32.mrb[0].mxu0
        %1018 = vmatprep.mubr.f32.mxu0 %v830
        %1019 = vmatmul.mubr.f32.gmra.mrb[0].mxu0 %v829
        %v1020 = vpop.f32.mrb[0].mxu0
        %v1021 = vadd.f32 0.0, %v1020
        %v1022 = vpop.f32.mrb[0].mxu0
        %1023 = vmatprep.mubr.f32.mxu0 %v832
        %1024 = vmatmul.mubr.f32.gmra.mrb[0].mxu0 %v831
        %v1025 = vpop.f32.mrb[0].mxu0
        %v1026 = vadd.f32 0.0, %v1025
        %v1027 = vpop.f32.mrb[0].mxu0
        %1028 = vmatprep.mubr.f32.mxu0 %v834
        %1029 = vmatmul.mubr.f32.gmra.mrb[0].mxu0 %v833
        %v1030 = vpop.f32.mrb[0].mxu0
        %v1031 = vadd.f32 0.0, %v1030
        %v1032 = vpop.f32.mrb[0].mxu0
        %1033 = vmatprep.mubr.f32.mxu0 %v836
        %1034 = vmatmul.mubr.f32.gmra.mrb[0].mxu0 %v835
        %v1035 = vpop.f32.mrb[0].mxu0
        %v1036 = vadd.f32 0.0, %v1035
        %v1037 = vpop.f32.mrb[0].mxu0
        %1038 = vdwg.mxu0
        %v1039 = vmul.f32 %v783, %v783
        %v1040 = vmul.f32 %v784, %v784
        %v1041 = vmul.f32 %v785, %v785
        %v1042 = vmul.f32 %v786, %v786
        %v1043 = vmul.f32 %v787, %v787
        %v1044 = vmul.f32 %v788, %v788
        %v1045 = vmul.f32 %v789, %v789
        %v1046 = vmul.f32 %v790, %v790
        %v1047 = vmul.f32 %v791, %v791
        %v1048 = vmul.f32 %v792, %v792
        %v1049 = vmul.f32 %v793, %v793
        %v1050 = vmul.f32 %v794, %v794
        %v1051 = vmul.f32 %v795, %v795
        %v1052 = vmul.f32 %v796, %v796
        %v1053 = vmul.f32 %v797, %v797
        %v1054 = vmul.f32 %v798, %v798
        %v1055 = vmul.f32 %v799, %v799
        %v1056 = vmul.f32 %v800, %v800
        %v1057 = vmul.f32 %v801, %v801
        %v1058 = vmul.f32 %v802, %v802
        %v1059 = vmul.f32 %v803, %v803
        %v1060 = vmul.f32 %v804, %v804
        %v1061 = vmul.f32 %v805, %v805
        %v1062 = vmul.f32 %v806, %v806
        %v1063 = vmul.f32 %v807, %v807
        %v1064 = vmul.f32 %v808, %v808
        %v1065 = vmul.f32 %v809, %v809
        %v1066 = vmul.f32 %v810, %v810
        %v1067 = vmul.f32 %v811, %v811
        %v1068 = vmul.f32 %v812, %v812
        %v1069 = vmul.f32 %v813, %v813
        %v1070 = vmul.f32 %v814, %v814
        %v1071 = vmul.f32 %v815, %v815
        %v1072 = vmul.f32 %v816, %v816
        %v1073 = vmul.f32 %v817, %v817
        %v1074 = vmul.f32 %v818, %v818
        %v1075 = vmul.f32 %v819, %v819
        %v1076 = vmul.f32 %v820, %v820
        %v1077 = vmul.f32 %v821, %v821
        %v1078 = vmul.f32 %v822, %v822
        %v1079 = vmul.f32 %v823, %v823
        %v1080 = vmul.f32 %v824, %v824
        %v1081 = vmul.f32 %v825, %v825
        %v1082 = vmul.f32 %v826, %v826
        %v1083 = vmul.f32 %v827, %v827
        %v1084 = vmul.f32 %v828, %v828
        %v1085 = vmul.f32 %v829, %v829
        %v1086 = vmul.f32 %v830, %v830
        %v1087 = vmul.f32 %v831, %v831
        %v1088 = vmul.f32 %v832, %v832
        %v1089 = vmul.f32 %v833, %v833
        %v1090 = vmul.f32 %v834, %v834
        %v1091 = vmul.f32 %v835, %v835
        %v1092 = vmul.f32 %v836, %v836
        %1093 = vmatprep.subr.mxu0 0.0
        %1094 = vmatpush1.msra.mxu0 1.0
        %1095 = vmatprep.subr.mxu0 0.0
        %1096 = vmatpush1.msra.mxu0 1.0
        %1097 = vmatprep.subr.mxu0 0.0
        %1098 = vmatpush1.msra.mxu0 1.0
        %1099 = vmatprep.subr.mxu0 0.0
        %1100 = vmatpush1.msra.mxu0 1.0
        %1101 = vmatprep.subr.mxu0 0.0
        %1102 = vmatpush1.msra.mxu0 1.0
        %1103 = vmatprep.subr.mxu0 0.0
        %1104 = vmatpush1.msra.mxu0 1.0
        %1105 = vmatprep.subr.mxu0 0.0
        %1106 = vmatpush1.msra.mxu0 1.0
        %1107 = vmatprep.subr.mxu0 0.0
        %1108 = vmatpush1.msra.mxu0 1.0
        %1109 = vmatprep.subr.mxu0 0.0
        %1110 = vmatpush1.msra.mxu0 1.0
        %1111 = vmatprep.subr.mxu0 0.0
        %1112 = vmatpush1.msra.mxu0 1.0
        %1113 = vmatprep.subr.mxu0 0.0
        %1114 = vmatpush1.msra.mxu0 1.0
        %1115 = vmatprep.subr.mxu0 0.0
        %1116 = vmatpush1.msra.mxu0 1.0
        %1117 = vmatprep.subr.mxu0 0.0
        %1118 = vmatpush1.msra.mxu0 1.0
        %1119 = vmatprep.subr.mxu0 0.0
        %1120 = vmatpush1.msra.mxu0 1.0
        %1121 = vmatprep.subr.mxu0 0.0
        %1122 = vmatpush1.msra.mxu0 1.0
        %1123 = vmatprep.subr.mxu0 0.0
        %1124 = vmatpush1.msra.mxu0 1.0
        %1125 = vmatprep.subr.mxu0 0.0
        %1126 = vmatpush1.msra.mxu0 1.0
        %1127 = vmatprep.subr.mxu0 0.0
        %1128 = vmatpush1.msra.mxu0 1.0
        %1129 = vmatprep.subr.mxu0 0.0
        %1130 = vmatpush1.msra.mxu0 1.0
        %1131 = vmatprep.subr.mxu0 0.0
        %1132 = vmatpush1.msra.mxu0 1.0
        %1133 = vmatprep.subr.mxu0 0.0
        %1134 = vmatpush1.msra.mxu0 1.0
        %1135 = vmatprep.subr.mxu0 0.0
        %1136 = vmatpush1.msra.mxu0 1.0
        %1137 = vmatprep.subr.mxu0 0.0
        %1138 = vmatpush1.msra.mxu0 1.0
        %1139 = vmatprep.subr.mxu0 0.0
        %1140 = vmatpush1.msra.mxu0 1.0
        %1141 = vmatprep.subr.mxu0 0.0
        %1142 = vmatpush1.msra.mxu0 1.0
        %1143 = vmatprep.subr.mxu0 0.0
        %1144 = vmatpush1.msra.mxu0 1.0
        %1145 = vmatprep.subr.mxu0 0.0
        %1146 = vmatpush1.msra.mxu0 1.0
        %1147 = vmatprep.subr.mxu0 0.0
        %1148 = vmatpush1.msra.mxu0 1.0
        %1149 = vmatprep.subr.mxu0 0.0
        %1150 = vmatpush1.msra.mxu0 1.0
        %1151 = vmatprep.subr.mxu0 0.0
        %1152 = vmatpush1.msra.mxu0 1.0
        %1153 = vmatprep.subr.mxu0 0.0
        %1154 = vmatpush1.msra.mxu0 1.0
        %1155 = vmatprep.subr.mxu0 0.0
        %1156 = vmatpush1.msra.mxu0 1.0
        %1157 = vmatprep.mubr.f32.mxu0 %v1040
        %1158 = vmatmul.mubr.f32.gmra.mrb[0].mxu0 %v1039
        %v1159 = vpop.f32.mrb[0].mxu0
        %v1160 = vadd.f32 0.0, %v1159
        %v1161 = vpop.f32.mrb[0].mxu0
        %1162 = vmatprep.mubr.f32.mxu0 %v1042
        %1163 = vmatmul.mubr.f32.gmra.mrb[0].mxu0 %v1041
        %v1164 = vpop.f32.mrb[0].mxu0
        %v1165 = vadd.f32 0.0, %v1164
        %v1166 = vpop.f32.mrb[0].mxu0
        %1167 = vmatprep.mubr.f32.mxu0 %v1044
        %1168 = vmatmul.mubr.f32.gmra.mrb[0].mxu0 %v1043
        %v1169 = vpop.f32.mrb[0].mxu0
        %v1170 = vadd.f32 0.0, %v1169
        %v1171 = vpop.f32.mrb[0].mxu0
        %1172 = vmatprep.mubr.f32.mxu0 %v1046
        %1173 = vmatmul.mubr.f32.gmra.mrb[0].mxu0 %v1045
        %v1174 = vpop.f32.mrb[0].mxu0
        %v1175 = vadd.f32 0.0, %v1174
        %v1176 = vpop.f32.mrb[0].mxu0
        %1177 = vmatprep.mubr.f32.mxu0 %v1048
        %1178 = vmatmul.mubr.f32.gmra.mrb[0].mxu0 %v1047
        %v1179 = vpop.f32.mrb[0].mxu0
        %v1180 = vadd.f32 0.0, %v1179
        %v1181 = vpop.f32.mrb[0].mxu0
        %1182 = vmatprep.mubr.f32.mxu0 %v1050
        %1183 = vmatmul.mubr.f32.gmra.mrb[0].mxu0 %v1049
        %v1184 = vpop.f32.mrb[0].mxu0
        %v1185 = vadd.f32 0.0, %v1184
        %v1186 = vpop.f32.mrb[0].mxu0
        %1187 = vmatprep.mubr.f32.mxu0 %v1052
        %1188 = vmatmul.mubr.f32.gmra.mrb[0].mxu0 %v1051
        %v1189 = vpop.f32.mrb[0].mxu0
        %v1190 = vadd.f32 0.0, %v1189
        %v1191 = vpop.f32.mrb[0].mxu0
        %1192 = vmatprep.mubr.f32.mxu0 %v1054
        %1193 = vmatmul.mubr.f32.gmra.mrb[0].mxu0 %v1053
        %v1194 = vpop.f32.mrb[0].mxu0
        %v1195 = vadd.f32 0.0, %v1194
        %v1196 = vpop.f32.mrb[0].mxu0
        %1197 = vmatprep.mubr.f32.mxu0 %v1056
        %1198 = vmatmul.mubr.f32.gmra.mrb[0].mxu0 %v1055
        %v1199 = vpop.f32.mrb[0].mxu0
        %v1200 = vadd.f32 0.0, %v1199
        %v1201 = vpop.f32.mrb[0].mxu0
        %1202 = vmatprep.mubr.f32.mxu0 %v1058
        %1203 = vmatmul.mubr.f32.gmra.mrb[0].mxu0 %v1057
        %v1204 = vpop.f32.mrb[0].mxu0
        %v1205 = vadd.f32 0.0, %v1204
        %v1206 = vpop.f32.mrb[0].mxu0
        %1207 = vmatprep.mubr.f32.mxu0 %v1060
        %1208 = vmatmul.mubr.f32.gmra.mrb[0].mxu0 %v1059
        %v1209 = vpop.f32.mrb[0].mxu0
        %v1210 = vadd.f32 0.0, %v1209
        %v1211 = vpop.f32.mrb[0].mxu0
        %1212 = vmatprep.mubr.f32.mxu0 %v1062
        %1213 = vmatmul.mubr.f32.gmra.mrb[0].mxu0 %v1061
        %v1214 = vpop.f32.mrb[0].mxu0
        %v1215 = vadd.f32 0.0, %v1214
        %v1216 = vpop.f32.mrb[0].mxu0
        %1217 = vmatprep.mubr.f32.mxu0 %v1064
        %1218 = vmatmul.mubr.f32.gmra.mrb[0].mxu0 %v1063
        %v1219 = vpop.f32.mrb[0].mxu0
        %v1220 = vadd.f32 0.0, %v1219
        %v1221 = vpop.f32.mrb[0].mxu0
        %1222 = vmatprep.mubr.f32.mxu0 %v1066
        %1223 = vmatmul.mubr.f32.gmra.mrb[0].mxu0 %v1065
        %v1224 = vpop.f32.mrb[0].mxu0
        %v1225 = vadd.f32 0.0, %v1224
        %v1226 = vpop.f32.mrb[0].mxu0
        %1227 = vmatprep.mubr.f32.mxu0 %v1068
        %1228 = vmatmul.mubr.f32.gmra.mrb[0].mxu0 %v1067
        %v1229 = vpop.f32.mrb[0].mxu0
        %v1230 = vadd.f32 0.0, %v1229
        %v1231 = vpop.f32.mrb[0].mxu0
        %1232 = vmatprep.mubr.f32.mxu0 %v1070
        %1233 = vmatmul.mubr.f32.gmra.mrb[0].mxu0 %v1069
        %v1234 = vpop.f32.mrb[0].mxu0
        %v1235 = vadd.f32 0.0, %v1234
        %v1236 = vpop.f32.mrb[0].mxu0
        %1237 = vmatprep.mubr.f32.mxu0 %v1072
        %1238 = vmatmul.mubr.f32.gmra.mrb[0].mxu0 %v1071
        %v1239 = vpop.f32.mrb[0].mxu0
        %v1240 = vadd.f32 0.0, %v1239
        %v1241 = vpop.f32.mrb[0].mxu0
        %1242 = vmatprep.mubr.f32.mxu0 %v1074
        %1243 = vmatmul.mubr.f32.gmra.mrb[0].mxu0 %v1073
        %v1244 = vpop.f32.mrb[0].mxu0
        %v1245 = vadd.f32 0.0, %v1244
        %v1246 = vpop.f32.mrb[0].mxu0
        %1247 = vmatprep.mubr.f32.mxu0 %v1076
        %1248 = vmatmul.mubr.f32.gmra.mrb[0].mxu0 %v1075
        %v1249 = vpop.f32.mrb[0].mxu0
        %v1250 = vadd.f32 0.0, %v1249
        %v1251 = vpop.f32.mrb[0].mxu0
        %1252 = vmatprep.mubr.f32.mxu0 %v1078
        %1253 = vmatmul.mubr.f32.gmra.mrb[0].mxu0 %v1077
        %v1254 = vpop.f32.mrb[0].mxu0
        %v1255 = vadd.f32 0.0, %v1254
        %v1256 = vpop.f32.mrb[0].mxu0
        %1257 = vmatprep.mubr.f32.mxu0 %v1080
        %1258 = vmatmul.mubr.f32.gmra.mrb[0].mxu0 %v1079
        %v1259 = vpop.f32.mrb[0].mxu0
        %v1260 = vadd.f32 0.0, %v1259
        %v1261 = vpop.f32.mrb[0].mxu0
        %1262 = vmatprep.mubr.f32.mxu0 %v1082
        %1263 = vmatmul.mubr.f32.gmra.mrb[0].mxu0 %v1081
        %v1264 = vpop.f32.mrb[0].mxu0
        %v1265 = vadd.f32 0.0, %v1264
        %v1266 = vpop.f32.mrb[0].mxu0
        %1267 = vmatprep.mubr.f32.mxu0 %v1084
        %1268 = vmatmul.mubr.f32.gmra.mrb[0].mxu0 %v1083
        %v1269 = vpop.f32.mrb[0].mxu0
        %v1270 = vadd.f32 0.0, %v1269
        %v1271 = vpop.f32.mrb[0].mxu0
        %1272 = vmatprep.mubr.f32.mxu0 %v1086
        %1273 = vmatmul.mubr.f32.gmra.mrb[0].mxu0 %v1085
        %v1274 = vpop.f32.mrb[0].mxu0
        %v1275 = vadd.f32 0.0, %v1274
        %v1276 = vpop.f32.mrb[0].mxu0
        %1277 = vmatprep.mubr.f32.mxu0 %v1088
        %1278 = vmatmul.mubr.f32.gmra.mrb[0].mxu0 %v1087
        %v1279 = vpop.f32.mrb[0].mxu0
        %v1280 = vadd.f32 0.0, %v1279
        %v1281 = vpop.f32.mrb[0].mxu0
        %1282 = vmatprep.mubr.f32.mxu0 %v1090
        %1283 = vmatmul.mubr.f32.gmra.mrb[0].mxu0 %v1089
        %v1284 = vpop.f32.mrb[0].mxu0
        %v1285 = vadd.f32 0.0, %v1284
        %v1286 = vpop.f32.mrb[0].mxu0
        %1287 = vmatprep.mubr.f32.mxu0 %v1092
        %1288 = vmatmul.mubr.f32.gmra.mrb[0].mxu0 %v1091
        %v1289 = vpop.f32.mrb[0].mxu0
        %v1290 = vadd.f32 0.0, %v1289
        %v1291 = vpop.f32.mrb[0].mxu0
        %1292 = vdwg.mxu0
        %v1293 = vmul.f32 %v906, 0.00625
        %v1294 = vmul.f32 %v911, 0.00625
        %v1295 = vmul.f32 %v916, 0.00625
        %v1296 = vmul.f32 %v921, 0.00625
        %v1297 = vmul.f32 %v926, 0.00625
        %v1298 = vmul.f32 %v931, 0.00625
        %v1299 = vmul.f32 %v936, 0.00625
        %v1300 = vmul.f32 %v941, 0.00625
        %v1301 = vmul.f32 %v946, 0.00625
        %v1302 = vmul.f32 %v951, 0.00625
        %v1303 = vmul.f32 %v956, 0.00625
        %v1304 = vmul.f32 %v961, 0.00625
        %v1305 = vmul.f32 %v966, 0.00625
        %v1306 = vmul.f32 %v971, 0.00625
        %v1307 = vmul.f32 %v976, 0.00625
        %v1308 = vmul.f32 %v981, 0.00625
        %v1309 = vmul.f32 %v986, 0.00625
        %v1310 = vmul.f32 %v991, 0.00625
        %v1311 = vmul.f32 %v996, 0.00625
        %v1312 = vmul.f32 %v1001, 0.00625
        %v1313 = vmul.f32 %v1006, 0.00625
        %v1314 = vmul.f32 %v1011, 0.00625
        %v1315 = vmul.f32 %v1016, 0.00625
        %v1316 = vmul.f32 %v1021, 0.00625
        %v1317 = vmul.f32 %v1026, 0.00625
        %v1318 = vmul.f32 %v1031, 0.00625
        %v1319 = vmul.f32 %v1036, 0.00625
        %v1320 = vmul.f32 %v1160, 0.00625
        %v1321 = vmul.f32 %v1165, 0.00625
        %v1322 = vmul.f32 %v1170, 0.00625
        %v1323 = vmul.f32 %v1175, 0.00625
        %v1324 = vmul.f32 %v1180, 0.00625
        %v1325 = vmul.f32 %v1185, 0.00625
        %v1326 = vmul.f32 %v1190, 0.00625
        %v1327 = vmul.f32 %v1195, 0.00625
        %v1328 = vmul.f32 %v1200, 0.00625
        %v1329 = vmul.f32 %v1205, 0.00625
        %v1330 = vmul.f32 %v1210, 0.00625
        %v1331 = vmul.f32 %v1215, 0.00625
        %v1332 = vmul.f32 %v1220, 0.00625
        %v1333 = vmul.f32 %v1225, 0.00625
        %v1334 = vmul.f32 %v1230, 0.00625
        %v1335 = vmul.f32 %v1235, 0.00625
        %v1336 = vmul.f32 %v1240, 0.00625
        %v1337 = vmul.f32 %v1245, 0.00625
        %v1338 = vmul.f32 %v1250, 0.00625
        %v1339 = vmul.f32 %v1255, 0.00625
        %v1340 = vmul.f32 %v1260, 0.00625
        %v1341 = vmul.f32 %v1265, 0.00625
        %v1342 = vmul.f32 %v1270, 0.00625
        %v1343 = vmul.f32 %v1275, 0.00625
        %v1344 = vmul.f32 %v1280, 0.00625
        %v1345 = vmul.f32 %v1285, 0.00625
        %v1346 = vmul.f32 %v1290, 0.00625
        %v1347 = vmul.f32 %v1293, %v1293
        %v1348 = vmul.f32 %v1294, %v1294
        %v1349 = vmul.f32 %v1295, %v1295
        %v1350 = vmul.f32 %v1296, %v1296
        %v1351 = vmul.f32 %v1297, %v1297
        %v1352 = vmul.f32 %v1298, %v1298
        %v1353 = vmul.f32 %v1299, %v1299
        %v1354 = vmul.f32 %v1300, %v1300
        %v1355 = vmul.f32 %v1301, %v1301
        %v1356 = vmul.f32 %v1302, %v1302
        %v1357 = vmul.f32 %v1303, %v1303
        %v1358 = vmul.f32 %v1304, %v1304
        %v1359 = vmul.f32 %v1305, %v1305
        %v1360 = vmul.f32 %v1306, %v1306
        %v1361 = vmul.f32 %v1307, %v1307
        %v1362 = vmul.f32 %v1308, %v1308
        %v1363 = vmul.f32 %v1309, %v1309
        %v1364 = vmul.f32 %v1310, %v1310
        %v1365 = vmul.f32 %v1311, %v1311
        %v1366 = vmul.f32 %v1312, %v1312
        %v1367 = vmul.f32 %v1313, %v1313
        %v1368 = vmul.f32 %v1314, %v1314
        %v1369 = vmul.f32 %v1315, %v1315
        %v1370 = vmul.f32 %v1316, %v1316
        %v1371 = vmul.f32 %v1317, %v1317
        %v1372 = vmul.f32 %v1318, %v1318
        %v1373 = vmul.f32 %v1319, %v1319
        %v1374 = vsub.f32 %v1320, %v1347
        %v1375 = vsub.f32 %v1321, %v1348
        %v1376 = vsub.f32 %v1322, %v1349
        %v1377 = vsub.f32 %v1323, %v1350
        %v1378 = vsub.f32 %v1324, %v1351
        %v1379 = vsub.f32 %v1325, %v1352
        %v1380 = vsub.f32 %v1326, %v1353
        %v1381 = vsub.f32 %v1327, %v1354
        %v1382 = vsub.f32 %v1328, %v1355
        %v1383 = vsub.f32 %v1329, %v1356
        %v1384 = vsub.f32 %v1330, %v1357
        %v1385 = vsub.f32 %v1331, %v1358
        %v1386 = vsub.f32 %v1332, %v1359
        %v1387 = vsub.f32 %v1333, %v1360
        %v1388 = vsub.f32 %v1334, %v1361
        %v1389 = vsub.f32 %v1335, %v1362
        %v1390 = vsub.f32 %v1336, %v1363
        %v1391 = vsub.f32 %v1337, %v1364
        %v1392 = vsub.f32 %v1338, %v1365
        %v1393 = vsub.f32 %v1339, %v1366
        %v1394 = vsub.f32 %v1340, %v1367
        %v1395 = vsub.f32 %v1341, %v1368
        %v1396 = vsub.f32 %v1342, %v1369
        %v1397 = vsub.f32 %v1343, %v1370
        %v1398 = vsub.f32 %v1344, %v1371
        %v1399 = vsub.f32 %v1345, %v1372
        %v1400 = vsub.f32 %v1346, %v1373
        %v1401 = vmax.f32 %v1374, 0.0
        %v1402 = vmax.f32 %v1375, 0.0
        %v1403 = vmax.f32 %v1376, 0.0
        %v1404 = vmax.f32 %v1377, 0.0
        %v1405 = vmax.f32 %v1378, 0.0
        %v1406 = vmax.f32 %v1379, 0.0
        %v1407 = vmax.f32 %v1380, 0.0
        %v1408 = vmax.f32 %v1381, 0.0
        %v1409 = vmax.f32 %v1382, 0.0
        %v1410 = vmax.f32 %v1383, 0.0
        %v1411 = vmax.f32 %v1384, 0.0
        %v1412 = vmax.f32 %v1385, 0.0
        %v1413 = vmax.f32 %v1386, 0.0
        %v1414 = vmax.f32 %v1387, 0.0
        %v1415 = vmax.f32 %v1388, 0.0
        %v1416 = vmax.f32 %v1389, 0.0
        %v1417 = vmax.f32 %v1390, 0.0
        %v1418 = vmax.f32 %v1391, 0.0
        %v1419 = vmax.f32 %v1392, 0.0
        %v1420 = vmax.f32 %v1393, 0.0
        %v1421 = vmax.f32 %v1394, 0.0
        %v1422 = vmax.f32 %v1395, 0.0
        %v1423 = vmax.f32 %v1396, 0.0
        %v1424 = vmax.f32 %v1397, 0.0
        %v1425 = vmax.f32 %v1398, 0.0
        %v1426 = vmax.f32 %v1399, 0.0
        %v1427 = vmax.f32 %v1400, 0.0
        %1429 = vset.pattern.permute.xlu0 0
        %1430 = vperm.xlu0 %1429, %v1293
        %v1431 = vpop.permute.xlu0 %1430
        %1434 = vset.pattern.permute.xlu0 0
        %1435 = vperm.xlu0 %1434, %v1294
        %v1436 = vpop.permute.xlu0 %1435
        %1439 = vset.pattern.permute.xlu0 0
        %1440 = vperm.xlu0 %1439, %v1295
        %v1441 = vpop.permute.xlu0 %1440
        %1444 = vset.pattern.permute.xlu0 0
        %1445 = vperm.xlu0 %1444, %v1296
        %v1446 = vpop.permute.xlu0 %1445
        %1449 = vset.pattern.permute.xlu0 0
        %1450 = vperm.xlu0 %1449, %v1297
        %v1451 = vpop.permute.xlu0 %1450
        %1454 = vset.pattern.permute.xlu0 0
        %1455 = vperm.xlu0 %1454, %v1298
        %v1456 = vpop.permute.xlu0 %1455
        %1459 = vset.pattern.permute.xlu0 0
        %1460 = vperm.xlu0 %1459, %v1299
        %v1461 = vpop.permute.xlu0 %1460
        %1464 = vset.pattern.permute.xlu0 0
        %1465 = vperm.xlu0 %1464, %v1300
        %v1466 = vpop.permute.xlu0 %1465
        %1469 = vset.pattern.permute.xlu0 0
        %1470 = vperm.xlu0 %1469, %v1301
        %v1471 = vpop.permute.xlu0 %1470
        %1474 = vset.pattern.permute.xlu0 0
        %1475 = vperm.xlu0 %1474, %v1302
        %v1476 = vpop.permute.xlu0 %1475
        %1479 = vset.pattern.permute.xlu0 0
        %1480 = vperm.xlu0 %1479, %v1303
        %v1481 = vpop.permute.xlu0 %1480
        %1484 = vset.pattern.permute.xlu0 0
        %1485 = vperm.xlu0 %1484, %v1304
        %v1486 = vpop.permute.xlu0 %1485
        %1489 = vset.pattern.permute.xlu0 0
        %1490 = vperm.xlu0 %1489, %v1305
        %v1491 = vpop.permute.xlu0 %1490
        %1494 = vset.pattern.permute.xlu0 0
        %1495 = vperm.xlu0 %1494, %v1306
        %v1496 = vpop.permute.xlu0 %1495
        %1499 = vset.pattern.permute.xlu0 0
        %1500 = vperm.xlu0 %1499, %v1307
        %v1501 = vpop.permute.xlu0 %1500
        %1504 = vset.pattern.permute.xlu0 0
        %1505 = vperm.xlu0 %1504, %v1308
        %v1506 = vpop.permute.xlu0 %1505
        %1509 = vset.pattern.permute.xlu0 0
        %1510 = vperm.xlu0 %1509, %v1309
        %v1511 = vpop.permute.xlu0 %1510
        %1514 = vset.pattern.permute.xlu0 0
        %1515 = vperm.xlu0 %1514, %v1310
        %v1516 = vpop.permute.xlu0 %1515
        %1519 = vset.pattern.permute.xlu0 0
        %1520 = vperm.xlu0 %1519, %v1311
        %v1521 = vpop.permute.xlu0 %1520
        %1524 = vset.pattern.permute.xlu0 0
        %1525 = vperm.xlu0 %1524, %v1312
        %v1526 = vpop.permute.xlu0 %1525
        %1529 = vset.pattern.permute.xlu0 0
        %1530 = vperm.xlu0 %1529, %v1313
        %v1531 = vpop.permute.xlu0 %1530
        %1534 = vset.pattern.permute.xlu0 0
        %1535 = vperm.xlu0 %1534, %v1314
        %v1536 = vpop.permute.xlu0 %1535
        %1539 = vset.pattern.permute.xlu0 0
        %1540 = vperm.xlu0 %1539, %v1315
        %v1541 = vpop.permute.xlu0 %1540
        %1544 = vset.pattern.permute.xlu0 0
        %1545 = vperm.xlu0 %1544, %v1316
        %v1546 = vpop.permute.xlu0 %1545
        %1549 = vset.pattern.permute.xlu0 0
        %1550 = vperm.xlu0 %1549, %v1317
        %v1551 = vpop.permute.xlu0 %1550
        %1554 = vset.pattern.permute.xlu0 0
        %1555 = vperm.xlu0 %1554, %v1318
        %v1556 = vpop.permute.xlu0 %1555
        %1559 = vset.pattern.permute.xlu0 0
        %1560 = vperm.xlu0 %1559, %v1319
        %v1561 = vpop.permute.xlu0 %1560
        %v1563 = vsub.f32 %v783, %v1431
        %v1564 = vsub.f32 %v784, %v1431
        %v1565 = vsub.f32 %v785, %v1436
        %v1566 = vsub.f32 %v786, %v1436
        %v1567 = vsub.f32 %v787, %v1441
        %v1568 = vsub.f32 %v788, %v1441
        %v1569 = vsub.f32 %v789, %v1446
        %v1570 = vsub.f32 %v790, %v1446
        %v1571 = vsub.f32 %v791, %v1451
        %v1572 = vsub.f32 %v792, %v1451
        %v1573 = vsub.f32 %v793, %v1456
        %v1574 = vsub.f32 %v794, %v1456
        %v1575 = vsub.f32 %v795, %v1461
        %v1576 = vsub.f32 %v796, %v1461
        %v1577 = vsub.f32 %v797, %v1466
        %v1578 = vsub.f32 %v798, %v1466
        %v1579 = vsub.f32 %v799, %v1471
        %v1580 = vsub.f32 %v800, %v1471
        %v1581 = vsub.f32 %v801, %v1476
        %v1582 = vsub.f32 %v802, %v1476
        %v1583 = vsub.f32 %v803, %v1481
        %v1584 = vsub.f32 %v804, %v1481
        %v1585 = vsub.f32 %v805, %v1486
        %v1586 = vsub.f32 %v806, %v1486
        %v1587 = vsub.f32 %v807, %v1491
        %v1588 = vsub.f32 %v808, %v1491
        %v1589 = vsub.f32 %v809, %v1496
        %v1590 = vsub.f32 %v810, %v1496
        %v1591 = vsub.f32 %v811, %v1501
        %v1592 = vsub.f32 %v812, %v1501
        %v1593 = vsub.f32 %v813, %v1506
        %v1594 = vsub.f32 %v814, %v1506
        %v1595 = vsub.f32 %v815, %v1511
        %v1596 = vsub.f32 %v816, %v1511
        %v1597 = vsub.f32 %v817, %v1516
        %v1598 = vsub.f32 %v818, %v1516
        %v1599 = vsub.f32 %v819, %v1521
        %v1600 = vsub.f32 %v820, %v1521
        %v1601 = vsub.f32 %v821, %v1526
        %v1602 = vsub.f32 %v822, %v1526
        %v1603 = vsub.f32 %v823, %v1531
        %v1604 = vsub.f32 %v824, %v1531
        %v1605 = vsub.f32 %v825, %v1536
        %v1606 = vsub.f32 %v826, %v1536
        %v1607 = vsub.f32 %v827, %v1541
        %v1608 = vsub.f32 %v828, %v1541
        %v1609 = vsub.f32 %v829, %v1546
        %v1610 = vsub.f32 %v830, %v1546
        %v1611 = vsub.f32 %v831, %v1551
        %v1612 = vsub.f32 %v832, %v1551
        %v1613 = vsub.f32 %v833, %v1556
        %v1614 = vsub.f32 %v834, %v1556
        %v1615 = vsub.f32 %v835, %v1561
        %v1616 = vsub.f32 %v836, %v1561
        %v1617 = vadd.f32 %v1401, 1e-05
        %v1618 = vadd.f32 %v1402, 1e-05
        %v1619 = vadd.f32 %v1403, 1e-05
        %v1620 = vadd.f32 %v1404, 1e-05
        %v1621 = vadd.f32 %v1405, 1e-05
        %v1622 = vadd.f32 %v1406, 1e-05
        %v1623 = vadd.f32 %v1407, 1e-05
        %v1624 = vadd.f32 %v1408, 1e-05
        %v1625 = vadd.f32 %v1409, 1e-05
        %v1626 = vadd.f32 %v1410, 1e-05
        %v1627 = vadd.f32 %v1411, 1e-05
        %v1628 = vadd.f32 %v1412, 1e-05
        %v1629 = vadd.f32 %v1413, 1e-05
        %v1630 = vadd.f32 %v1414, 1e-05
        %v1631 = vadd.f32 %v1415, 1e-05
        %v1632 = vadd.f32 %v1416, 1e-05
        %v1633 = vadd.f32 %v1417, 1e-05
        %v1634 = vadd.f32 %v1418, 1e-05
        %v1635 = vadd.f32 %v1419, 1e-05
        %v1636 = vadd.f32 %v1420, 1e-05
        %v1637 = vadd.f32 %v1421, 1e-05
        %v1638 = vadd.f32 %v1422, 1e-05
        %v1639 = vadd.f32 %v1423, 1e-05
        %v1640 = vadd.f32 %v1424, 1e-05
        %v1641 = vadd.f32 %v1425, 1e-05
        %v1642 = vadd.f32 %v1426, 1e-05
        %v1643 = vadd.f32 %v1427, 1e-05
        %v1644 = vrsqrt.pop %v1617
        %v1645 = vrsqrt.pop %v1618
        %v1646 = vrsqrt.pop %v1619
        %v1647 = vrsqrt.pop %v1620
        %v1648 = vrsqrt.pop %v1621
        %v1649 = vrsqrt.pop %v1622
        %v1650 = vrsqrt.pop %v1623
        %v1651 = vrsqrt.pop %v1624
        %v1652 = vrsqrt.pop %v1625
        %v1653 = vrsqrt.pop %v1626
        %v1654 = vrsqrt.pop %v1627
        %v1655 = vrsqrt.pop %v1628
        %v1656 = vrsqrt.pop %v1629
        %v1657 = vrsqrt.pop %v1630
        %v1658 = vrsqrt.pop %v1631
        %v1659 = vrsqrt.pop %v1632
        %v1660 = vrsqrt.pop %v1633
        %v1661 = vrsqrt.pop %v1634
        %v1662 = vrsqrt.pop %v1635
        %v1663 = vrsqrt.pop %v1636
        %v1664 = vrsqrt.pop %v1637
        %v1665 = vrsqrt.pop %v1638
        %v1666 = vrsqrt.pop %v1639
        %v1667 = vrsqrt.pop %v1640
        %v1668 = vrsqrt.pop %v1641
        %v1669 = vrsqrt.pop %v1642
        %v1670 = vrsqrt.pop %v1643
        %1672 = vset.pattern.permute.xlu0 0
        %1673 = vperm.xlu0 %1672, %v1644
        %v1674 = vpop.permute.xlu0 %1673
        %1677 = vset.pattern.permute.xlu0 0
        %1678 = vperm.xlu0 %1677, %v1645
        %v1679 = vpop.permute.xlu0 %1678
        %1682 = vset.pattern.permute.xlu0 0
        %1683 = vperm.xlu0 %1682, %v1646
        %v1684 = vpop.permute.xlu0 %1683
        %1687 = vset.pattern.permute.xlu0 0
        %1688 = vperm.xlu0 %1687, %v1647
        %v1689 = vpop.permute.xlu0 %1688
        %1692 = vset.pattern.permute.xlu0 0
        %1693 = vperm.xlu0 %1692, %v1648
        %v1694 = vpop.permute.xlu0 %1693
        %1697 = vset.pattern.permute.xlu0 0
        %1698 = vperm.xlu0 %1697, %v1649
        %v1699 = vpop.permute.xlu0 %1698
        %1702 = vset.pattern.permute.xlu0 0
        %1703 = vperm.xlu0 %1702, %v1650
        %v1704 = vpop.permute.xlu0 %1703
        %1707 = vset.pattern.permute.xlu0 0
        %1708 = vperm.xlu0 %1707, %v1651
        %v1709 = vpop.permute.xlu0 %1708
        %1712 = vset.pattern.permute.xlu0 0
        %1713 = vperm.xlu0 %1712, %v1652
        %v1714 = vpop.permute.xlu0 %1713
        %1717 = vset.pattern.permute.xlu0 0
        %1718 = vperm.xlu0 %1717, %v1653
        %v1719 = vpop.permute.xlu0 %1718
        %1722 = vset.pattern.permute.xlu0 0
        %1723 = vperm.xlu0 %1722, %v1654
        %v1724 = vpop.permute.xlu0 %1723
        %1727 = vset.pattern.permute.xlu0 0
        %1728 = vperm.xlu0 %1727, %v1655
        %v1729 = vpop.permute.xlu0 %1728
        %1732 = vset.pattern.permute.xlu0 0
        %1733 = vperm.xlu0 %1732, %v1656
        %v1734 = vpop.permute.xlu0 %1733
        %1737 = vset.pattern.permute.xlu0 0
        %1738 = vperm.xlu0 %1737, %v1657
        %v1739 = vpop.permute.xlu0 %1738
        %1742 = vset.pattern.permute.xlu0 0
        %1743 = vperm.xlu0 %1742, %v1658
        %v1744 = vpop.permute.xlu0 %1743
        %1747 = vset.pattern.permute.xlu0 0
        %1748 = vperm.xlu0 %1747, %v1659
        %v1749 = vpop.permute.xlu0 %1748
        %1752 = vset.pattern.permute.xlu0 0
        %1753 = vperm.xlu0 %1752, %v1660
        %v1754 = vpop.permute.xlu0 %1753
        %1757 = vset.pattern.permute.xlu0 0
        %1758 = vperm.xlu0 %1757, %v1661
        %v1759 = vpop.permute.xlu0 %1758
        %1762 = vset.pattern.permute.xlu0 0
        %1763 = vperm.xlu0 %1762, %v1662
        %v1764 = vpop.permute.xlu0 %1763
        %1767 = vset.pattern.permute.xlu0 0
        %1768 = vperm.xlu0 %1767, %v1663
        %v1769 = vpop.permute.xlu0 %1768
        %1772 = vset.pattern.permute.xlu0 0
        %1773 = vperm.xlu0 %1772, %v1664
        %v1774 = vpop.permute.xlu0 %1773
        %1777 = vset.pattern.permute.xlu0 0
        %1778 = vperm.xlu0 %1777, %v1665
        %v1779 = vpop.permute.xlu0 %1778
        %1782 = vset.pattern.permute.xlu0 0
        %1783 = vperm.xlu0 %1782, %v1666
        %v1784 = vpop.permute.xlu0 %1783
        %1787 = vset.pattern.permute.xlu0 0
        %1788 = vperm.xlu0 %1787, %v1667
        %v1789 = vpop.permute.xlu0 %1788
        %1792 = vset.pattern.permute.xlu0 0
        %1793 = vperm.xlu0 %1792, %v1668
        %v1794 = vpop.permute.xlu0 %1793
        %1797 = vset.pattern.permute.xlu0 0
        %1798 = vperm.xlu0 %1797, %v1669
        %v1799 = vpop.permute.xlu0 %1798
        %1802 = vset.pattern.permute.xlu0 0
        %1803 = vperm.xlu0 %1802, %v1670
        %v1804 = vpop.permute.xlu0 %1803
        %v1806 = vmul.f32 %v1563, %v1674
        %v1807 = vmul.f32 %v1564, %v1674
        %v1808 = vmul.f32 %v1565, %v1679
        %v1809 = vmul.f32 %v1566, %v1679
        %v1810 = vmul.f32 %v1567, %v1684
        %v1811 = vmul.f32 %v1568, %v1684
        %v1812 = vmul.f32 %v1569, %v1689
        %v1813 = vmul.f32 %v1570, %v1689
        %v1814 = vmul.f32 %v1571, %v1694
        %v1815 = vmul.f32 %v1572, %v1694
        %v1816 = vmul.f32 %v1573, %v1699
        %v1817 = vmul.f32 %v1574, %v1699
        %v1818 = vmul.f32 %v1575, %v1704
        %v1819 = vmul.f32 %v1576, %v1704
        %v1820 = vmul.f32 %v1577, %v1709
        %v1821 = vmul.f32 %v1578, %v1709
        %v1822 = vmul.f32 %v1579, %v1714
        %v1823 = vmul.f32 %v1580, %v1714
        %v1824 = vmul.f32 %v1581, %v1719
        %v1825 = vmul.f32 %v1582, %v1719
        %v1826 = vmul.f32 %v1583, %v1724
        %v1827 = vmul.f32 %v1584, %v1724
        %v1828 = vmul.f32 %v1585, %v1729
        %v1829 = vmul.f32 %v1586, %v1729
        %v1830 = vmul.f32 %v1587, %v1734
        %v1831 = vmul.f32 %v1588, %v1734
        %v1832 = vmul.f32 %v1589, %v1739
        %v1833 = vmul.f32 %v1590, %v1739
        %v1834 = vmul.f32 %v1591, %v1744
        %v1835 = vmul.f32 %v1592, %v1744
        %v1836 = vmul.f32 %v1593, %v1749
        %v1837 = vmul.f32 %v1594, %v1749
        %v1838 = vmul.f32 %v1595, %v1754
        %v1839 = vmul.f32 %v1596, %v1754
        %v1840 = vmul.f32 %v1597, %v1759
        %v1841 = vmul.f32 %v1598, %v1759
        %v1842 = vmul.f32 %v1599, %v1764
        %v1843 = vmul.f32 %v1600, %v1764
        %v1844 = vmul.f32 %v1601, %v1769
        %v1845 = vmul.f32 %v1602, %v1769
        %v1846 = vmul.f32 %v1603, %v1774
        %v1847 = vmul.f32 %v1604, %v1774
        %v1848 = vmul.f32 %v1605, %v1779
        %v1849 = vmul.f32 %v1606, %v1779
        %v1850 = vmul.f32 %v1607, %v1784
        %v1851 = vmul.f32 %v1608, %v1784
        %v1852 = vmul.f32 %v1609, %v1789
        %v1853 = vmul.f32 %v1610, %v1789
        %v1854 = vmul.f32 %v1611, %v1794
        %v1855 = vmul.f32 %v1612, %v1794
        %v1856 = vmul.f32 %v1613, %v1799
        %v1857 = vmul.f32 %v1614, %v1799
        %v1858 = vmul.f32 %v1615, %v1804
        %v1859 = vmul.f32 %v1616, %v1804
        %v1861 = vlaneseq
        %v1862 = vshrl.u32 %v1861, 7
        %v1863 = vsub.s32 0, %v1862
        %v1864 = vrot.slane %v837, %v1863
        %v1865 = vlaneseq
        %v1866 = vshrl.u32 %v1865, 7
        %v1867 = vsub.s32 1, %v1866
        %v1868 = vrot.slane %v837, %v1867
        %v1871 = vmul.f32 %v1806, %v1864
        %v1872 = vmul.f32 %v1807, %v1868
        %v1873 = vmul.f32 %v1808, %v1864
        %v1874 = vmul.f32 %v1809, %v1868
        %v1875 = vmul.f32 %v1810, %v1864
        %v1876 = vmul.f32 %v1811, %v1868
        %v1877 = vmul.f32 %v1812, %v1864
        %v1878 = vmul.f32 %v1813, %v1868
        %v1879 = vmul.f32 %v1814, %v1864
        %v1880 = vmul.f32 %v1815, %v1868
        %v1881 = vmul.f32 %v1816, %v1864
        %v1882 = vmul.f32 %v1817, %v1868
        %v1883 = vmul.f32 %v1818, %v1864
        %v1884 = vmul.f32 %v1819, %v1868
        %v1885 = vmul.f32 %v1820, %v1864
        %v1886 = vmul.f32 %v1821, %v1868
        %v1887 = vmul.f32 %v1822, %v1864
        %v1888 = vmul.f32 %v1823, %v1868
        %v1889 = vmul.f32 %v1824, %v1864
        %v1890 = vmul.f32 %v1825, %v1868
        %v1891 = vmul.f32 %v1826, %v1864
        %v1892 = vmul.f32 %v1827, %v1868
        %v1893 = vmul.f32 %v1828, %v1864
        %v1894 = vmul.f32 %v1829, %v1868
        %v1895 = vmul.f32 %v1830, %v1864
        %v1896 = vmul.f32 %v1831, %v1868
        %v1897 = vmul.f32 %v1832, %v1864
        %v1898 = vmul.f32 %v1833, %v1868
        %v1899 = vmul.f32 %v1834, %v1864
        %v1900 = vmul.f32 %v1835, %v1868
        %v1901 = vmul.f32 %v1836, %v1864
        %v1902 = vmul.f32 %v1837, %v1868
        %v1903 = vmul.f32 %v1838, %v1864
        %v1904 = vmul.f32 %v1839, %v1868
        %v1905 = vmul.f32 %v1840, %v1864
        %v1906 = vmul.f32 %v1841, %v1868
        %v1907 = vmul.f32 %v1842, %v1864
        %v1908 = vmul.f32 %v1843, %v1868
        %v1909 = vmul.f32 %v1844, %v1864
        %v1910 = vmul.f32 %v1845, %v1868
        %v1911 = vmul.f32 %v1846, %v1864
        %v1912 = vmul.f32 %v1847, %v1868
        %v1913 = vmul.f32 %v1848, %v1864
        %v1914 = vmul.f32 %v1849, %v1868
        %v1915 = vmul.f32 %v1850, %v1864
        %v1916 = vmul.f32 %v1851, %v1868
        %v1917 = vmul.f32 %v1852, %v1864
        %v1918 = vmul.f32 %v1853, %v1868
        %v1919 = vmul.f32 %v1854, %v1864
        %v1920 = vmul.f32 %v1855, %v1868
        %v1921 = vmul.f32 %v1856, %v1864
        %v1922 = vmul.f32 %v1857, %v1868
        %v1923 = vmul.f32 %v1858, %v1864
        %v1924 = vmul.f32 %v1859, %v1868
        %v1926 = vlaneseq
        %v1927 = vshrl.u32 %v1926, 7
        %v1928 = vsub.s32 0, %v1927
        %v1929 = vrot.slane %v838, %v1928
        %v1930 = vlaneseq
        %v1931 = vshrl.u32 %v1930, 7
        %v1932 = vsub.s32 1, %v1931
        %v1933 = vrot.slane %v838, %v1932
        %v1936 = vadd.f32 %v1871, %v1929
        %v1937 = vadd.f32 %v1872, %v1933
        %v1938 = vadd.f32 %v1873, %v1929
        %v1939 = vadd.f32 %v1874, %v1933
        %v1940 = vadd.f32 %v1875, %v1929
        %v1941 = vadd.f32 %v1876, %v1933
        %v1942 = vadd.f32 %v1877, %v1929
        %v1943 = vadd.f32 %v1878, %v1933
        %v1944 = vadd.f32 %v1879, %v1929
        %v1945 = vadd.f32 %v1880, %v1933
        %v1946 = vadd.f32 %v1881, %v1929
        %v1947 = vadd.f32 %v1882, %v1933
        %v1948 = vadd.f32 %v1883, %v1929
        %v1949 = vadd.f32 %v1884, %v1933
        %v1950 = vadd.f32 %v1885, %v1929
        %v1951 = vadd.f32 %v1886, %v1933
        %v1952 = vadd.f32 %v1887, %v1929
        %v1953 = vadd.f32 %v1888, %v1933
        %v1954 = vadd.f32 %v1889, %v1929
        %v1955 = vadd.f32 %v1890, %v1933
        %v1956 = vadd.f32 %v1891, %v1929
        %v1957 = vadd.f32 %v1892, %v1933
        %v1958 = vadd.f32 %v1893, %v1929
        %v1959 = vadd.f32 %v1894, %v1933
        %v1960 = vadd.f32 %v1895, %v1929
        %v1961 = vadd.f32 %v1896, %v1933
        %v1962 = vadd.f32 %v1897, %v1929
        %v1963 = vadd.f32 %v1898, %v1933
        %v1964 = vadd.f32 %v1899, %v1929
        %v1965 = vadd.f32 %v1900, %v1933
        %v1966 = vadd.f32 %v1901, %v1929
        %v1967 = vadd.f32 %v1902, %v1933
        %v1968 = vadd.f32 %v1903, %v1929
        %v1969 = vadd.f32 %v1904, %v1933
        %v1970 = vadd.f32 %v1905, %v1929
        %v1971 = vadd.f32 %v1906, %v1933
        %v1972 = vadd.f32 %v1907, %v1929
        %v1973 = vadd.f32 %v1908, %v1933
        %v1974 = vadd.f32 %v1909, %v1929
        %v1975 = vadd.f32 %v1910, %v1933
        %v1976 = vadd.f32 %v1911, %v1929
        %v1977 = vadd.f32 %v1912, %v1933
        %v1978 = vadd.f32 %v1913, %v1929
        %v1979 = vadd.f32 %v1914, %v1933
        %v1980 = vadd.f32 %v1915, %v1929
        %v1981 = vadd.f32 %v1916, %v1933
        %v1982 = vadd.f32 %v1917, %v1929
        %v1983 = vadd.f32 %v1918, %v1933
        %v1984 = vadd.f32 %v1919, %v1929
        %v1985 = vadd.f32 %v1920, %v1933
        %v1986 = vadd.f32 %v1921, %v1929
        %v1987 = vadd.f32 %v1922, %v1933
        %v1988 = vadd.f32 %v1923, %v1929
        %v1989 = vadd.f32 %v1924, %v1933
        %1990 = vst [vmem:[#allocation3] sm:$0xff] %v1936
        %1991 = vst [vmem:[#allocation3 + $0x8] sm:$0xff] %v1937
        %1992 = vst [vmem:[#allocation3 + $0x10] sm:$0xff] %v1938
        %1993 = vst [vmem:[#allocation3 + $0x18] sm:$0xff] %v1939
        %1994 = vst [vmem:[#allocation3 + $0x20] sm:$0xff] %v1940
        %1995 = vst [vmem:[#allocation3 + $0x28] sm:$0xff] %v1941
        %1996 = vst [vmem:[#allocation3 + $0x30] sm:$0xff] %v1942
        %1997 = vst [vmem:[#allocation3 + $0x38] sm:$0xff] %v1943
        %1998 = vst [vmem:[#allocation3 + $0x40] sm:$0xff] %v1944
        %1999 = vst [vmem:[#allocation3 + $0x48] sm:$0xff] %v1945
        %2000 = vst [vmem:[#allocation3 + $0x50] sm:$0xff] %v1946
        %2001 = vst [vmem:[#allocation3 + $0x58] sm:$0xff] %v1947
        %2002 = vst [vmem:[#allocation3 + $0x60] sm:$0xff] %v1948
        %2003 = vst [vmem:[#allocation3 + $0x68] sm:$0xff] %v1949
        %2004 = vst [vmem:[#allocation3 + $0x70] sm:$0xff] %v1950
        %2005 = vst [vmem:[#allocation3 + $0x78] sm:$0xff] %v1951
        %2006 = vst [vmem:[#allocation3 + $0x80] sm:$0xff] %v1952
        %2007 = vst [vmem:[#allocation3 + $0x88] sm:$0xff] %v1953
        %2008 = vst [vmem:[#allocation3 + $0x90] sm:$0xff] %v1954
        %2009 = vst [vmem:[#allocation3 + $0x98] sm:$0xff] %v1955
        %2010 = vst [vmem:[#allocation3 + $0xa0] sm:$0xff] %v1956
        %2011 = vst [vmem:[#allocation3 + $0xa8] sm:$0xff] %v1957
        %2012 = vst [vmem:[#allocation3 + $0xb0] sm:$0xff] %v1958
        %2013 = vst [vmem:[#allocation3 + $0xb8] sm:$0xff] %v1959
        %2014 = vst [vmem:[#allocation3 + $0xc0] sm:$0xff] %v1960
        %2015 = vst [vmem:[#allocation3 + $0xc8] sm:$0xff] %v1961
        %2016 = vst [vmem:[#allocation3 + $0xd0] sm:$0xff] %v1962
        %2017 = vst [vmem:[#allocation3 + $0xd8] sm:$0xff] %v1963
        %2018 = vst [vmem:[#allocation3 + $0xe0] sm:$0xff] %v1964
        %2019 = vst [vmem:[#allocation3 + $0xe8] sm:$0xff] %v1965
        %2020 = vst [vmem:[#allocation3 + $0xf0] sm:$0xff] %v1966
        %2021 = vst [vmem:[#allocation3 + $0xf8] sm:$0xff] %v1967
        %2022 = vst [vmem:[#allocation3 + $0x100] sm:$0xff] %v1968
        %2023 = vst [vmem:[#allocation3 + $0x108] sm:$0xff] %v1969
        %2024 = vst [vmem:[#allocation3 + $0x110] sm:$0xff] %v1970
        %2025 = vst [vmem:[#allocation3 + $0x118] sm:$0xff] %v1971
        %2026 = vst [vmem:[#allocation3 + $0x120] sm:$0xff] %v1972
        %2027 = vst [vmem:[#allocation3 + $0x128] sm:$0xff] %v1973
        %2028 = vst [vmem:[#allocation3 + $0x130] sm:$0xff] %v1974
        %2029 = vst [vmem:[#allocation3 + $0x138] sm:$0xff] %v1975
        %2030 = vst [vmem:[#allocation3 + $0x140] sm:$0xff] %v1976
        %2031 = vst [vmem:[#allocation3 + $0x148] sm:$0xff] %v1977
        %2032 = vst [vmem:[#allocation3 + $0x150] sm:$0xff] %v1978
        %2033 = vst [vmem:[#allocation3 + $0x158] sm:$0xff] %v1979
        %2034 = vst [vmem:[#allocation3 + $0x160] sm:$0xff] %v1980
        %2035 = vst [vmem:[#allocation3 + $0x168] sm:$0xff] %v1981
        %2036 = vst [vmem:[#allocation3 + $0x170] sm:$0xff] %v1982
        %2037 = vst [vmem:[#allocation3 + $0x178] sm:$0xff] %v1983
        %2038 = vst [vmem:[#allocation3 + $0x180] sm:$0xff] %v1984
        %2039 = vst [vmem:[#allocation3 + $0x188] sm:$0xff] %v1985
        %2040 = vst [vmem:[#allocation3 + $0x190] sm:$0xff] %v1986
        %2041 = vst [vmem:[#allocation3 + $0x198] sm:$0xff] %v1987
        %2042 = vst [vmem:[#allocation3 + $0x1a0] sm:$0xff] %v1988
        %2043 = vst [vmem:[#allocation3 + $0x1a8] sm:$0xff] %v1989
        %v2044 = vlaneseq
        %v2045 = vshrl.u32 %v2044, 7
        %v2046 = vstv %s345
        %v2047 = vadd.s32 %v2046, %v2045
        %v2048 = vsub.s32 %v2047, 8
        %vm2049 = vcmp.ge.s32.totalorder %v2048, 0
        %v2050 = vld [vmem:[#allocation3] sm:$0xff]
        %v2051 = vld [vmem:[#allocation3 + $0x8] sm:$0xff]
        %v2052 = vsel %vm2049, 1, 0
        %vm2053 = vcmp.eq.s32.totalorder %v2052, 1
        %v2054 = vsel %vm2053, %v2050, 0.0
        %v2055 = vsel %vm2053, %v2051, 0.0
        %2056 = vst [vmem:[#allocation3] sm:$0xff] %v2054
        %2057 = vst [vmem:[#allocation3 + $0x8] sm:$0xff] %v2055
        %v2058 = vadd.s32 %v2045, 208
        %v2059 = vadd.s32 %v2046, %v2058
        %v2060 = vsub.s32 %v2059, 8
        %vm2061 = vcmp.lt.s32.totalorder %v2060, 200
        %v2062 = vld [vmem:[#allocation3 + $0x1a0] sm:$0xff]
        %v2063 = vld [vmem:[#allocation3 + $0x1a8] sm:$0xff]
        %v2064 = vsel %vm2061, 1, 0
        %vm2065 = vcmp.eq.s32.totalorder %v2064, 1
        %v2066 = vsel %vm2065, %v2062, 0.0
        %v2067 = vsel %vm2065, %v2063, 0.0
        %2068 = vst [vmem:[#allocation3 + $0x1a0] sm:$0xff] %v2066
        %2069 = vst [vmem:[#allocation3 + $0x1a8] sm:$0xff] %v2067
        %v2070 = vld [vmem:[%s4] sm:$0x77]
        %v2071 = vld [vmem:[#allocation3] sm:$0xc0]
        %v2072 = vld [vmem:[#allocation3 + $0x8] sm:$0xc0]
        %v2073 = vld [vmem:[#allocation3 + $0x10] sm:$0xff]
        %v2074 = vld [vmem:[#allocation3 + $0x18] sm:$0xff]
        %v2075 = vld [vmem:[#allocation3 + $0x20] sm:$0xff]
        %v2076 = vld [vmem:[#allocation3 + $0x28] sm:$0xff]
        %v2077 = vld [vmem:[#allocation3 + $0x30] sm:$0xff]
        %v2078 = vld [vmem:[#allocation3 + $0x38] sm:$0xff]
        %v2079 = vld [vmem:[#allocation3 + $0x40] sm:$0xff]
        %v2080 = vld [vmem:[#allocation3 + $0x48] sm:$0xff]
        %v2081 = vld [vmem:[#allocation3 + $0x50] sm:$0xff]
        %v2082 = vld [vmem:[#allocation3 + $0x58] sm:$0xff]
        %v2083 = vld [vmem:[#allocation3 + $0x60] sm:$0xff]
        %v2084 = vld [vmem:[#allocation3 + $0x68] sm:$0xff]
        %v2085 = vld [vmem:[#allocation3 + $0x70] sm:$0xff]
        %v2086 = vld [vmem:[#allocation3 + $0x78] sm:$0xff]
        %v2087 = vld [vmem:[#allocation3 + $0x80] sm:$0xff]
        %v2088 = vld [vmem:[#allocation3 + $0x88] sm:$0xff]
        %v2089 = vld [vmem:[#allocation3 + $0x90] sm:$0xff]
        %v2090 = vld [vmem:[#allocation3 + $0x98] sm:$0xff]
        %v2091 = vld [vmem:[#allocation3 + $0xa0] sm:$0xff]
        %v2092 = vld [vmem:[#allocation3 + $0xa8] sm:$0xff]
        %v2093 = vld [vmem:[#allocation3 + $0xb0] sm:$0xff]
        %v2094 = vld [vmem:[#allocation3 + $0xb8] sm:$0xff]
        %v2095 = vld [vmem:[#allocation3 + $0xc0] sm:$0xff]
        %v2096 = vld [vmem:[#allocation3 + $0xc8] sm:$0xff]
        %v2097 = vld [vmem:[#allocation3 + $0xd0] sm:$0xff]
        %v2098 = vld [vmem:[#allocation3 + $0xd8] sm:$0xff]
        %v2099 = vld [vmem:[#allocation3 + $0xe0] sm:$0xff]
        %v2100 = vld [vmem:[#allocation3 + $0xe8] sm:$0xff]
        %v2101 = vld [vmem:[#allocation3 + $0xf0] sm:$0xff]
        %v2102 = vld [vmem:[#allocation3 + $0xf8] sm:$0xff]
        %v2103 = vld [vmem:[#allocation3 + $0x100] sm:$0xff]
        %v2104 = vld [vmem:[#allocation3 + $0x108] sm:$0xff]
        %v2105 = vld [vmem:[#allocation3 + $0x110] sm:$0xff]
        %v2106 = vld [vmem:[#allocation3 + $0x118] sm:$0xff]
        %v2107 = vld [vmem:[#allocation3 + $0x120] sm:$0xff]
        %v2108 = vld [vmem:[#allocation3 + $0x128] sm:$0xff]
        %v2109 = vld [vmem:[#allocation3 + $0x130] sm:$0xff]
        %v2110 = vld [vmem:[#allocation3 + $0x138] sm:$0xff]
        %v2111 = vld [vmem:[#allocation3 + $0x140] sm:$0xff]
        %v2112 = vld [vmem:[#allocation3 + $0x148] sm:$0xff]
        %v2113 = vld [vmem:[#allocation3 + $0x150] sm:$0xff]
        %v2114 = vld [vmem:[#allocation3 + $0x158] sm:$0xff]
        %v2115 = vld [vmem:[#allocation3 + $0x160] sm:$0xff]
        %v2116 = vld [vmem:[#allocation3 + $0x168] sm:$0xff]
        %v2117 = vld [vmem:[#allocation3 + $0x170] sm:$0xff]
        %v2118 = vld [vmem:[#allocation3 + $0x178] sm:$0xff]
        %v2119 = vld [vmem:[#allocation3 + $0x180] sm:$0xff]
        %v2120 = vld [vmem:[#allocation3 + $0x188] sm:$0xff]
        %v2121 = vld [vmem:[#allocation3 + $0x190] sm:$0x3f]
        %v2122 = vld [vmem:[#allocation3 + $0x198] sm:$0x3f]
        %v2124 = vlaneseq
        %v2125 = vshrl.u32 %v2124, 7
        %v2126 = vsub.s32 0, %v2125
        %v2127 = vrot.slane %v2070, %v2126
        %v2128 = vlaneseq
        %v2129 = vshrl.u32 %v2128, 7
        %v2130 = vsub.s32 4, %v2129
        %v2131 = vrot.slane %v2070, %v2130
        %v2134 = vlaneseq
        %v2135 = vshrl.u32 %v2134, 7
        %v2136 = vsub.s32 0, %v2135
        %v2137 = vrot.slane %v2127, %v2136
        %v2138 = vlaneseq
        %v2139 = vshrl.u32 %v2138, 7
        %v2140 = vsub.s32 0, %v2139
        %v2141 = vrot.slane %v2131, %v2140
        %v2142 = vmul.f32 %v2071, %v2137
        %v2143 = vmul.f32 %v2072, %v2141
        %v2144 = vmul.f32 %v2073, %v2137
        %v2145 = vmul.f32 %v2074, %v2141
        %v2146 = vmul.f32 %v2075, %v2137
        %v2147 = vmul.f32 %v2076, %v2141
        %v2148 = vmul.f32 %v2077, %v2137
        %v2149 = vmul.f32 %v2078, %v2141
        %v2150 = vmul.f32 %v2079, %v2137
        %v2151 = vmul.f32 %v2080, %v2141
        %v2152 = vmul.f32 %v2081, %v2137
        %v2153 = vmul.f32 %v2082, %v2141
        %v2154 = vmul.f32 %v2083, %v2137
        %v2155 = vmul.f32 %v2084, %v2141
        %v2156 = vmul.f32 %v2085, %v2137
        %v2157 = vmul.f32 %v2086, %v2141
        %v2158 = vmul.f32 %v2087, %v2137
        %v2159 = vmul.f32 %v2088, %v2141
        %v2160 = vmul.f32 %v2089, %v2137
        %v2161 = vmul.f32 %v2090, %v2141
        %v2162 = vmul.f32 %v2091, %v2137
        %v2163 = vmul.f32 %v2092, %v2141
        %v2164 = vmul.f32 %v2093, %v2137
        %v2165 = vmul.f32 %v2094, %v2141
        %v2166 = vmul.f32 %v2095, %v2137
        %v2167 = vmul.f32 %v2096, %v2141
        %v2168 = vmul.f32 %v2097, %v2137
        %v2169 = vmul.f32 %v2098, %v2141
        %v2170 = vmul.f32 %v2099, %v2137
        %v2171 = vmul.f32 %v2100, %v2141
        %v2172 = vmul.f32 %v2101, %v2137
        %v2173 = vmul.f32 %v2102, %v2141
        %v2174 = vmul.f32 %v2103, %v2137
        %v2175 = vmul.f32 %v2104, %v2141
        %v2176 = vmul.f32 %v2105, %v2137
        %v2177 = vmul.f32 %v2106, %v2141
        %v2178 = vmul.f32 %v2107, %v2137
        %v2179 = vmul.f32 %v2108, %v2141
        %v2180 = vmul.f32 %v2109, %v2137
        %v2181 = vmul.f32 %v2110, %v2141
        %v2182 = vmul.f32 %v2111, %v2137
        %v2183 = vmul.f32 %v2112, %v2141
        %v2184 = vmul.f32 %v2113, %v2137
        %v2185 = vmul.f32 %v2114, %v2141
        %v2186 = vmul.f32 %v2115, %v2137
        %v2187 = vmul.f32 %v2116, %v2141
        %v2188 = vmul.f32 %v2117, %v2137
        %v2189 = vmul.f32 %v2118, %v2141
        %v2190 = vmul.f32 %v2119, %v2137
        %v2191 = vmul.f32 %v2120, %v2141
        %v2192 = vmul.f32 %v2121, %v2137
        %v2193 = vmul.f32 %v2122, %v2141
        %v2194 = vld [vmem:[#allocation3 + $0x190] sm:$0xff]
        %v2195 = vld [vmem:[#allocation3 + $0x198] sm:$0xff]
        %v2196 = vlaneseq
        %v2197 = vshrl.u32 %v2196, 7
        %v2198 = vsub.s32 1, %v2197
        %v2199 = vrot.slane %v2070, %v2198
        %v2200 = vlaneseq
        %v2201 = vshrl.u32 %v2200, 7
        %v2202 = vsub.s32 5, %v2201
        %v2203 = vrot.slane %v2070, %v2202
        %v2206 = vlaneseq
        %v2207 = vshrl.u32 %v2206, 7
        %v2208 = vsub.s32 1, %v2207
        %v2209 = vrot.slane %v2199, %v2208
        %v2210 = vlaneseq
        %v2211 = vshrl.u32 %v2210, 7
        %v2212 = vsub.s32 1, %v2211
        %v2213 = vrot.slane %v2203, %v2212
        %v2214 = vmul.f32 %v2073, %v2209
        %v2215 = vmul.f32 %v2074, %v2213
        %v2216 = vmul.f32 %v2075, %v2209
        %v2217 = vmul.f32 %v2076, %v2213
        %v2218 = vmul.f32 %v2077, %v2209
        %v2219 = vmul.f32 %v2078, %v2213
        %v2220 = vmul.f32 %v2079, %v2209
        %v2221 = vmul.f32 %v2080, %v2213
        %v2222 = vmul.f32 %v2081, %v2209
        %v2223 = vmul.f32 %v2082, %v2213
        %v2224 = vmul.f32 %v2083, %v2209
        %v2225 = vmul.f32 %v2084, %v2213
        %v2226 = vmul.f32 %v2085, %v2209
        %v2227 = vmul.f32 %v2086, %v2213
        %v2228 = vmul.f32 %v2087, %v2209
        %v2229 = vmul.f32 %v2088, %v2213
        %v2230 = vmul.f32 %v2089, %v2209
        %v2231 = vmul.f32 %v2090, %v2213
        %v2232 = vmul.f32 %v2091, %v2209
        %v2233 = vmul.f32 %v2092, %v2213
        %v2234 = vmul.f32 %v2093, %v2209
        %v2235 = vmul.f32 %v2094, %v2213
        %v2236 = vmul.f32 %v2095, %v2209
        %v2237 = vmul.f32 %v2096, %v2213
        %v2238 = vmul.f32 %v2097, %v2209
        %v2239 = vmul.f32 %v2098, %v2213
        %v2240 = vmul.f32 %v2099, %v2209
        %v2241 = vmul.f32 %v2100, %v2213
        %v2242 = vmul.f32 %v2101, %v2209
        %v2243 = vmul.f32 %v2102, %v2213
        %v2244 = vmul.f32 %v2103, %v2209
        %v2245 = vmul.f32 %v2104, %v2213
        %v2246 = vmul.f32 %v2105, %v2209
        %v2247 = vmul.f32 %v2106, %v2213
        %v2248 = vmul.f32 %v2107, %v2209
        %v2249 = vmul.f32 %v2108, %v2213
        %v2250 = vmul.f32 %v2109, %v2209
        %v2251 = vmul.f32 %v2110, %v2213
        %v2252 = vmul.f32 %v2111, %v2209
        %v2253 = vmul.f32 %v2112, %v2213
        %v2254 = vmul.f32 %v2113, %v2209
        %v2255 = vmul.f32 %v2114, %v2213
        %v2256 = vmul.f32 %v2115, %v2209
        %v2257 = vmul.f32 %v2116, %v2213
        %v2258 = vmul.f32 %v2117, %v2209
        %v2259 = vmul.f32 %v2118, %v2213
        %v2260 = vmul.f32 %v2119, %v2209
        %v2261 = vmul.f32 %v2120, %v2213
        %v2262 = vmul.f32 %v2194, %v2209
        %v2263 = vmul.f32 %v2195, %v2213
        %vm2314 = vcmask 1045504
        %v2315 = vrot.slane %v2214, 2
        %v2316 = vrot.slane %v2215, 2
        %v2317 = vrot.slane %v2216, 2
        %v2318 = vsel %vm2314, %v2315, %v2317
        %v2319 = vrot.slane %v2217, 2
        %v2320 = vsel %vm2314, %v2316, %v2319
        %v2321 = vrot.slane %v2218, 2
        %v2322 = vsel %vm2314, %v2317, %v2321
        %v2323 = vrot.slane %v2219, 2
        %v2324 = vsel %vm2314, %v2319, %v2323
        %v2325 = vrot.slane %v2220, 2
        %v2326 = vsel %vm2314, %v2321, %v2325
        %v2327 = vrot.slane %v2221, 2
        %v2328 = vsel %vm2314, %v2323, %v2327
        %v2329 = vrot.slane %v2222, 2
        %v2330 = vsel %vm2314, %v2325, %v2329
        %v2331 = vrot.slane %v2223, 2
        %v2332 = vsel %vm2314, %v2327, %v2331
        %v2333 = vrot.slane %v2224, 2
        %v2334 = vsel %vm2314, %v2329, %v2333
        %v2335 = vrot.slane %v2225, 2
        %v2336 = vsel %vm2314, %v2331, %v2335
        %v2337 = vrot.slane %v2226, 2
        %v2338 = vsel %vm2314, %v2333, %v2337
        %v2339 = vrot.slane %v2227, 2
        %v2340 = vsel %vm2314, %v2335, %v2339
        %v2341 = vrot.slane %v2228, 2
        %v2342 = vsel %vm2314, %v2337, %v2341
        %v2343 = vrot.slane %v2229, 2
        %v2344 = vsel %vm2314, %v2339, %v2343
        %v2345 = vrot.slane %v2230, 2
        %v2346 = vsel %vm2314, %v2341, %v2345
        %v2347 = vrot.slane %v2231, 2
        %v2348 = vsel %vm2314, %v2343, %v2347
        %v2349 = vrot.slane %v2232, 2
        %v2350 = vsel %vm2314, %v2345, %v2349
        %v2351 = vrot.slane %v2233, 2
        %v2352 = vsel %vm2314, %v2347, %v2351
        %v2353 = vrot.slane %v2234, 2
        %v2354 = vsel %vm2314, %v2349, %v2353
        %v2355 = vrot.slane %v2235, 2
        %v2356 = vsel %vm2314, %v2351, %v2355
        %v2357 = vrot.slane %v2236, 2
        %v2358 = vsel %vm2314, %v2353, %v2357
        %v2359 = vrot.slane %v2237, 2
        %v2360 = vsel %vm2314, %v2355, %v2359
        %v2361 = vrot.slane %v2238, 2
        %v2362 = vsel %vm2314, %v2357, %v2361
        %v2363 = vrot.slane %v2239, 2
        %v2364 = vsel %vm2314, %v2359, %v2363
        %v2365 = vrot.slane %v2240, 2
        %v2366 = vsel %vm2314, %v2361, %v2365
        %v2367 = vrot.slane %v2241, 2
        %v2368 = vsel %vm2314, %v2363, %v2367
        %v2369 = vrot.slane %v2242, 2
        %v2370 = vsel %vm2314, %v2365, %v2369
        %v2371 = vrot.slane %v2243, 2
        %v2372 = vsel %vm2314, %v2367, %v2371
        %v2373 = vrot.slane %v2244, 2
        %v2374 = vsel %vm2314, %v2369, %v2373
        %v2375 = vrot.slane %v2245, 2
        %v2376 = vsel %vm2314, %v2371, %v2375
        %v2377 = vrot.slane %v2246, 2
        %v2378 = vsel %vm2314, %v2373, %v2377
        %v2379 = vrot.slane %v2247, 2
        %v2380 = vsel %vm2314, %v2375, %v2379
        %v2381 = vrot.slane %v2248, 2
        %v2382 = vsel %vm2314, %v2377, %v2381
        %v2383 = vrot.slane %v2249, 2
        %v2384 = vsel %vm2314, %v2379, %v2383
        %v2385 = vrot.slane %v2250, 2
        %v2386 = vsel %vm2314, %v2381, %v2385
        %v2387 = vrot.slane %v2251, 2
        %v2388 = vsel %vm2314, %v2383, %v2387
        %v2389 = vrot.slane %v2252, 2
        %v2390 = vsel %vm2314, %v2385, %v2389
        %v2391 = vrot.slane %v2253, 2
        %v2392 = vsel %vm2314, %v2387, %v2391
        %v2393 = vrot.slane %v2254, 2
        %v2394 = vsel %vm2314, %v2389, %v2393
        %v2395 = vrot.slane %v2255, 2
        %v2396 = vsel %vm2314, %v2391, %v2395
        %v2397 = vrot.slane %v2256, 2
        %v2398 = vsel %vm2314, %v2393, %v2397
        %v2399 = vrot.slane %v2257, 2
        %v2400 = vsel %vm2314, %v2395, %v2399
        %v2401 = vrot.slane %v2258, 2
        %v2402 = vsel %vm2314, %v2397, %v2401
        %v2403 = vrot.slane %v2259, 2
        %v2404 = vsel %vm2314, %v2399, %v2403
        %v2405 = vrot.slane %v2260, 2
        %v2406 = vsel %vm2314, %v2401, %v2405
        %v2407 = vrot.slane %v2261, 2
        %v2408 = vsel %vm2314, %v2403, %v2407
        %v2409 = vrot.slane %v2262, 2
        %v2410 = vsel %vm2314, %v2405, %v2409
        %v2411 = vrot.slane %v2263, 2
        %v2412 = vsel %vm2314, %v2407, %v2411
        %v2465 = vadd.f32 %v2142, %v2315
        %v2466 = vadd.f32 %v2143, %v2316
        %v2467 = vadd.f32 %v2144, %v2318
        %v2468 = vadd.f32 %v2145, %v2320
        %v2469 = vadd.f32 %v2146, %v2322
        %v2470 = vadd.f32 %v2147, %v2324
        %v2471 = vadd.f32 %v2148, %v2326
        %v2472 = vadd.f32 %v2149, %v2328
        %v2473 = vadd.f32 %v2150, %v2330
        %v2474 = vadd.f32 %v2151, %v2332
        %v2475 = vadd.f32 %v2152, %v2334
        %v2476 = vadd.f32 %v2153, %v2336
        %v2477 = vadd.f32 %v2154, %v2338
        %v2478 = vadd.f32 %v2155, %v2340
        %v2479 = vadd.f32 %v2156, %v2342
        %v2480 = vadd.f32 %v2157, %v2344
        %v2481 = vadd.f32 %v2158, %v2346
        %v2482 = vadd.f32 %v2159, %v2348
        %v2483 = vadd.f32 %v2160, %v2350
        %v2484 = vadd.f32 %v2161, %v2352
        %v2485 = vadd.f32 %v2162, %v2354
        %v2486 = vadd.f32 %v2163, %v2356
        %v2487 = vadd.f32 %v2164, %v2358
        %v2488 = vadd.f32 %v2165, %v2360
        %v2489 = vadd.f32 %v2166, %v2362
        %v2490 = vadd.f32 %v2167, %v2364
        %v2491 = vadd.f32 %v2168, %v2366
        %v2492 = vadd.f32 %v2169, %v2368
        %v2493 = vadd.f32 %v2170, %v2370
        %v2494 = vadd.f32 %v2171, %v2372
        %v2495 = vadd.f32 %v2172, %v2374
        %v2496 = vadd.f32 %v2173, %v2376
        %v2497 = vadd.f32 %v2174, %v2378
        %v2498 = vadd.f32 %v2175, %v2380
        %v2499 = vadd.f32 %v2176, %v2382
        %v2500 = vadd.f32 %v2177, %v2384
        %v2501 = vadd.f32 %v2178, %v2386
        %v2502 = vadd.f32 %v2179, %v2388
        %v2503 = vadd.f32 %v2180, %v2390
        %v2504 = vadd.f32 %v2181, %v2392
        %v2505 = vadd.f32 %v2182, %v2394
        %v2506 = vadd.f32 %v2183, %v2396
        %v2507 = vadd.f32 %v2184, %v2398
        %v2508 = vadd.f32 %v2185, %v2400
        %v2509 = vadd.f32 %v2186, %v2402
        %v2510 = vadd.f32 %v2187, %v2404
        %v2511 = vadd.f32 %v2188, %v2406
        %v2512 = vadd.f32 %v2189, %v2408
        %v2513 = vadd.f32 %v2190, %v2410
        %v2514 = vadd.f32 %v2191, %v2412
        %v2515 = vadd.f32 %v2192, %v2409
        %v2516 = vadd.f32 %v2193, %v2411
        %v2517 = vld [vmem:[#allocation3 + $0x10] sm:$0xfc]
        %v2518 = vld [vmem:[#allocation3 + $0x18] sm:$0xfc]
        %v2519 = vld [vmem:[#allocation3 + $0x20] sm:$0xff]
        %v2520 = vld [vmem:[#allocation3 + $0x28] sm:$0xff]
        %v2521 = vld [vmem:[#allocation3 + $0x30] sm:$0xff]
        %v2522 = vld [vmem:[#allocation3 + $0x38] sm:$0xff]
        %v2523 = vld [vmem:[#allocation3 + $0x40] sm:$0xff]
        %v2524 = vld [vmem:[#allocation3 + $0x48] sm:$0xff]
        %v2525 = vld [vmem:[#allocation3 + $0x50] sm:$0xff]
        %v2526 = vld [vmem:[#allocation3 + $0x58] sm:$0xff]
        %v2527 = vld [vmem:[#allocation3 + $0x60] sm:$0xff]
        %v2528 = vld [vmem:[#allocation3 + $0x68] sm:$0xff]
        %v2529 = vld [vmem:[#allocation3 + $0x70] sm:$0xff]
        %v2530 = vld [vmem:[#allocation3 + $0x78] sm:$0xff]
        %v2531 = vld [vmem:[#allocation3 + $0x80] sm:$0xff]
        %v2532 = vld [vmem:[#allocation3 + $0x88] sm:$0xff]
        %v2533 = vld [vmem:[#allocation3 + $0x90] sm:$0xff]
        %v2534 = vld [vmem:[#allocation3 + $0x98] sm:$0xff]
        %v2535 = vld [vmem:[#allocation3 + $0xa0] sm:$0xff]
        %v2536 = vld [vmem:[#allocation3 + $0xa8] sm:$0xff]
        %v2537 = vld [vmem:[#allocation3 + $0xb0] sm:$0xff]
        %v2538 = vld [vmem:[#allocation3 + $0xb8] sm:$0xff]
        %v2539 = vld [vmem:[#allocation3 + $0xc0] sm:$0xff]
        %v2540 = vld [vmem:[#allocation3 + $0xc8] sm:$0xff]
        %v2541 = vld [vmem:[#allocation3 + $0xd0] sm:$0xff]
        %v2542 = vld [vmem:[#allocation3 + $0xd8] sm:$0xff]
        %v2543 = vld [vmem:[#allocation3 + $0xe0] sm:$0xff]
        %v2544 = vld [vmem:[#allocation3 + $0xe8] sm:$0xff]
        %v2545 = vld [vmem:[#allocation3 + $0xf0] sm:$0xff]
        %v2546 = vld [vmem:[#allocation3 + $0xf8] sm:$0xff]
        %v2547 = vld [vmem:[#allocation3 + $0x100] sm:$0xff]
        %v2548 = vld [vmem:[#allocation3 + $0x108] sm:$0xff]
        %v2549 = vld [vmem:[#allocation3 + $0x110] sm:$0xff]
        %v2550 = vld [vmem:[#allocation3 + $0x118] sm:$0xff]
        %v2551 = vld [vmem:[#allocation3 + $0x120] sm:$0xff]
        %v2552 = vld [vmem:[#allocation3 + $0x128] sm:$0xff]
        %v2553 = vld [vmem:[#allocation3 + $0x130] sm:$0xff]
        %v2554 = vld [vmem:[#allocation3 + $0x138] sm:$0xff]
        %v2555 = vld [vmem:[#allocation3 + $0x140] sm:$0xff]
        %v2556 = vld [vmem:[#allocation3 + $0x148] sm:$0xff]
        %v2557 = vld [vmem:[#allocation3 + $0x150] sm:$0xff]
        %v2558 = vld [vmem:[#allocation3 + $0x158] sm:$0xff]
        %v2559 = vld [vmem:[#allocation3 + $0x160] sm:$0xff]
        %v2560 = vld [vmem:[#allocation3 + $0x168] sm:$0xff]
        %v2561 = vld [vmem:[#allocation3 + $0x170] sm:$0xff]
        %v2562 = vld [vmem:[#allocation3 + $0x178] sm:$0xff]
        %v2563 = vld [vmem:[#allocation3 + $0x180] sm:$0xff]
        %v2564 = vld [vmem:[#allocation3 + $0x188] sm:$0xff]
        %v2565 = vld [vmem:[#allocation3 + $0x190] sm:$0xff]
        %v2566 = vld [vmem:[#allocation3 + $0x198] sm:$0xff]
        %v2567 = vld [vmem:[#allocation3 + $0x1a0] sm:$0x3]
        %v2568 = vld [vmem:[#allocation3 + $0x1a8] sm:$0x3]
        %v2569 = vlaneseq
        %v2570 = vshrl.u32 %v2569, 7
        %v2571 = vsub.s32 2, %v2570
        %v2572 = vrot.slane %v2070, %v2571
        %v2573 = vlaneseq
        %v2574 = vshrl.u32 %v2573, 7
        %v2575 = vsub.s32 6, %v2574
        %v2576 = vrot.slane %v2070, %v2575
        %v2579 = vlaneseq
        %v2580 = vshrl.u32 %v2579, 7
        %v2581 = vsub.s32 2, %v2580
        %v2582 = vrot.slane %v2572, %v2581
        %v2583 = vlaneseq
        %v2584 = vshrl.u32 %v2583, 7
        %v2585 = vsub.s32 2, %v2584
        %v2586 = vrot.slane %v2576, %v2585
        %v2587 = vmul.f32 %v2517, %v2582
        %v2588 = vmul.f32 %v2518, %v2586
        %v2589 = vmul.f32 %v2519, %v2582
        %v2590 = vmul.f32 %v2520, %v2586
        %v2591 = vmul.f32 %v2521, %v2582
        %v2592 = vmul.f32 %v2522, %v2586
        %v2593 = vmul.f32 %v2523, %v2582
        %v2594 = vmul.f32 %v2524, %v2586
        %v2595 = vmul.f32 %v2525, %v2582
        %v2596 = vmul.f32 %v2526, %v2586
        %v2597 = vmul.f32 %v2527, %v2582
        %v2598 = vmul.f32 %v2528, %v2586
        %v2599 = vmul.f32 %v2529, %v2582
        %v2600 = vmul.f32 %v2530, %v2586
        %v2601 = vmul.f32 %v2531, %v2582
        %v2602 = vmul.f32 %v2532, %v2586
        %v2603 = vmul.f32 %v2533, %v2582
        %v2604 = vmul.f32 %v2534, %v2586
        %v2605 = vmul.f32 %v2535, %v2582
        %v2606 = vmul.f32 %v2536, %v2586
        %v2607 = vmul.f32 %v2537, %v2582
        %v2608 = vmul.f32 %v2538, %v2586
        %v2609 = vmul.f32 %v2539, %v2582
        %v2610 = vmul.f32 %v2540, %v2586
        %v2611 = vmul.f32 %v2541, %v2582
        %v2612 = vmul.f32 %v2542, %v2586
        %v2613 = vmul.f32 %v2543, %v2582
        %v2614 = vmul.f32 %v2544, %v2586
        %v2615 = vmul.f32 %v2545, %v2582
        %v2616 = vmul.f32 %v2546, %v2586
        %v2617 = vmul.f32 %v2547, %v2582
        %v2618 = vmul.f32 %v2548, %v2586
        %v2619 = vmul.f32 %v2549, %v2582
        %v2620 = vmul.f32 %v2550, %v2586
        %v2621 = vmul.f32 %v2551, %v2582
        %v2622 = vmul.f32 %v2552, %v2586
        %v2623 = vmul.f32 %v2553, %v2582
        %v2624 = vmul.f32 %v2554, %v2586
        %v2625 = vmul.f32 %v2555, %v2582
        %v2626 = vmul.f32 %v2556, %v2586
        %v2627 = vmul.f32 %v2557, %v2582
        %v2628 = vmul.f32 %v2558, %v2586
        %v2629 = vmul.f32 %v2559, %v2582
        %v2630 = vmul.f32 %v2560, %v2586
        %v2631 = vmul.f32 %v2561, %v2582
        %v2632 = vmul.f32 %v2562, %v2586
        %v2633 = vmul.f32 %v2563, %v2582
        %v2634 = vmul.f32 %v2564, %v2586
        %v2635 = vmul.f32 %v2565, %v2582
        %v2636 = vmul.f32 %v2566, %v2586
        %v2637 = vmul.f32 %v2567, %v2582
        %v2638 = vmul.f32 %v2568, %v2586
        %vm2691 = vcmask 1043456
        %v2692 = vrot.slane %v2587, 4
        %v2693 = vrot.slane %v2588, 4
        %v2694 = vrot.slane %v2589, 4
        %v2695 = vsel %vm2691, %v2692, %v2694
        %v2696 = vrot.slane %v2590, 4
        %v2697 = vsel %vm2691, %v2693, %v2696
        %v2698 = vrot.slane %v2591, 4
        %v2699 = vsel %vm2691, %v2694, %v2698
        %v2700 = vrot.slane %v2592, 4
        %v2701 = vsel %vm2691, %v2696, %v2700
        %v2702 = vrot.slane %v2593, 4
        %v2703 = vsel %vm2691, %v2698, %v2702
        %v2704 = vrot.slane %v2594, 4
        %v2705 = vsel %vm2691, %v2700, %v2704
        %v2706 = vrot.slane %v2595, 4
        %v2707 = vsel %vm2691, %v2702, %v2706
        %v2708 = vrot.slane %v2596, 4
        %v2709 = vsel %vm2691, %v2704, %v2708
        %v2710 = vrot.slane %v2597, 4
        %v2711 = vsel %vm2691, %v2706, %v2710
        %v2712 = vrot.slane %v2598, 4
        %v2713 = vsel %vm2691, %v2708, %v2712
        %v2714 = vrot.slane %v2599, 4
        %v2715 = vsel %vm2691, %v2710, %v2714
        %v2716 = vrot.slane %v2600, 4
        %v2717 = vsel %vm2691, %v2712, %v2716
        %v2718 = vrot.slane %v2601, 4
        %v2719 = vsel %vm2691, %v2714, %v2718
        %v2720 = vrot.slane %v2602, 4
        %v2721 = vsel %vm2691, %v2716, %v2720
        %v2722 = vrot.slane %v2603, 4
        %v2723 = vsel %vm2691, %v2718, %v2722
        %v2724 = vrot.slane %v2604, 4
        %v2725 = vsel %vm2691, %v2720, %v2724
        %v2726 = vrot.slane %v2605, 4
        %v2727 = vsel %vm2691, %v2722, %v2726
        %v2728 = vrot.slane %v2606, 4
        %v2729 = vsel %vm2691, %v2724, %v2728
        %v2730 = vrot.slane %v2607, 4
        %v2731 = vsel %vm2691, %v2726, %v2730
        %v2732 = vrot.slane %v2608, 4
        %v2733 = vsel %vm2691, %v2728, %v2732
        %v2734 = vrot.slane %v2609, 4
        %v2735 = vsel %vm2691, %v2730, %v2734
        %v2736 = vrot.slane %v2610, 4
        %v2737 = vsel %vm2691, %v2732, %v2736
        %v2738 = vrot.slane %v2611, 4
        %v2739 = vsel %vm2691, %v2734, %v2738
        %v2740 = vrot.slane %v2612, 4
        %v2741 = vsel %vm2691, %v2736, %v2740
        %v2742 = vrot.slane %v2613, 4
        %v2743 = vsel %vm2691, %v2738, %v2742
        %v2744 = vrot.slane %v2614, 4
        %v2745 = vsel %vm2691, %v2740, %v2744
        %v2746 = vrot.slane %v2615, 4
        %v2747 = vsel %vm2691, %v2742, %v2746
        %v2748 = vrot.slane %v2616, 4
        %v2749 = vsel %vm2691, %v2744, %v2748
        %v2750 = vrot.slane %v2617, 4
        %v2751 = vsel %vm2691, %v2746, %v2750
        %v2752 = vrot.slane %v2618, 4
        %v2753 = vsel %vm2691, %v2748, %v2752
        %v2754 = vrot.slane %v2619, 4
        %v2755 = vsel %vm2691, %v2750, %v2754
        %v2756 = vrot.slane %v2620, 4
        %v2757 = vsel %vm2691, %v2752, %v2756
        %v2758 = vrot.slane %v2621, 4
        %v2759 = vsel %vm2691, %v2754, %v2758
        %v2760 = vrot.slane %v2622, 4
        %v2761 = vsel %vm2691, %v2756, %v2760
        %v2762 = vrot.slane %v2623, 4
        %v2763 = vsel %vm2691, %v2758, %v2762
        %v2764 = vrot.slane %v2624, 4
        %v2765 = vsel %vm2691, %v2760, %v2764
        %v2766 = vrot.slane %v2625, 4
        %v2767 = vsel %vm2691, %v2762, %v2766
        %v2768 = vrot.slane %v2626, 4
        %v2769 = vsel %vm2691, %v2764, %v2768
        %v2770 = vrot.slane %v2627, 4
        %v2771 = vsel %vm2691, %v2766, %v2770
        %v2772 = vrot.slane %v2628, 4
        %v2773 = vsel %vm2691, %v2768, %v2772
        %v2774 = vrot.slane %v2629, 4
        %v2775 = vsel %vm2691, %v2770, %v2774
        %v2776 = vrot.slane %v2630, 4
        %v2777 = vsel %vm2691, %v2772, %v2776
        %v2778 = vrot.slane %v2631, 4
        %v2779 = vsel %vm2691, %v2774, %v2778
        %v2780 = vrot.slane %v2632, 4
        %v2781 = vsel %vm2691, %v2776, %v2780
        %v2782 = vrot.slane %v2633, 4
        %v2783 = vsel %vm2691, %v2778, %v2782
        %v2784 = vrot.slane %v2634, 4
        %v2785 = vsel %vm2691, %v2780, %v2784
        %v2786 = vrot.slane %v2635, 4
        %v2787 = vsel %vm2691, %v2782, %v2786
        %v2788 = vrot.slane %v2636, 4
        %v2789 = vsel %vm2691, %v2784, %v2788
        %v2790 = vrot.slane %v2637, 4
        %v2791 = vsel %vm2691, %v2786, %v2790
        %v2792 = vrot.slane %v2638, 4
        %v2793 = vsel %vm2691, %v2788, %v2792
        %v2846 = vadd.f32 %v2465, %v2692
        %v2847 = vadd.f32 %v2466, %v2693
        %v2848 = vadd.f32 %v2467, %v2695
        %v2849 = vadd.f32 %v2468, %v2697
        %v2850 = vadd.f32 %v2469, %v2699
        %v2851 = vadd.f32 %v2470, %v2701
        %v2852 = vadd.f32 %v2471, %v2703
        %v2853 = vadd.f32 %v2472, %v2705
        %v2854 = vadd.f32 %v2473, %v2707
        %v2855 = vadd.f32 %v2474, %v2709
        %v2856 = vadd.f32 %v2475, %v2711
        %v2857 = vadd.f32 %v2476, %v2713
        %v2858 = vadd.f32 %v2477, %v2715
        %v2859 = vadd.f32 %v2478, %v2717
        %v2860 = vadd.f32 %v2479, %v2719
        %v2861 = vadd.f32 %v2480, %v2721
        %v2862 = vadd.f32 %v2481, %v2723
        %v2863 = vadd.f32 %v2482, %v2725
        %v2864 = vadd.f32 %v2483, %v2727
        %v2865 = vadd.f32 %v2484, %v2729
        %v2866 = vadd.f32 %v2485, %v2731
        %v2867 = vadd.f32 %v2486, %v2733
        %v2868 = vadd.f32 %v2487, %v2735
        %v2869 = vadd.f32 %v2488, %v2737
        %v2870 = vadd.f32 %v2489, %v2739
        %v2871 = vadd.f32 %v2490, %v2741
        %v2872 = vadd.f32 %v2491, %v2743
        %v2873 = vadd.f32 %v2492, %v2745
        %v2874 = vadd.f32 %v2493, %v2747
        %v2875 = vadd.f32 %v2494, %v2749
        %v2876 = vadd.f32 %v2495, %v2751
        %v2877 = vadd.f32 %v2496, %v2753
        %v2878 = vadd.f32 %v2497, %v2755
        %v2879 = vadd.f32 %v2498, %v2757
        %v2880 = vadd.f32 %v2499, %v2759
        %v2881 = vadd.f32 %v2500, %v2761
        %v2882 = vadd.f32 %v2501, %v2763
        %v2883 = vadd.f32 %v2502, %v2765
        %v2884 = vadd.f32 %v2503, %v2767
        %v2885 = vadd.f32 %v2504, %v2769
        %v2886 = vadd.f32 %v2505, %v2771
        %v2887 = vadd.f32 %v2506, %v2773
        %v2888 = vadd.f32 %v2507, %v2775
        %v2889 = vadd.f32 %v2508, %v2777
        %v2890 = vadd.f32 %v2509, %v2779
        %v2891 = vadd.f32 %v2510, %v2781
        %v2892 = vadd.f32 %v2511, %v2783
        %v2893 = vadd.f32 %v2512, %v2785
        %v2894 = vadd.f32 %v2513, %v2787
        %v2895 = vadd.f32 %v2514, %v2789
        %v2896 = vadd.f32 %v2515, %v2791
        %v2897 = vadd.f32 %v2516, %v2793
        %vm2898 = vcmp.ge.f32.partialorder %v2846, 0.0
        %vm2899 = vcmp.ge.f32.partialorder %v2847, 0.0
        %vm2900 = vcmp.ge.f32.partialorder %v2848, 0.0
        %vm2901 = vcmp.ge.f32.partialorder %v2849, 0.0
        %vm2902 = vcmp.ge.f32.partialorder %v2850, 0.0
        %vm2903 = vcmp.ge.f32.partialorder %v2851, 0.0
        %vm2904 = vcmp.ge.f32.partialorder %v2852, 0.0
        %vm2905 = vcmp.ge.f32.partialorder %v2853, 0.0
        %vm2906 = vcmp.ge.f32.partialorder %v2854, 0.0
        %vm2907 = vcmp.ge.f32.partialorder %v2855, 0.0
        %vm2908 = vcmp.ge.f32.partialorder %v2856, 0.0
        %vm2909 = vcmp.ge.f32.partialorder %v2857, 0.0
        %vm2910 = vcmp.ge.f32.partialorder %v2858, 0.0
        %vm2911 = vcmp.ge.f32.partialorder %v2859, 0.0
        %vm2912 = vcmp.ge.f32.partialorder %v2860, 0.0
        %vm2913 = vcmp.ge.f32.partialorder %v2861, 0.0
        %vm2914 = vcmp.ge.f32.partialorder %v2862, 0.0
        %vm2915 = vcmp.ge.f32.partialorder %v2863, 0.0
        %vm2916 = vcmp.ge.f32.partialorder %v2864, 0.0
        %vm2917 = vcmp.ge.f32.partialorder %v2865, 0.0
        %vm2918 = vcmp.ge.f32.partialorder %v2866, 0.0
        %vm2919 = vcmp.ge.f32.partialorder %v2867, 0.0
        %vm2920 = vcmp.ge.f32.partialorder %v2868, 0.0
        %vm2921 = vcmp.ge.f32.partialorder %v2869, 0.0
        %vm2922 = vcmp.ge.f32.partialorder %v2870, 0.0
        %vm2923 = vcmp.ge.f32.partialorder %v2871, 0.0
        %vm2924 = vcmp.ge.f32.partialorder %v2872, 0.0
        %vm2925 = vcmp.ge.f32.partialorder %v2873, 0.0
        %vm2926 = vcmp.ge.f32.partialorder %v2874, 0.0
        %vm2927 = vcmp.ge.f32.partialorder %v2875, 0.0
        %vm2928 = vcmp.ge.f32.partialorder %v2876, 0.0
        %vm2929 = vcmp.ge.f32.partialorder %v2877, 0.0
        %vm2930 = vcmp.ge.f32.partialorder %v2878, 0.0
        %vm2931 = vcmp.ge.f32.partialorder %v2879, 0.0
        %vm2932 = vcmp.ge.f32.partialorder %v2880, 0.0
        %vm2933 = vcmp.ge.f32.partialorder %v2881, 0.0
        %vm2934 = vcmp.ge.f32.partialorder %v2882, 0.0
        %vm2935 = vcmp.ge.f32.partialorder %v2883, 0.0
        %vm2936 = vcmp.ge.f32.partialorder %v2884, 0.0
        %vm2937 = vcmp.ge.f32.partialorder %v2885, 0.0
        %vm2938 = vcmp.ge.f32.partialorder %v2886, 0.0
        %vm2939 = vcmp.ge.f32.partialorder %v2887, 0.0
        %vm2940 = vcmp.ge.f32.partialorder %v2888, 0.0
        %vm2941 = vcmp.ge.f32.partialorder %v2889, 0.0
        %vm2942 = vcmp.ge.f32.partialorder %v2890, 0.0
        %vm2943 = vcmp.ge.f32.partialorder %v2891, 0.0
        %vm2944 = vcmp.ge.f32.partialorder %v2892, 0.0
        %vm2945 = vcmp.ge.f32.partialorder %v2893, 0.0
        %vm2946 = vcmp.ge.f32.partialorder %v2894, 0.0
        %vm2947 = vcmp.ge.f32.partialorder %v2895, 0.0
        %vm2948 = vcmp.ge.f32.partialorder %v2896, 0.0
        %vm2949 = vcmp.ge.f32.partialorder %v2897, 0.0
        %v2950 = vstv %s365
        %v2951 = vmul.f32 %v2950, %v2846
        %v2952 = vmul.f32 %v2950, %v2847
        %v2953 = vmul.f32 %v2950, %v2848
        %v2954 = vmul.f32 %v2950, %v2849
        %v2955 = vmul.f32 %v2950, %v2850
        %v2956 = vmul.f32 %v2950, %v2851
        %v2957 = vmul.f32 %v2950, %v2852
        %v2958 = vmul.f32 %v2950, %v2853
        %v2959 = vmul.f32 %v2950, %v2854
        %v2960 = vmul.f32 %v2950, %v2855
        %v2961 = vmul.f32 %v2950, %v2856
        %v2962 = vmul.f32 %v2950, %v2857
        %v2963 = vmul.f32 %v2950, %v2858
        %v2964 = vmul.f32 %v2950, %v2859
        %v2965 = vmul.f32 %v2950, %v2860
        %v2966 = vmul.f32 %v2950, %v2861
        %v2967 = vmul.f32 %v2950, %v2862
        %v2968 = vmul.f32 %v2950, %v2863
        %v2969 = vmul.f32 %v2950, %v2864
        %v2970 = vmul.f32 %v2950, %v2865
        %v2971 = vmul.f32 %v2950, %v2866
        %v2972 = vmul.f32 %v2950, %v2867
        %v2973 = vmul.f32 %v2950, %v2868
        %v2974 = vmul.f32 %v2950, %v2869
        %v2975 = vmul.f32 %v2950, %v2870
        %v2976 = vmul.f32 %v2950, %v2871
        %v2977 = vmul.f32 %v2950, %v2872
        %v2978 = vmul.f32 %v2950, %v2873
        %v2979 = vmul.f32 %v2950, %v2874
        %v2980 = vmul.f32 %v2950, %v2875
        %v2981 = vmul.f32 %v2950, %v2876
        %v2982 = vmul.f32 %v2950, %v2877
        %v2983 = vmul.f32 %v2950, %v2878
        %v2984 = vmul.f32 %v2950, %v2879
        %v2985 = vmul.f32 %v2950, %v2880
        %v2986 = vmul.f32 %v2950, %v2881
        %v2987 = vmul.f32 %v2950, %v2882
        %v2988 = vmul.f32 %v2950, %v2883
        %v2989 = vmul.f32 %v2950, %v2884
        %v2990 = vmul.f32 %v2950, %v2885
        %v2991 = vmul.f32 %v2950, %v2886
        %v2992 = vmul.f32 %v2950, %v2887
        %v2993 = vmul.f32 %v2950, %v2888
        %v2994 = vmul.f32 %v2950, %v2889
        %v2995 = vmul.f32 %v2950, %v2890
        %v2996 = vmul.f32 %v2950, %v2891
        %v2997 = vmul.f32 %v2950, %v2892
        %v2998 = vmul.f32 %v2950, %v2893
        %v2999 = vmul.f32 %v2950, %v2894
        %v3000 = vmul.f32 %v2950, %v2895
        %v3001 = vmul.f32 %v2950, %v2896
        %v3002 = vmul.f32 %v2950, %v2897
        %v3003 = vsel %vm2898, %v2846, %v2951
        %v3004 = vsel %vm2899, %v2847, %v2952
        %v3005 = vsel %vm2900, %v2848, %v2953
        %v3006 = vsel %vm2901, %v2849, %v2954
        %v3007 = vsel %vm2902, %v2850, %v2955
        %v3008 = vsel %vm2903, %v2851, %v2956
        %v3009 = vsel %vm2904, %v2852, %v2957
        %v3010 = vsel %vm2905, %v2853, %v2958
        %v3011 = vsel %vm2906, %v2854, %v2959
        %v3012 = vsel %vm2907, %v2855, %v2960
        %v3013 = vsel %vm2908, %v2856, %v2961
        %v3014 = vsel %vm2909, %v2857, %v2962
        %v3015 = vsel %vm2910, %v2858, %v2963
        %v3016 = vsel %vm2911, %v2859, %v2964
        %v3017 = vsel %vm2912, %v2860, %v2965
        %v3018 = vsel %vm2913, %v2861, %v2966
        %v3019 = vsel %vm2914, %v2862, %v2967
        %v3020 = vsel %vm2915, %v2863, %v2968
        %v3021 = vsel %vm2916, %v2864, %v2969
        %v3022 = vsel %vm2917, %v2865, %v2970
        %v3023 = vsel %vm2918, %v2866, %v2971
        %v3024 = vsel %vm2919, %v2867, %v2972
        %v3025 = vsel %vm2920, %v2868, %v2973
        %v3026 = vsel %vm2921, %v2869, %v2974
        %v3027 = vsel %vm2922, %v2870, %v2975
        %v3028 = vsel %vm2923, %v2871, %v2976
        %v3029 = vsel %vm2924, %v2872, %v2977
        %v3030 = vsel %vm2925, %v2873, %v2978
        %v3031 = vsel %vm2926, %v2874, %v2979
        %v3032 = vsel %vm2927, %v2875, %v2980
        %v3033 = vsel %vm2928, %v2876, %v2981
        %v3034 = vsel %vm2929, %v2877, %v2982
        %v3035 = vsel %vm2930, %v2878, %v2983
        %v3036 = vsel %vm2931, %v2879, %v2984
        %v3037 = vsel %vm2932, %v2880, %v2985
        %v3038 = vsel %vm2933, %v2881, %v2986
        %v3039 = vsel %vm2934, %v2882, %v2987
        %v3040 = vsel %vm2935, %v2883, %v2988
        %v3041 = vsel %vm2936, %v2884, %v2989
        %v3042 = vsel %vm2937, %v2885, %v2990
        %v3043 = vsel %vm2938, %v2886, %v2991
        %v3044 = vsel %vm2939, %v2887, %v2992
        %v3045 = vsel %vm2940, %v2888, %v2993
        %v3046 = vsel %vm2941, %v2889, %v2994
        %v3047 = vsel %vm2942, %v2890, %v2995
        %v3048 = vsel %vm2943, %v2891, %v2996
        %v3049 = vsel %vm2944, %v2892, %v2997
        %v3050 = vsel %vm2945, %v2893, %v2998
        %v3051 = vsel %vm2946, %v2894, %v2999
        %v3052 = vsel %vm2947, %v2895, %v3000
        %v3053 = vsel %vm2948, %v2896, %v3001
        %v3054 = vsel %vm2949, %v2897, %v3002
        %v3055 = vld [vmem:[%s5] sm:$0x3]
        %v3056 = vld [vmem:[%s6] sm:$0x3]
        %vm3109 = vcmask 1041408
        %v3110 = vrot.slane %v3003, 6
        %v3111 = vrot.slane %v3005, 6
        %v3112 = vsel %vm3109, %v3110, %v3111
        %v3113 = vrot.slane %v3004, 6
        %v3114 = vrot.slane %v3006, 6
        %v3115 = vsel %vm3109, %v3113, %v3114
        %v3116 = vrot.slane %v3007, 6
        %v3117 = vsel %vm3109, %v3111, %v3116
        %v3118 = vrot.slane %v3008, 6
        %v3119 = vsel %vm3109, %v3114, %v3118
        %v3120 = vrot.slane %v3009, 6
        %v3121 = vsel %vm3109, %v3116, %v3120
        %v3122 = vrot.slane %v3010, 6
        %v3123 = vsel %vm3109, %v3118, %v3122
        %v3124 = vrot.slane %v3011, 6
        %v3125 = vsel %vm3109, %v3120, %v3124
        %v3126 = vrot.slane %v3012, 6
        %v3127 = vsel %vm3109, %v3122, %v3126
        %v3128 = vrot.slane %v3013, 6
        %v3129 = vsel %vm3109, %v3124, %v3128
        %v3130 = vrot.slane %v3014, 6
        %v3131 = vsel %vm3109, %v3126, %v3130
        %v3132 = vrot.slane %v3015, 6
        %v3133 = vsel %vm3109, %v3128, %v3132
        %v3134 = vrot.slane %v3016, 6
        %v3135 = vsel %vm3109, %v3130, %v3134
        %v3136 = vrot.slane %v3017, 6
        %v3137 = vsel %vm3109, %v3132, %v3136
        %v3138 = vrot.slane %v3018, 6
        %v3139 = vsel %vm3109, %v3134, %v3138
        %v3140 = vrot.slane %v3019, 6
        %v3141 = vsel %vm3109, %v3136, %v3140
        %v3142 = vrot.slane %v3020, 6
        %v3143 = vsel %vm3109, %v3138, %v3142
        %v3144 = vrot.slane %v3021, 6
        %v3145 = vsel %vm3109, %v3140, %v3144
        %v3146 = vrot.slane %v3022, 6
        %v3147 = vsel %vm3109, %v3142, %v3146
        %v3148 = vrot.slane %v3023, 6
        %v3149 = vsel %vm3109, %v3144, %v3148
        %v3150 = vrot.slane %v3024, 6
        %v3151 = vsel %vm3109, %v3146, %v3150
        %v3152 = vrot.slane %v3025, 6
        %v3153 = vsel %vm3109, %v3148, %v3152
        %v3154 = vrot.slane %v3026, 6
        %v3155 = vsel %vm3109, %v3150, %v3154
        %v3156 = vrot.slane %v3027, 6
        %v3157 = vsel %vm3109, %v3152, %v3156
        %v3158 = vrot.slane %v3028, 6
        %v3159 = vsel %vm3109, %v3154, %v3158
        %v3160 = vrot.slane %v3029, 6
        %v3161 = vsel %vm3109, %v3156, %v3160
        %v3162 = vrot.slane %v3030, 6
        %v3163 = vsel %vm3109, %v3158, %v3162
        %v3164 = vrot.slane %v3031, 6
        %v3165 = vsel %vm3109, %v3160, %v3164
        %v3166 = vrot.slane %v3032, 6
        %v3167 = vsel %vm3109, %v3162, %v3166
        %v3168 = vrot.slane %v3033, 6
        %v3169 = vsel %vm3109, %v3164, %v3168
        %v3170 = vrot.slane %v3034, 6
        %v3171 = vsel %vm3109, %v3166, %v3170
        %v3172 = vrot.slane %v3035, 6
        %v3173 = vsel %vm3109, %v3168, %v3172
        %v3174 = vrot.slane %v3036, 6
        %v3175 = vsel %vm3109, %v3170, %v3174
        %v3176 = vrot.slane %v3037, 6
        %v3177 = vsel %vm3109, %v3172, %v3176
        %v3178 = vrot.slane %v3038, 6
        %v3179 = vsel %vm3109, %v3174, %v3178
        %v3180 = vrot.slane %v3039, 6
        %v3181 = vsel %vm3109, %v3176, %v3180
        %v3182 = vrot.slane %v3040, 6
        %v3183 = vsel %vm3109, %v3178, %v3182
        %v3184 = vrot.slane %v3041, 6
        %v3185 = vsel %vm3109, %v3180, %v3184
        %v3186 = vrot.slane %v3042, 6
        %v3187 = vsel %vm3109, %v3182, %v3186
        %v3188 = vrot.slane %v3043, 6
        %v3189 = vsel %vm3109, %v3184, %v3188
        %v3190 = vrot.slane %v3044, 6
        %v3191 = vsel %vm3109, %v3186, %v3190
        %v3192 = vrot.slane %v3045, 6
        %v3193 = vsel %vm3109, %v3188, %v3192
        %v3194 = vrot.slane %v3046, 6
        %v3195 = vsel %vm3109, %v3190, %v3194
        %v3196 = vrot.slane %v3047, 6
        %v3197 = vsel %vm3109, %v3192, %v3196
        %v3198 = vrot.slane %v3048, 6
        %v3199 = vsel %vm3109, %v3194, %v3198
        %v3200 = vrot.slane %v3049, 6
        %v3201 = vsel %vm3109, %v3196, %v3200
        %v3202 = vrot.slane %v3050, 6
        %v3203 = vsel %vm3109, %v3198, %v3202
        %v3204 = vrot.slane %v3051, 6
        %v3205 = vsel %vm3109, %v3200, %v3204
        %v3206 = vrot.slane %v3052, 6
        %v3207 = vsel %vm3109, %v3202, %v3206
        %v3208 = vrot.slane %v3053, 6
        %v3209 = vsel %vm3109, %v3204, %v3208
        %v3210 = vrot.slane %v3054, 6
        %v3211 = vsel %vm3109, %v3206, %v3210
        %3262 = vmatprep.subr.mxu0 0.0
        %3263 = vmatpush1.msra.mxu0 1.0
        %3264 = vmatprep.subr.mxu0 0.0
        %3265 = vmatpush1.msra.mxu0 1.0
        %3266 = vmatprep.subr.mxu0 0.0
        %3267 = vmatpush1.msra.mxu0 1.0
        %3268 = vmatprep.subr.mxu0 0.0
        %3269 = vmatpush1.msra.mxu0 1.0
        %3270 = vmatprep.subr.mxu0 0.0
        %3271 = vmatpush1.msra.mxu0 1.0
        %3272 = vmatprep.subr.mxu0 0.0
        %3273 = vmatpush1.msra.mxu0 1.0
        %3274 = vmatprep.subr.mxu0 0.0
        %3275 = vmatpush1.msra.mxu0 1.0
        %3276 = vmatprep.subr.mxu0 0.0
        %3277 = vmatpush1.msra.mxu0 1.0
        %3278 = vmatprep.subr.mxu0 0.0
        %3279 = vmatpush1.msra.mxu0 1.0
        %3280 = vmatprep.subr.mxu0 0.0
        %3281 = vmatpush1.msra.mxu0 1.0
        %3282 = vmatprep.subr.mxu0 0.0
        %3283 = vmatpush1.msra.mxu0 1.0
        %3284 = vmatprep.subr.mxu0 0.0
        %3285 = vmatpush1.msra.mxu0 1.0
        %3286 = vmatprep.subr.mxu0 0.0
        %3287 = vmatpush1.msra.mxu0 1.0
        %3288 = vmatprep.subr.mxu0 0.0
        %3289 = vmatpush1.msra.mxu0 1.0
        %3290 = vmatprep.subr.mxu0 0.0
        %3291 = vmatpush1.msra.mxu0 1.0
        %3292 = vmatprep.subr.mxu0 0.0
        %3293 = vmatpush1.msra.mxu0 1.0
        %3294 = vmatprep.subr.mxu0 0.0
        %3295 = vmatpush1.msra.mxu0 1.0
        %3296 = vmatprep.subr.mxu0 0.0
        %3297 = vmatpush1.msra.mxu0 1.0
        %3298 = vmatprep.subr.mxu0 0.0
        %3299 = vmatpush1.msra.mxu0 1.0
        %3300 = vmatprep.subr.mxu0 0.0
        %3301 = vmatpush1.msra.mxu0 1.0
        %3302 = vmatprep.subr.mxu0 0.0
        %3303 = vmatpush1.msra.mxu0 1.0
        %3304 = vmatprep.subr.mxu0 0.0
        %3305 = vmatpush1.msra.mxu0 1.0
        %3306 = vmatprep.subr.mxu0 0.0
        %3307 = vmatpush1.msra.mxu0 1.0
        %3308 = vmatprep.subr.mxu0 0.0
        %3309 = vmatpush1.msra.mxu0 1.0
        %3310 = vmatprep.subr.mxu0 0.0
        %3311 = vmatpush1.msra.mxu0 1.0
        %3312 = vmatprep.subr.mxu0 0.0
        %3313 = vmatpush1.msra.mxu0 1.0
        %3314 = vmatprep.subr.mxu0 0.0
        %3315 = vmatpush1.msra.mxu0 1.0
        %3316 = vmatprep.subr.mxu0 0.0
        %3317 = vmatpush1.msra.mxu0 1.0
        %3318 = vmatprep.subr.mxu0 0.0
        %3319 = vmatpush1.msra.mxu0 1.0
        %3320 = vmatprep.subr.mxu0 0.0
        %3321 = vmatpush1.msra.mxu0 1.0
        %3322 = vmatprep.subr.mxu0 0.0
        %3323 = vmatpush1.msra.mxu0 1.0
        %3324 = vmatprep.subr.mxu0 0.0
        %3325 = vmatpush1.msra.mxu0 1.0
        %3326 = vmatprep.mubr.f32.mxu0 %v3115
        %3327 = vmatmul.mubr.f32.gmra.mrb[0].mxu0 %v3112
        %v3328 = vpop.f32.mrb[0].mxu0
        %v3329 = vadd.f32 0.0, %v3328
        %v3330 = vpop.f32.mrb[0].mxu0
        %3331 = vmatprep.mubr.f32.mxu0 %v3119
        %3332 = vmatmul.mubr.f32.gmra.mrb[0].mxu0 %v3117
        %v3333 = vpop.f32.mrb[0].mxu0
        %v3334 = vadd.f32 0.0, %v3333
        %v3335 = vpop.f32.mrb[0].mxu0
        %3336 = vmatprep.mubr.f32.mxu0 %v3123
        %3337 = vmatmul.mubr.f32.gmra.mrb[0].mxu0 %v3121
        %v3338 = vpop.f32.mrb[0].mxu0
        %v3339 = vadd.f32 0.0, %v3338
        %v3340 = vpop.f32.mrb[0].mxu0
        %3341 = vmatprep.mubr.f32.mxu0 %v3127
        %3342 = vmatmul.mubr.f32.gmra.mrb[0].mxu0 %v3125
        %v3343 = vpop.f32.mrb[0].mxu0
        %v3344 = vadd.f32 0.0, %v3343
        %v3345 = vpop.f32.mrb[0].mxu0
        %3346 = vmatprep.mubr.f32.mxu0 %v3131
        %3347 = vmatmul.mubr.f32.gmra.mrb[0].mxu0 %v3129
        %v3348 = vpop.f32.mrb[0].mxu0
        %v3349 = vadd.f32 0.0, %v3348
        %v3350 = vpop.f32.mrb[0].mxu0
        %3351 = vmatprep.mubr.f32.mxu0 %v3135
        %3352 = vmatmul.mubr.f32.gmra.mrb[0].mxu0 %v3133
        %v3353 = vpop.f32.mrb[0].mxu0
        %v3354 = vadd.f32 0.0, %v3353
        %v3355 = vpop.f32.mrb[0].mxu0
        %3356 = vmatprep.mubr.f32.mxu0 %v3139
        %3357 = vmatmul.mubr.f32.gmra.mrb[0].mxu0 %v3137
        %v3358 = vpop.f32.mrb[0].mxu0
        %v3359 = vadd.f32 0.0, %v3358
        %v3360 = vpop.f32.mrb[0].mxu0
        %3361 = vmatprep.mubr.f32.mxu0 %v3143
        %3362 = vmatmul.mubr.f32.gmra.mrb[0].mxu0 %v3141
        %v3363 = vpop.f32.mrb[0].mxu0
        %v3364 = vadd.f32 0.0, %v3363
        %v3365 = vpop.f32.mrb[0].mxu0
        %3366 = vmatprep.mubr.f32.mxu0 %v3147
        %3367 = vmatmul.mubr.f32.gmra.mrb[0].mxu0 %v3145
        %v3368 = vpop.f32.mrb[0].mxu0
        %v3369 = vadd.f32 0.0, %v3368
        %v3370 = vpop.f32.mrb[0].mxu0
        %3371 = vmatprep.mubr.f32.mxu0 %v3151
        %3372 = vmatmul.mubr.f32.gmra.mrb[0].mxu0 %v3149
        %v3373 = vpop.f32.mrb[0].mxu0
        %v3374 = vadd.f32 0.0, %v3373
        %v3375 = vpop.f32.mrb[0].mxu0
        %3376 = vmatprep.mubr.f32.mxu0 %v3155
        %3377 = vmatmul.mubr.f32.gmra.mrb[0].mxu0 %v3153
        %v3378 = vpop.f32.mrb[0].mxu0
        %v3379 = vadd.f32 0.0, %v3378
        %v3380 = vpop.f32.mrb[0].mxu0
        %3381 = vmatprep.mubr.f32.mxu0 %v3159
        %3382 = vmatmul.mubr.f32.gmra.mrb[0].mxu0 %v3157
        %v3383 = vpop.f32.mrb[0].mxu0
        %v3384 = vadd.f32 0.0, %v3383
        %v3385 = vpop.f32.mrb[0].mxu0
        %3386 = vmatprep.mubr.f32.mxu0 %v3163
        %3387 = vmatmul.mubr.f32.gmra.mrb[0].mxu0 %v3161
        %v3388 = vpop.f32.mrb[0].mxu0
        %v3389 = vadd.f32 0.0, %v3388
        %v3390 = vpop.f32.mrb[0].mxu0
        %3391 = vmatprep.mubr.f32.mxu0 %v3167
        %3392 = vmatmul.mubr.f32.gmra.mrb[0].mxu0 %v3165
        %v3393 = vpop.f32.mrb[0].mxu0
        %v3394 = vadd.f32 0.0, %v3393
        %v3395 = vpop.f32.mrb[0].mxu0
        %3396 = vmatprep.mubr.f32.mxu0 %v3171
        %3397 = vmatmul.mubr.f32.gmra.mrb[0].mxu0 %v3169
        %v3398 = vpop.f32.mrb[0].mxu0
        %v3399 = vadd.f32 0.0, %v3398
        %v3400 = vpop.f32.mrb[0].mxu0
        %3401 = vmatprep.mubr.f32.mxu0 %v3175
        %3402 = vmatmul.mubr.f32.gmra.mrb[0].mxu0 %v3173
        %v3403 = vpop.f32.mrb[0].mxu0
        %v3404 = vadd.f32 0.0, %v3403
        %v3405 = vpop.f32.mrb[0].mxu0
        %3406 = vmatprep.mubr.f32.mxu0 %v3179
        %3407 = vmatmul.mubr.f32.gmra.mrb[0].mxu0 %v3177
        %v3408 = vpop.f32.mrb[0].mxu0
        %v3409 = vadd.f32 0.0, %v3408
        %v3410 = vpop.f32.mrb[0].mxu0
        %3411 = vmatprep.mubr.f32.mxu0 %v3183
        %3412 = vmatmul.mubr.f32.gmra.mrb[0].mxu0 %v3181
        %v3413 = vpop.f32.mrb[0].mxu0
        %v3414 = vadd.f32 0.0, %v3413
        %v3415 = vpop.f32.mrb[0].mxu0
        %3416 = vmatprep.mubr.f32.mxu0 %v3187
        %3417 = vmatmul.mubr.f32.gmra.mrb[0].mxu0 %v3185
        %v3418 = vpop.f32.mrb[0].mxu0
        %v3419 = vadd.f32 0.0, %v3418
        %v3420 = vpop.f32.mrb[0].mxu0
        %3421 = vmatprep.mubr.f32.mxu0 %v3191
        %3422 = vmatmul.mubr.f32.gmra.mrb[0].mxu0 %v3189
        %v3423 = vpop.f32.mrb[0].mxu0
        %v3424 = vadd.f32 0.0, %v3423
        %v3425 = vpop.f32.mrb[0].mxu0
        %3426 = vmatprep.mubr.f32.mxu0 %v3195
        %3427 = vmatmul.mubr.f32.gmra.mrb[0].mxu0 %v3193
        %v3428 = vpop.f32.mrb[0].mxu0
        %v3429 = vadd.f32 0.0, %v3428
        %v3430 = vpop.f32.mrb[0].mxu0
        %3431 = vmatprep.mubr.f32.mxu0 %v3199
        %3432 = vmatmul.mubr.f32.gmra.mrb[0].mxu0 %v3197
        %v3433 = vpop.f32.mrb[0].mxu0
        %v3434 = vadd.f32 0.0, %v3433
        %v3435 = vpop.f32.mrb[0].mxu0
        %3436 = vmatprep.mubr.f32.mxu0 %v3203
        %3437 = vmatmul.mubr.f32.gmra.mrb[0].mxu0 %v3201
        %v3438 = vpop.f32.mrb[0].mxu0
        %v3439 = vadd.f32 0.0, %v3438
        %v3440 = vpop.f32.mrb[0].mxu0
        %3441 = vmatprep.mubr.f32.mxu0 %v3207
        %3442 = vmatmul.mubr.f32.gmra.mrb[0].mxu0 %v3205
        %v3443 = vpop.f32.mrb[0].mxu0
        %v3444 = vadd.f32 0.0, %v3443
        %v3445 = vpop.f32.mrb[0].mxu0
        %3446 = vmatprep.mubr.f32.mxu0 %v3211
        %3447 = vmatmul.mubr.f32.gmra.mrb[0].mxu0 %v3209
        %v3448 = vpop.f32.mrb[0].mxu0
        %v3449 = vadd.f32 0.0, %v3448
        %v3450 = vpop.f32.mrb[0].mxu0
        %3451 = vdwg.mxu0
        %v3452 = vmul.f32 %v3003, %v3003
        %v3453 = vmul.f32 %v3004, %v3004
        %v3454 = vmul.f32 %v3005, %v3005
        %v3455 = vmul.f32 %v3006, %v3006
        %v3456 = vmul.f32 %v3007, %v3007
        %v3457 = vmul.f32 %v3008, %v3008
        %v3458 = vmul.f32 %v3009, %v3009
        %v3459 = vmul.f32 %v3010, %v3010
        %v3460 = vmul.f32 %v3011, %v3011
        %v3461 = vmul.f32 %v3012, %v3012
        %v3462 = vmul.f32 %v3013, %v3013
        %v3463 = vmul.f32 %v3014, %v3014
        %v3464 = vmul.f32 %v3015, %v3015
        %v3465 = vmul.f32 %v3016, %v3016
        %v3466 = vmul.f32 %v3017, %v3017
        %v3467 = vmul.f32 %v3018, %v3018
        %v3468 = vmul.f32 %v3019, %v3019
        %v3469 = vmul.f32 %v3020, %v3020
        %v3470 = vmul.f32 %v3021, %v3021
        %v3471 = vmul.f32 %v3022, %v3022
        %v3472 = vmul.f32 %v3023, %v3023
        %v3473 = vmul.f32 %v3024, %v3024
        %v3474 = vmul.f32 %v3025, %v3025
        %v3475 = vmul.f32 %v3026, %v3026
        %v3476 = vmul.f32 %v3027, %v3027
        %v3477 = vmul.f32 %v3028, %v3028
        %v3478 = vmul.f32 %v3029, %v3029
        %v3479 = vmul.f32 %v3030, %v3030
        %v3480 = vmul.f32 %v3031, %v3031
        %v3481 = vmul.f32 %v3032, %v3032
        %v3482 = vmul.f32 %v3033, %v3033
        %v3483 = vmul.f32 %v3034, %v3034
        %v3484 = vmul.f32 %v3035, %v3035
        %v3485 = vmul.f32 %v3036, %v3036
        %v3486 = vmul.f32 %v3037, %v3037
        %v3487 = vmul.f32 %v3038, %v3038
        %v3488 = vmul.f32 %v3039, %v3039
        %v3489 = vmul.f32 %v3040, %v3040
        %v3490 = vmul.f32 %v3041, %v3041
        %v3491 = vmul.f32 %v3042, %v3042
        %v3492 = vmul.f32 %v3043, %v3043
        %v3493 = vmul.f32 %v3044, %v3044
        %v3494 = vmul.f32 %v3045, %v3045
        %v3495 = vmul.f32 %v3046, %v3046
        %v3496 = vmul.f32 %v3047, %v3047
        %v3497 = vmul.f32 %v3048, %v3048
        %v3498 = vmul.f32 %v3049, %v3049
        %v3499 = vmul.f32 %v3050, %v3050
        %v3500 = vmul.f32 %v3051, %v3051
        %v3501 = vmul.f32 %v3052, %v3052
        %v3502 = vmul.f32 %v3053, %v3053
        %v3503 = vmul.f32 %v3054, %v3054
        %v3556 = vrot.slane %v3452, 6
        %v3557 = vrot.slane %v3454, 6
        %v3558 = vsel %vm3109, %v3556, %v3557
        %v3559 = vrot.slane %v3453, 6
        %v3560 = vrot.slane %v3455, 6
        %v3561 = vsel %vm3109, %v3559, %v3560
        %v3562 = vrot.slane %v3456, 6
        %v3563 = vsel %vm3109, %v3557, %v3562
        %v3564 = vrot.slane %v3457, 6
        %v3565 = vsel %vm3109, %v3560, %v3564
        %v3566 = vrot.slane %v3458, 6
        %v3567 = vsel %vm3109, %v3562, %v3566
        %v3568 = vrot.slane %v3459, 6
        %v3569 = vsel %vm3109, %v3564, %v3568
        %v3570 = vrot.slane %v3460, 6
        %v3571 = vsel %vm3109, %v3566, %v3570
        %v3572 = vrot.slane %v3461, 6
        %v3573 = vsel %vm3109, %v3568, %v3572
        %v3574 = vrot.slane %v3462, 6
        %v3575 = vsel %vm3109, %v3570, %v3574
        %v3576 = vrot.slane %v3463, 6
        %v3577 = vsel %vm3109, %v3572, %v3576
        %v3578 = vrot.slane %v3464, 6
        %v3579 = vsel %vm3109, %v3574, %v3578
        %v3580 = vrot.slane %v3465, 6
        %v3581 = vsel %vm3109, %v3576, %v3580
        %v3582 = vrot.slane %v3466, 6
        %v3583 = vsel %vm3109, %v3578, %v3582
        %v3584 = vrot.slane %v3467, 6
        %v3585 = vsel %vm3109, %v3580, %v3584
        %v3586 = vrot.slane %v3468, 6
        %v3587 = vsel %vm3109, %v3582, %v3586
        %v3588 = vrot.slane %v3469, 6
        %v3589 = vsel %vm3109, %v3584, %v3588
        %v3590 = vrot.slane %v3470, 6
        %v3591 = vsel %vm3109, %v3586, %v3590
        %v3592 = vrot.slane %v3471, 6
        %v3593 = vsel %vm3109, %v3588, %v3592
        %v3594 = vrot.slane %v3472, 6
        %v3595 = vsel %vm3109, %v3590, %v3594
        %v3596 = vrot.slane %v3473, 6
        %v3597 = vsel %vm3109, %v3592, %v3596
        %v3598 = vrot.slane %v3474, 6
        %v3599 = vsel %vm3109, %v3594, %v3598
        %v3600 = vrot.slane %v3475, 6
        %v3601 = vsel %vm3109, %v3596, %v3600
        %v3602 = vrot.slane %v3476, 6
        %v3603 = vsel %vm3109, %v3598, %v3602
        %v3604 = vrot.slane %v3477, 6
        %v3605 = vsel %vm3109, %v3600, %v3604
        %v3606 = vrot.slane %v3478, 6
        %v3607 = vsel %vm3109, %v3602, %v3606
        %v3608 = vrot.slane %v3479, 6
        %v3609 = vsel %vm3109, %v3604, %v3608
        %v3610 = vrot.slane %v3480, 6
        %v3611 = vsel %vm3109, %v3606, %v3610
        %v3612 = vrot.slane %v3481, 6
        %v3613 = vsel %vm3109, %v3608, %v3612
        %v3614 = vrot.slane %v3482, 6
        %v3615 = vsel %vm3109, %v3610, %v3614
        %v3616 = vrot.slane %v3483, 6
        %v3617 = vsel %vm3109, %v3612, %v3616
        %v3618 = vrot.slane %v3484, 6
        %v3619 = vsel %vm3109, %v3614, %v3618
        %v3620 = vrot.slane %v3485, 6
        %v3621 = vsel %vm3109, %v3616, %v3620
        %v3622 = vrot.slane %v3486, 6
        %v3623 = vsel %vm3109, %v3618, %v3622
        %v3624 = vrot.slane %v3487, 6
        %v3625 = vsel %vm3109, %v3620, %v3624
        %v3626 = vrot.slane %v3488, 6
        %v3627 = vsel %vm3109, %v3622, %v3626
        %v3628 = vrot.slane %v3489, 6
        %v3629 = vsel %vm3109, %v3624, %v3628
        %v3630 = vrot.slane %v3490, 6
        %v3631 = vsel %vm3109, %v3626, %v3630
        %v3632 = vrot.slane %v3491, 6
        %v3633 = vsel %vm3109, %v3628, %v3632
        %v3634 = vrot.slane %v3492, 6
        %v3635 = vsel %vm3109, %v3630, %v3634
        %v3636 = vrot.slane %v3493, 6
        %v3637 = vsel %vm3109, %v3632, %v3636
        %v3638 = vrot.slane %v3494, 6
        %v3639 = vsel %vm3109, %v3634, %v3638
        %v3640 = vrot.slane %v3495, 6
        %v3641 = vsel %vm3109, %v3636, %v3640
        %v3642 = vrot.slane %v3496, 6
        %v3643 = vsel %vm3109, %v3638, %v3642
        %v3644 = vrot.slane %v3497, 6
        %v3645 = vsel %vm3109, %v3640, %v3644
        %v3646 = vrot.slane %v3498, 6
        %v3647 = vsel %vm3109, %v3642, %v3646
        %v3648 = vrot.slane %v3499, 6
        %v3649 = vsel %vm3109, %v3644, %v3648
        %v3650 = vrot.slane %v3500, 6
        %v3651 = vsel %vm3109, %v3646, %v3650
        %v3652 = vrot.slane %v3501, 6
        %v3653 = vsel %vm3109, %v3648, %v3652
        %v3654 = vrot.slane %v3502, 6
        %v3655 = vsel %vm3109, %v3650, %v3654
        %v3656 = vrot.slane %v3503, 6
        %v3657 = vsel %vm3109, %v3652, %v3656
        %3708 = vmatprep.subr.mxu0 0.0
        %3709 = vmatpush1.msra.mxu0 1.0
        %3710 = vmatprep.subr.mxu0 0.0
        %3711 = vmatpush1.msra.mxu0 1.0
        %3712 = vmatprep.subr.mxu0 0.0
        %3713 = vmatpush1.msra.mxu0 1.0
        %3714 = vmatprep.subr.mxu0 0.0
        %3715 = vmatpush1.msra.mxu0 1.0
        %3716 = vmatprep.subr.mxu0 0.0
        %3717 = vmatpush1.msra.mxu0 1.0
        %3718 = vmatprep.subr.mxu0 0.0
        %3719 = vmatpush1.msra.mxu0 1.0
        %3720 = vmatprep.subr.mxu0 0.0
        %3721 = vmatpush1.msra.mxu0 1.0
        %3722 = vmatprep.subr.mxu0 0.0
        %3723 = vmatpush1.msra.mxu0 1.0
        %3724 = vmatprep.subr.mxu0 0.0
        %3725 = vmatpush1.msra.mxu0 1.0
        %3726 = vmatprep.subr.mxu0 0.0
        %3727 = vmatpush1.msra.mxu0 1.0
        %3728 = vmatprep.subr.mxu0 0.0
        %3729 = vmatpush1.msra.mxu0 1.0
        %3730 = vmatprep.subr.mxu0 0.0
        %3731 = vmatpush1.msra.mxu0 1.0
        %3732 = vmatprep.subr.mxu0 0.0
        %3733 = vmatpush1.msra.mxu0 1.0
        %3734 = vmatprep.subr.mxu0 0.0
        %3735 = vmatpush1.msra.mxu0 1.0
        %3736 = vmatprep.subr.mxu0 0.0
        %3737 = vmatpush1.msra.mxu0 1.0
        %3738 = vmatprep.subr.mxu0 0.0
        %3739 = vmatpush1.msra.mxu0 1.0
        %3740 = vmatprep.subr.mxu0 0.0
        %3741 = vmatpush1.msra.mxu0 1.0
        %3742 = vmatprep.subr.mxu0 0.0
        %3743 = vmatpush1.msra.mxu0 1.0
        %3744 = vmatprep.subr.mxu0 0.0
        %3745 = vmatpush1.msra.mxu0 1.0
        %3746 = vmatprep.subr.mxu0 0.0
        %3747 = vmatpush1.msra.mxu0 1.0
        %3748 = vmatprep.subr.mxu0 0.0
        %3749 = vmatpush1.msra.mxu0 1.0
        %3750 = vmatprep.subr.mxu0 0.0
        %3751 = vmatpush1.msra.mxu0 1.0
        %3752 = vmatprep.subr.mxu0 0.0
        %3753 = vmatpush1.msra.mxu0 1.0
        %3754 = vmatprep.subr.mxu0 0.0
        %3755 = vmatpush1.msra.mxu0 1.0
        %3756 = vmatprep.subr.mxu0 0.0
        %3757 = vmatpush1.msra.mxu0 1.0
        %3758 = vmatprep.subr.mxu0 0.0
        %3759 = vmatpush1.msra.mxu0 1.0
        %3760 = vmatprep.subr.mxu0 0.0
        %3761 = vmatpush1.msra.mxu0 1.0
        %3762 = vmatprep.subr.mxu0 0.0
        %3763 = vmatpush1.msra.mxu0 1.0
        %3764 = vmatprep.subr.mxu0 0.0
        %3765 = vmatpush1.msra.mxu0 1.0
        %3766 = vmatprep.subr.mxu0 0.0
        %3767 = vmatpush1.msra.mxu0 1.0
        %3768 = vmatprep.subr.mxu0 0.0
        %3769 = vmatpush1.msra.mxu0 1.0
        %3770 = vmatprep.subr.mxu0 0.0
        %3771 = vmatpush1.msra.mxu0 1.0
        %3772 = vmatprep.mubr.f32.mxu0 %v3561
        %3773 = vmatmul.mubr.f32.gmra.mrb[0].mxu0 %v3558
        %v3774 = vpop.f32.mrb[0].mxu0
        %v3775 = vadd.f32 0.0, %v3774
        %v3776 = vpop.f32.mrb[0].mxu0
        %3777 = vmatprep.mubr.f32.mxu0 %v3565
        %3778 = vmatmul.mubr.f32.gmra.mrb[0].mxu0 %v3563
        %v3779 = vpop.f32.mrb[0].mxu0
        %v3780 = vadd.f32 0.0, %v3779
        %v3781 = vpop.f32.mrb[0].mxu0
        %3782 = vmatprep.mubr.f32.mxu0 %v3569
        %3783 = vmatmul.mubr.f32.gmra.mrb[0].mxu0 %v3567
        %v3784 = vpop.f32.mrb[0].mxu0
        %v3785 = vadd.f32 0.0, %v3784
        %v3786 = vpop.f32.mrb[0].mxu0
        %3787 = vmatprep.mubr.f32.mxu0 %v3573
        %3788 = vmatmul.mubr.f32.gmra.mrb[0].mxu0 %v3571
        %v3789 = vpop.f32.mrb[0].mxu0
        %v3790 = vadd.f32 0.0, %v3789
        %v3791 = vpop.f32.mrb[0].mxu0
        %3792 = vmatprep.mubr.f32.mxu0 %v3577
        %3793 = vmatmul.mubr.f32.gmra.mrb[0].mxu0 %v3575
        %v3794 = vpop.f32.mrb[0].mxu0
        %v3795 = vadd.f32 0.0, %v3794
        %v3796 = vpop.f32.mrb[0].mxu0
        %3797 = vmatprep.mubr.f32.mxu0 %v3581
        %3798 = vmatmul.mubr.f32.gmra.mrb[0].mxu0 %v3579
        %v3799 = vpop.f32.mrb[0].mxu0
        %v3800 = vadd.f32 0.0, %v3799
        %v3801 = vpop.f32.mrb[0].mxu0
        %3802 = vmatprep.mubr.f32.mxu0 %v3585
        %3803 = vmatmul.mubr.f32.gmra.mrb[0].mxu0 %v3583
        %v3804 = vpop.f32.mrb[0].mxu0
        %v3805 = vadd.f32 0.0, %v3804
        %v3806 = vpop.f32.mrb[0].mxu0
        %3807 = vmatprep.mubr.f32.mxu0 %v3589
        %3808 = vmatmul.mubr.f32.gmra.mrb[0].mxu0 %v3587
        %v3809 = vpop.f32.mrb[0].mxu0
        %v3810 = vadd.f32 0.0, %v3809
        %v3811 = vpop.f32.mrb[0].mxu0
        %3812 = vmatprep.mubr.f32.mxu0 %v3593
        %3813 = vmatmul.mubr.f32.gmra.mrb[0].mxu0 %v3591
        %v3814 = vpop.f32.mrb[0].mxu0
        %v3815 = vadd.f32 0.0, %v3814
        %v3816 = vpop.f32.mrb[0].mxu0
        %3817 = vmatprep.mubr.f32.mxu0 %v3597
        %3818 = vmatmul.mubr.f32.gmra.mrb[0].mxu0 %v3595
        %v3819 = vpop.f32.mrb[0].mxu0
        %v3820 = vadd.f32 0.0, %v3819
        %v3821 = vpop.f32.mrb[0].mxu0
        %3822 = vmatprep.mubr.f32.mxu0 %v3601
        %3823 = vmatmul.mubr.f32.gmra.mrb[0].mxu0 %v3599
        %v3824 = vpop.f32.mrb[0].mxu0
        %v3825 = vadd.f32 0.0, %v3824
        %v3826 = vpop.f32.mrb[0].mxu0
        %3827 = vmatprep.mubr.f32.mxu0 %v3605
        %3828 = vmatmul.mubr.f32.gmra.mrb[0].mxu0 %v3603
        %v3829 = vpop.f32.mrb[0].mxu0
        %v3830 = vadd.f32 0.0, %v3829
        %v3831 = vpop.f32.mrb[0].mxu0
        %3832 = vmatprep.mubr.f32.mxu0 %v3609
        %3833 = vmatmul.mubr.f32.gmra.mrb[0].mxu0 %v3607
        %v3834 = vpop.f32.mrb[0].mxu0
        %v3835 = vadd.f32 0.0, %v3834
        %v3836 = vpop.f32.mrb[0].mxu0
        %3837 = vmatprep.mubr.f32.mxu0 %v3613
        %3838 = vmatmul.mubr.f32.gmra.mrb[0].mxu0 %v3611
        %v3839 = vpop.f32.mrb[0].mxu0
        %v3840 = vadd.f32 0.0, %v3839
        %v3841 = vpop.f32.mrb[0].mxu0
        %3842 = vmatprep.mubr.f32.mxu0 %v3617
        %3843 = vmatmul.mubr.f32.gmra.mrb[0].mxu0 %v3615
        %v3844 = vpop.f32.mrb[0].mxu0
        %v3845 = vadd.f32 0.0, %v3844
        %v3846 = vpop.f32.mrb[0].mxu0
        %3847 = vmatprep.mubr.f32.mxu0 %v3621
        %3848 = vmatmul.mubr.f32.gmra.mrb[0].mxu0 %v3619
        %v3849 = vpop.f32.mrb[0].mxu0
        %v3850 = vadd.f32 0.0, %v3849
        %v3851 = vpop.f32.mrb[0].mxu0
        %3852 = vmatprep.mubr.f32.mxu0 %v3625
        %3853 = vmatmul.mubr.f32.gmra.mrb[0].mxu0 %v3623
        %v3854 = vpop.f32.mrb[0].mxu0
        %v3855 = vadd.f32 0.0, %v3854
        %v3856 = vpop.f32.mrb[0].mxu0
        %3857 = vmatprep.mubr.f32.mxu0 %v3629
        %3858 = vmatmul.mubr.f32.gmra.mrb[0].mxu0 %v3627
        %v3859 = vpop.f32.mrb[0].mxu0
        %v3860 = vadd.f32 0.0, %v3859
        %v3861 = vpop.f32.mrb[0].mxu0
        %3862 = vmatprep.mubr.f32.mxu0 %v3633
        %3863 = vmatmul.mubr.f32.gmra.mrb[0].mxu0 %v3631
        %v3864 = vpop.f32.mrb[0].mxu0
        %v3865 = vadd.f32 0.0, %v3864
        %v3866 = vpop.f32.mrb[0].mxu0
        %3867 = vmatprep.mubr.f32.mxu0 %v3637
        %3868 = vmatmul.mubr.f32.gmra.mrb[0].mxu0 %v3635
        %v3869 = vpop.f32.mrb[0].mxu0
        %v3870 = vadd.f32 0.0, %v3869
        %v3871 = vpop.f32.mrb[0].mxu0
        %3872 = vmatprep.mubr.f32.mxu0 %v3641
        %3873 = vmatmul.mubr.f32.gmra.mrb[0].mxu0 %v3639
        %v3874 = vpop.f32.mrb[0].mxu0
        %v3875 = vadd.f32 0.0, %v3874
        %v3876 = vpop.f32.mrb[0].mxu0
        %3877 = vmatprep.mubr.f32.mxu0 %v3645
        %3878 = vmatmul.mubr.f32.gmra.mrb[0].mxu0 %v3643
        %v3879 = vpop.f32.mrb[0].mxu0
        %v3880 = vadd.f32 0.0, %v3879
        %v3881 = vpop.f32.mrb[0].mxu0
        %3882 = vmatprep.mubr.f32.mxu0 %v3649
        %3883 = vmatmul.mubr.f32.gmra.mrb[0].mxu0 %v3647
        %v3884 = vpop.f32.mrb[0].mxu0
        %v3885 = vadd.f32 0.0, %v3884
        %v3886 = vpop.f32.mrb[0].mxu0
        %3887 = vmatprep.mubr.f32.mxu0 %v3653
        %3888 = vmatmul.mubr.f32.gmra.mrb[0].mxu0 %v3651
        %v3889 = vpop.f32.mrb[0].mxu0
        %v3890 = vadd.f32 0.0, %v3889
        %v3891 = vpop.f32.mrb[0].mxu0
        %3892 = vmatprep.mubr.f32.mxu0 %v3657
        %3893 = vmatmul.mubr.f32.gmra.mrb[0].mxu0 %v3655
        %v3894 = vpop.f32.mrb[0].mxu0
        %v3895 = vadd.f32 0.0, %v3894
        %v3896 = vpop.f32.mrb[0].mxu0
        %3897 = vdwg.mxu0
        %v3898 = vmul.f32 %v3329, 0.00625
        %v3899 = vmul.f32 %v3334, 0.00625
        %v3900 = vmul.f32 %v3339, 0.00625
        %v3901 = vmul.f32 %v3344, 0.00625
        %v3902 = vmul.f32 %v3349, 0.00625
        %v3903 = vmul.f32 %v3354, 0.00625
        %v3904 = vmul.f32 %v3359, 0.00625
        %v3905 = vmul.f32 %v3364, 0.00625
        %v3906 = vmul.f32 %v3369, 0.00625
        %v3907 = vmul.f32 %v3374, 0.00625
        %v3908 = vmul.f32 %v3379, 0.00625
        %v3909 = vmul.f32 %v3384, 0.00625
        %v3910 = vmul.f32 %v3389, 0.00625
        %v3911 = vmul.f32 %v3394, 0.00625
        %v3912 = vmul.f32 %v3399, 0.00625
        %v3913 = vmul.f32 %v3404, 0.00625
        %v3914 = vmul.f32 %v3409, 0.00625
        %v3915 = vmul.f32 %v3414, 0.00625
        %v3916 = vmul.f32 %v3419, 0.00625
        %v3917 = vmul.f32 %v3424, 0.00625
        %v3918 = vmul.f32 %v3429, 0.00625
        %v3919 = vmul.f32 %v3434, 0.00625
        %v3920 = vmul.f32 %v3439, 0.00625
        %v3921 = vmul.f32 %v3444, 0.00625
        %v3922 = vmul.f32 %v3449, 0.00625
        %v3923 = vmul.f32 %v3775, 0.00625
        %v3924 = vmul.f32 %v3780, 0.00625
        %v3925 = vmul.f32 %v3785, 0.00625
        %v3926 = vmul.f32 %v3790, 0.00625
        %v3927 = vmul.f32 %v3795, 0.00625
        %v3928 = vmul.f32 %v3800, 0.00625
        %v3929 = vmul.f32 %v3805, 0.00625
        %v3930 = vmul.f32 %v3810, 0.00625
        %v3931 = vmul.f32 %v3815, 0.00625
        %v3932 = vmul.f32 %v3820, 0.00625
        %v3933 = vmul.f32 %v3825, 0.00625
        %v3934 = vmul.f32 %v3830, 0.00625
        %v3935 = vmul.f32 %v3835, 0.00625
        %v3936 = vmul.f32 %v3840, 0.00625
        %v3937 = vmul.f32 %v3845, 0.00625
        %v3938 = vmul.f32 %v3850, 0.00625
        %v3939 = vmul.f32 %v3855, 0.00625
        %v3940 = vmul.f32 %v3860, 0.00625
        %v3941 = vmul.f32 %v3865, 0.00625
        %v3942 = vmul.f32 %v3870, 0.00625
        %v3943 = vmul.f32 %v3875, 0.00625
        %v3944 = vmul.f32 %v3880, 0.00625
        %v3945 = vmul.f32 %v3885, 0.00625
        %v3946 = vmul.f32 %v3890, 0.00625
        %v3947 = vmul.f32 %v3895, 0.00625
        %v3948 = vmul.f32 %v3898, %v3898
        %v3949 = vmul.f32 %v3899, %v3899
        %v3950 = vmul.f32 %v3900, %v3900
        %v3951 = vmul.f32 %v3901, %v3901
        %v3952 = vmul.f32 %v3902, %v3902
        %v3953 = vmul.f32 %v3903, %v3903
        %v3954 = vmul.f32 %v3904, %v3904
        %v3955 = vmul.f32 %v3905, %v3905
        %v3956 = vmul.f32 %v3906, %v3906
        %v3957 = vmul.f32 %v3907, %v3907
        %v3958 = vmul.f32 %v3908, %v3908
        %v3959 = vmul.f32 %v3909, %v3909
        %v3960 = vmul.f32 %v3910, %v3910
        %v3961 = vmul.f32 %v3911, %v3911
        %v3962 = vmul.f32 %v3912, %v3912
        %v3963 = vmul.f32 %v3913, %v3913
        %v3964 = vmul.f32 %v3914, %v3914
        %v3965 = vmul.f32 %v3915, %v3915
        %v3966 = vmul.f32 %v3916, %v3916
        %v3967 = vmul.f32 %v3917, %v3917
        %v3968 = vmul.f32 %v3918, %v3918
        %v3969 = vmul.f32 %v3919, %v3919
        %v3970 = vmul.f32 %v3920, %v3920
        %v3971 = vmul.f32 %v3921, %v3921
        %v3972 = vmul.f32 %v3922, %v3922
        %v3973 = vsub.f32 %v3923, %v3948
        %v3974 = vsub.f32 %v3924, %v3949
        %v3975 = vsub.f32 %v3925, %v3950
        %v3976 = vsub.f32 %v3926, %v3951
        %v3977 = vsub.f32 %v3927, %v3952
        %v3978 = vsub.f32 %v3928, %v3953
        %v3979 = vsub.f32 %v3929, %v3954
        %v3980 = vsub.f32 %v3930, %v3955
        %v3981 = vsub.f32 %v3931, %v3956
        %v3982 = vsub.f32 %v3932, %v3957
        %v3983 = vsub.f32 %v3933, %v3958
        %v3984 = vsub.f32 %v3934, %v3959
        %v3985 = vsub.f32 %v3935, %v3960
        %v3986 = vsub.f32 %v3936, %v3961
        %v3987 = vsub.f32 %v3937, %v3962
        %v3988 = vsub.f32 %v3938, %v3963
        %v3989 = vsub.f32 %v3939, %v3964
        %v3990 = vsub.f32 %v3940, %v3965
        %v3991 = vsub.f32 %v3941, %v3966
        %v3992 = vsub.f32 %v3942, %v3967
        %v3993 = vsub.f32 %v3943, %v3968
        %v3994 = vsub.f32 %v3944, %v3969
        %v3995 = vsub.f32 %v3945, %v3970
        %v3996 = vsub.f32 %v3946, %v3971
        %v3997 = vsub.f32 %v3947, %v3972
        %v3998 = vmax.f32 %v3973, 0.0
        %v3999 = vmax.f32 %v3974, 0.0
        %v4000 = vmax.f32 %v3975, 0.0
        %v4001 = vmax.f32 %v3976, 0.0
        %v4002 = vmax.f32 %v3977, 0.0
        %v4003 = vmax.f32 %v3978, 0.0
        %v4004 = vmax.f32 %v3979, 0.0
        %v4005 = vmax.f32 %v3980, 0.0
        %v4006 = vmax.f32 %v3981, 0.0
        %v4007 = vmax.f32 %v3982, 0.0
        %v4008 = vmax.f32 %v3983, 0.0
        %v4009 = vmax.f32 %v3984, 0.0
        %v4010 = vmax.f32 %v3985, 0.0
        %v4011 = vmax.f32 %v3986, 0.0
        %v4012 = vmax.f32 %v3987, 0.0
        %v4013 = vmax.f32 %v3988, 0.0
        %v4014 = vmax.f32 %v3989, 0.0
        %v4015 = vmax.f32 %v3990, 0.0
        %v4016 = vmax.f32 %v3991, 0.0
        %v4017 = vmax.f32 %v3992, 0.0
        %v4018 = vmax.f32 %v3993, 0.0
        %v4019 = vmax.f32 %v3994, 0.0
        %v4020 = vmax.f32 %v3995, 0.0
        %v4021 = vmax.f32 %v3996, 0.0
        %v4022 = vmax.f32 %v3997, 0.0
        %4024 = vset.pattern.permute.xlu0 0
        %4025 = vperm.xlu0 %4024, %v3898
        %v4026 = vpop.permute.xlu0 %4025
        %4028 = vset.pattern.permute.xlu0 0
        %4029 = vperm.xlu0 %4028, %v3899
        %v4030 = vpop.permute.xlu0 %4029
        %4032 = vset.pattern.permute.xlu0 0
        %4033 = vperm.xlu0 %4032, %v3900
        %v4034 = vpop.permute.xlu0 %4033
        %4036 = vset.pattern.permute.xlu0 0
        %4037 = vperm.xlu0 %4036, %v3901
        %v4038 = vpop.permute.xlu0 %4037
        %4040 = vset.pattern.permute.xlu0 0
        %4041 = vperm.xlu0 %4040, %v3902
        %v4042 = vpop.permute.xlu0 %4041
        %4044 = vset.pattern.permute.xlu0 0
        %4045 = vperm.xlu0 %4044, %v3903
        %v4046 = vpop.permute.xlu0 %4045
        %4048 = vset.pattern.permute.xlu0 0
        %4049 = vperm.xlu0 %4048, %v3904
        %v4050 = vpop.permute.xlu0 %4049
        %4052 = vset.pattern.permute.xlu0 0
        %4053 = vperm.xlu0 %4052, %v3905
        %v4054 = vpop.permute.xlu0 %4053
        %4056 = vset.pattern.permute.xlu0 0
        %4057 = vperm.xlu0 %4056, %v3906
        %v4058 = vpop.permute.xlu0 %4057
        %4060 = vset.pattern.permute.xlu0 0
        %4061 = vperm.xlu0 %4060, %v3907
        %v4062 = vpop.permute.xlu0 %4061
        %4064 = vset.pattern.permute.xlu0 0
        %4065 = vperm.xlu0 %4064, %v3908
        %v4066 = vpop.permute.xlu0 %4065
        %4068 = vset.pattern.permute.xlu0 0
        %4069 = vperm.xlu0 %4068, %v3909
        %v4070 = vpop.permute.xlu0 %4069
        %4072 = vset.pattern.permute.xlu0 0
        %4073 = vperm.xlu0 %4072, %v3910
        %v4074 = vpop.permute.xlu0 %4073
        %4076 = vset.pattern.permute.xlu0 0
        %4077 = vperm.xlu0 %4076, %v3911
        %v4078 = vpop.permute.xlu0 %4077
        %4080 = vset.pattern.permute.xlu0 0
        %4081 = vperm.xlu0 %4080, %v3912
        %v4082 = vpop.permute.xlu0 %4081
        %4084 = vset.pattern.permute.xlu0 0
        %4085 = vperm.xlu0 %4084, %v3913
        %v4086 = vpop.permute.xlu0 %4085
        %4088 = vset.pattern.permute.xlu0 0
        %4089 = vperm.xlu0 %4088, %v3914
        %v4090 = vpop.permute.xlu0 %4089
        %4092 = vset.pattern.permute.xlu0 0
        %4093 = vperm.xlu0 %4092, %v3915
        %v4094 = vpop.permute.xlu0 %4093
        %4096 = vset.pattern.permute.xlu0 0
        %4097 = vperm.xlu0 %4096, %v3916
        %v4098 = vpop.permute.xlu0 %4097
        %4100 = vset.pattern.permute.xlu0 0
        %4101 = vperm.xlu0 %4100, %v3917
        %v4102 = vpop.permute.xlu0 %4101
        %4104 = vset.pattern.permute.xlu0 0
        %4105 = vperm.xlu0 %4104, %v3918
        %v4106 = vpop.permute.xlu0 %4105
        %4108 = vset.pattern.permute.xlu0 0
        %4109 = vperm.xlu0 %4108, %v3919
        %v4110 = vpop.permute.xlu0 %4109
        %4112 = vset.pattern.permute.xlu0 0
        %4113 = vperm.xlu0 %4112, %v3920
        %v4114 = vpop.permute.xlu0 %4113
        %4116 = vset.pattern.permute.xlu0 0
        %4117 = vperm.xlu0 %4116, %v3921
        %v4118 = vpop.permute.xlu0 %4117
        %4120 = vset.pattern.permute.xlu0 0
        %4121 = vperm.xlu0 %4120, %v3922
        %v4122 = vpop.permute.xlu0 %4121
        %v4123 = vrot.slane %v4026, 2
        %v4124 = vrot.slane %v4030, 2
        %v4125 = vsel %vm2314, %v4123, %v4124
        %v4126 = vrot.slane %v4034, 2
        %v4127 = vsel %vm2314, %v4124, %v4126
        %v4128 = vrot.slane %v4038, 2
        %v4129 = vsel %vm2314, %v4126, %v4128
        %v4130 = vrot.slane %v4042, 2
        %v4131 = vsel %vm2314, %v4128, %v4130
        %v4132 = vrot.slane %v4046, 2
        %v4133 = vsel %vm2314, %v4130, %v4132
        %v4134 = vrot.slane %v4050, 2
        %v4135 = vsel %vm2314, %v4132, %v4134
        %v4136 = vrot.slane %v4054, 2
        %v4137 = vsel %vm2314, %v4134, %v4136
        %v4138 = vrot.slane %v4058, 2
        %v4139 = vsel %vm2314, %v4136, %v4138
        %v4140 = vrot.slane %v4062, 2
        %v4141 = vsel %vm2314, %v4138, %v4140
        %v4142 = vrot.slane %v4066, 2
        %v4143 = vsel %vm2314, %v4140, %v4142
        %v4144 = vrot.slane %v4070, 2
        %v4145 = vsel %vm2314, %v4142, %v4144
        %v4146 = vrot.slane %v4074, 2
        %v4147 = vsel %vm2314, %v4144, %v4146
        %v4148 = vrot.slane %v4078, 2
        %v4149 = vsel %vm2314, %v4146, %v4148
        %v4150 = vrot.slane %v4082, 2
        %v4151 = vsel %vm2314, %v4148, %v4150
        %v4152 = vrot.slane %v4086, 2
        %v4153 = vsel %vm2314, %v4150, %v4152
        %v4154 = vrot.slane %v4090, 2
        %v4155 = vsel %vm2314, %v4152, %v4154
        %v4156 = vrot.slane %v4094, 2
        %v4157 = vsel %vm2314, %v4154, %v4156
        %v4158 = vrot.slane %v4098, 2
        %v4159 = vsel %vm2314, %v4156, %v4158
        %v4160 = vrot.slane %v4102, 2
        %v4161 = vsel %vm2314, %v4158, %v4160
        %v4162 = vrot.slane %v4106, 2
        %v4163 = vsel %vm2314, %v4160, %v4162
        %v4164 = vrot.slane %v4110, 2
        %v4165 = vsel %vm2314, %v4162, %v4164
        %v4166 = vrot.slane %v4114, 2
        %v4167 = vsel %vm2314, %v4164, %v4166
        %v4168 = vrot.slane %v4118, 2
        %v4169 = vsel %vm2314, %v4166, %v4168
        %v4170 = vrot.slane %v4122, 2
        %v4171 = vsel %vm2314, %v4168, %v4170
        %v4198 = vsub.f32 %v3003, %v4123
        %v4199 = vsub.f32 %v3004, %v4123
        %v4200 = vsub.f32 %v3005, %v4125
        %v4201 = vsub.f32 %v3006, %v4125
        %v4202 = vsub.f32 %v3007, %v4127
        %v4203 = vsub.f32 %v3008, %v4127
        %v4204 = vsub.f32 %v3009, %v4129
        %v4205 = vsub.f32 %v3010, %v4129
        %v4206 = vsub.f32 %v3011, %v4131
        %v4207 = vsub.f32 %v3012, %v4131
        %v4208 = vsub.f32 %v3013, %v4133
        %v4209 = vsub.f32 %v3014, %v4133
        %v4210 = vsub.f32 %v3015, %v4135
        %v4211 = vsub.f32 %v3016, %v4135
        %v4212 = vsub.f32 %v3017, %v4137
        %v4213 = vsub.f32 %v3018, %v4137
        %v4214 = vsub.f32 %v3019, %v4139
        %v4215 = vsub.f32 %v3020, %v4139
        %v4216 = vsub.f32 %v3021, %v4141
        %v4217 = vsub.f32 %v3022, %v4141
        %v4218 = vsub.f32 %v3023, %v4143
        %v4219 = vsub.f32 %v3024, %v4143
        %v4220 = vsub.f32 %v3025, %v4145
        %v4221 = vsub.f32 %v3026, %v4145
        %v4222 = vsub.f32 %v3027, %v4147
        %v4223 = vsub.f32 %v3028, %v4147
        %v4224 = vsub.f32 %v3029, %v4149
        %v4225 = vsub.f32 %v3030, %v4149
        %v4226 = vsub.f32 %v3031, %v4151
        %v4227 = vsub.f32 %v3032, %v4151
        %v4228 = vsub.f32 %v3033, %v4153
        %v4229 = vsub.f32 %v3034, %v4153
        %v4230 = vsub.f32 %v3035, %v4155
        %v4231 = vsub.f32 %v3036, %v4155
        %v4232 = vsub.f32 %v3037, %v4157
        %v4233 = vsub.f32 %v3038, %v4157
        %v4234 = vsub.f32 %v3039, %v4159
        %v4235 = vsub.f32 %v3040, %v4159
        %v4236 = vsub.f32 %v3041, %v4161
        %v4237 = vsub.f32 %v3042, %v4161
        %v4238 = vsub.f32 %v3043, %v4163
        %v4239 = vsub.f32 %v3044, %v4163
        %v4240 = vsub.f32 %v3045, %v4165
        %v4241 = vsub.f32 %v3046, %v4165
        %v4242 = vsub.f32 %v3047, %v4167
        %v4243 = vsub.f32 %v3048, %v4167
        %v4244 = vsub.f32 %v3049, %v4169
        %v4245 = vsub.f32 %v3050, %v4169
        %v4246 = vsub.f32 %v3051, %v4171
        %v4247 = vsub.f32 %v3052, %v4171
        %v4248 = vsub.f32 %v3053, %v4170
        %v4249 = vsub.f32 %v3054, %v4170
        %v4250 = vadd.f32 %v3998, 1e-05
        %v4251 = vadd.f32 %v3999, 1e-05
        %v4252 = vadd.f32 %v4000, 1e-05
        %v4253 = vadd.f32 %v4001, 1e-05
        %v4254 = vadd.f32 %v4002, 1e-05
        %v4255 = vadd.f32 %v4003, 1e-05
        %v4256 = vadd.f32 %v4004, 1e-05
        %v4257 = vadd.f32 %v4005, 1e-05
        %v4258 = vadd.f32 %v4006, 1e-05
        %v4259 = vadd.f32 %v4007, 1e-05
        %v4260 = vadd.f32 %v4008, 1e-05
        %v4261 = vadd.f32 %v4009, 1e-05
        %v4262 = vadd.f32 %v4010, 1e-05
        %v4263 = vadd.f32 %v4011, 1e-05
        %v4264 = vadd.f32 %v4012, 1e-05
        %v4265 = vadd.f32 %v4013, 1e-05
        %v4266 = vadd.f32 %v4014, 1e-05
        %v4267 = vadd.f32 %v4015, 1e-05
        %v4268 = vadd.f32 %v4016, 1e-05
        %v4269 = vadd.f32 %v4017, 1e-05
        %v4270 = vadd.f32 %v4018, 1e-05
        %v4271 = vadd.f32 %v4019, 1e-05
        %v4272 = vadd.f32 %v4020, 1e-05
        %v4273 = vadd.f32 %v4021, 1e-05
        %v4274 = vadd.f32 %v4022, 1e-05
        %v4275 = vrsqrt.pop %v4250
        %v4276 = vrsqrt.pop %v4251
        %v4277 = vrsqrt.pop %v4252
        %v4278 = vrsqrt.pop %v4253
        %v4279 = vrsqrt.pop %v4254
        %v4280 = vrsqrt.pop %v4255
        %v4281 = vrsqrt.pop %v4256
        %v4282 = vrsqrt.pop %v4257
        %v4283 = vrsqrt.pop %v4258
        %v4284 = vrsqrt.pop %v4259
        %v4285 = vrsqrt.pop %v4260
        %v4286 = vrsqrt.pop %v4261
        %v4287 = vrsqrt.pop %v4262
        %v4288 = vrsqrt.pop %v4263
        %v4289 = vrsqrt.pop %v4264
        %v4290 = vrsqrt.pop %v4265
        %v4291 = vrsqrt.pop %v4266
        %v4292 = vrsqrt.pop %v4267
        %v4293 = vrsqrt.pop %v4268
        %v4294 = vrsqrt.pop %v4269
        %v4295 = vrsqrt.pop %v4270
        %v4296 = vrsqrt.pop %v4271
        %v4297 = vrsqrt.pop %v4272
        %v4298 = vrsqrt.pop %v4273
        %v4299 = vrsqrt.pop %v4274
        %4301 = vset.pattern.permute.xlu0 0
        %4302 = vperm.xlu0 %4301, %v4275
        %v4303 = vpop.permute.xlu0 %4302
        %4305 = vset.pattern.permute.xlu0 0
        %4306 = vperm.xlu0 %4305, %v4276
        %v4307 = vpop.permute.xlu0 %4306
        %4309 = vset.pattern.permute.xlu0 0
        %4310 = vperm.xlu0 %4309, %v4277
        %v4311 = vpop.permute.xlu0 %4310
        %4313 = vset.pattern.permute.xlu0 0
        %4314 = vperm.xlu0 %4313, %v4278
        %v4315 = vpop.permute.xlu0 %4314
        %4317 = vset.pattern.permute.xlu0 0
        %4318 = vperm.xlu0 %4317, %v4279
        %v4319 = vpop.permute.xlu0 %4318
        %4321 = vset.pattern.permute.xlu0 0
        %4322 = vperm.xlu0 %4321, %v4280
        %v4323 = vpop.permute.xlu0 %4322
        %4325 = vset.pattern.permute.xlu0 0
        %4326 = vperm.xlu0 %4325, %v4281
        %v4327 = vpop.permute.xlu0 %4326
        %4329 = vset.pattern.permute.xlu0 0
        %4330 = vperm.xlu0 %4329, %v4282
        %v4331 = vpop.permute.xlu0 %4330
        %4333 = vset.pattern.permute.xlu0 0
        %4334 = vperm.xlu0 %4333, %v4283
        %v4335 = vpop.permute.xlu0 %4334
        %4337 = vset.pattern.permute.xlu0 0
        %4338 = vperm.xlu0 %4337, %v4284
        %v4339 = vpop.permute.xlu0 %4338
        %4341 = vset.pattern.permute.xlu0 0
        %4342 = vperm.xlu0 %4341, %v4285
        %v4343 = vpop.permute.xlu0 %4342
        %4345 = vset.pattern.permute.xlu0 0
        %4346 = vperm.xlu0 %4345, %v4286
        %v4347 = vpop.permute.xlu0 %4346
        %4349 = vset.pattern.permute.xlu0 0
        %4350 = vperm.xlu0 %4349, %v4287
        %v4351 = vpop.permute.xlu0 %4350
        %4353 = vset.pattern.permute.xlu0 0
        %4354 = vperm.xlu0 %4353, %v4288
        %v4355 = vpop.permute.xlu0 %4354
        %4357 = vset.pattern.permute.xlu0 0
        %4358 = vperm.xlu0 %4357, %v4289
        %v4359 = vpop.permute.xlu0 %4358
        %4361 = vset.pattern.permute.xlu0 0
        %4362 = vperm.xlu0 %4361, %v4290
        %v4363 = vpop.permute.xlu0 %4362
        %4365 = vset.pattern.permute.xlu0 0
        %4366 = vperm.xlu0 %4365, %v4291
        %v4367 = vpop.permute.xlu0 %4366
        %4369 = vset.pattern.permute.xlu0 0
        %4370 = vperm.xlu0 %4369, %v4292
        %v4371 = vpop.permute.xlu0 %4370
        %4373 = vset.pattern.permute.xlu0 0
        %4374 = vperm.xlu0 %4373, %v4293
        %v4375 = vpop.permute.xlu0 %4374
        %4377 = vset.pattern.permute.xlu0 0
        %4378 = vperm.xlu0 %4377, %v4294
        %v4379 = vpop.permute.xlu0 %4378
        %4381 = vset.pattern.permute.xlu0 0
        %4382 = vperm.xlu0 %4381, %v4295
        %v4383 = vpop.permute.xlu0 %4382
        %4385 = vset.pattern.permute.xlu0 0
        %4386 = vperm.xlu0 %4385, %v4296
        %v4387 = vpop.permute.xlu0 %4386
        %4389 = vset.pattern.permute.xlu0 0
        %4390 = vperm.xlu0 %4389, %v4297
        %v4391 = vpop.permute.xlu0 %4390
        %4393 = vset.pattern.permute.xlu0 0
        %4394 = vperm.xlu0 %4393, %v4298
        %v4395 = vpop.permute.xlu0 %4394
        %4397 = vset.pattern.permute.xlu0 0
        %4398 = vperm.xlu0 %4397, %v4299
        %v4399 = vpop.permute.xlu0 %4398
        %v4400 = vrot.slane %v4303, 2
        %v4401 = vrot.slane %v4307, 2
        %v4402 = vsel %vm2314, %v4400, %v4401
        %v4403 = vrot.slane %v4311, 2
        %v4404 = vsel %vm2314, %v4401, %v4403
        %v4405 = vrot.slane %v4315, 2
        %v4406 = vsel %vm2314, %v4403, %v4405
        %v4407 = vrot.slane %v4319, 2
        %v4408 = vsel %vm2314, %v4405, %v4407
        %v4409 = vrot.slane %v4323, 2
        %v4410 = vsel %vm2314, %v4407, %v4409
        %v4411 = vrot.slane %v4327, 2
        %v4412 = vsel %vm2314, %v4409, %v4411
        %v4413 = vrot.slane %v4331, 2
        %v4414 = vsel %vm2314, %v4411, %v4413
        %v4415 = vrot.slane %v4335, 2
        %v4416 = vsel %vm2314, %v4413, %v4415
        %v4417 = vrot.slane %v4339, 2
        %v4418 = vsel %vm2314, %v4415, %v4417
        %v4419 = vrot.slane %v4343, 2
        %v4420 = vsel %vm2314, %v4417, %v4419
        %v4421 = vrot.slane %v4347, 2
        %v4422 = vsel %vm2314, %v4419, %v4421
        %v4423 = vrot.slane %v4351, 2
        %v4424 = vsel %vm2314, %v4421, %v4423
        %v4425 = vrot.slane %v4355, 2
        %v4426 = vsel %vm2314, %v4423, %v4425
        %v4427 = vrot.slane %v4359, 2
        %v4428 = vsel %vm2314, %v4425, %v4427
        %v4429 = vrot.slane %v4363, 2
        %v4430 = vsel %vm2314, %v4427, %v4429
        %v4431 = vrot.slane %v4367, 2
        %v4432 = vsel %vm2314, %v4429, %v4431
        %v4433 = vrot.slane %v4371, 2
        %v4434 = vsel %vm2314, %v4431, %v4433
        %v4435 = vrot.slane %v4375, 2
        %v4436 = vsel %vm2314, %v4433, %v4435
        %v4437 = vrot.slane %v4379, 2
        %v4438 = vsel %vm2314, %v4435, %v4437
        %v4439 = vrot.slane %v4383, 2
        %v4440 = vsel %vm2314, %v4437, %v4439
        %v4441 = vrot.slane %v4387, 2
        %v4442 = vsel %vm2314, %v4439, %v4441
        %v4443 = vrot.slane %v4391, 2
        %v4444 = vsel %vm2314, %v4441, %v4443
        %v4445 = vrot.slane %v4395, 2
        %v4446 = vsel %vm2314, %v4443, %v4445
        %v4447 = vrot.slane %v4399, 2
        %v4448 = vsel %vm2314, %v4445, %v4447
        %v4475 = vmul.f32 %v4198, %v4400
        %v4476 = vmul.f32 %v4199, %v4400
        %v4477 = vmul.f32 %v4200, %v4402
        %v4478 = vmul.f32 %v4201, %v4402
        %v4479 = vmul.f32 %v4202, %v4404
        %v4480 = vmul.f32 %v4203, %v4404
        %v4481 = vmul.f32 %v4204, %v4406
        %v4482 = vmul.f32 %v4205, %v4406
        %v4483 = vmul.f32 %v4206, %v4408
        %v4484 = vmul.f32 %v4207, %v4408
        %v4485 = vmul.f32 %v4208, %v4410
        %v4486 = vmul.f32 %v4209, %v4410
        %v4487 = vmul.f32 %v4210, %v4412
        %v4488 = vmul.f32 %v4211, %v4412
        %v4489 = vmul.f32 %v4212, %v4414
        %v4490 = vmul.f32 %v4213, %v4414
        %v4491 = vmul.f32 %v4214, %v4416
        %v4492 = vmul.f32 %v4215, %v4416
        %v4493 = vmul.f32 %v4216, %v4418
        %v4494 = vmul.f32 %v4217, %v4418
        %v4495 = vmul.f32 %v4218, %v4420
        %v4496 = vmul.f32 %v4219, %v4420
        %v4497 = vmul.f32 %v4220, %v4422
        %v4498 = vmul.f32 %v4221, %v4422
        %v4499 = vmul.f32 %v4222, %v4424
        %v4500 = vmul.f32 %v4223, %v4424
        %v4501 = vmul.f32 %v4224, %v4426
        %v4502 = vmul.f32 %v4225, %v4426
        %v4503 = vmul.f32 %v4226, %v4428
        %v4504 = vmul.f32 %v4227, %v4428
        %v4505 = vmul.f32 %v4228, %v4430
        %v4506 = vmul.f32 %v4229, %v4430
        %v4507 = vmul.f32 %v4230, %v4432
        %v4508 = vmul.f32 %v4231, %v4432
        %v4509 = vmul.f32 %v4232, %v4434
        %v4510 = vmul.f32 %v4233, %v4434
        %v4511 = vmul.f32 %v4234, %v4436
        %v4512 = vmul.f32 %v4235, %v4436
        %v4513 = vmul.f32 %v4236, %v4438
        %v4514 = vmul.f32 %v4237, %v4438
        %v4515 = vmul.f32 %v4238, %v4440
        %v4516 = vmul.f32 %v4239, %v4440
        %v4517 = vmul.f32 %v4240, %v4442
        %v4518 = vmul.f32 %v4241, %v4442
        %v4519 = vmul.f32 %v4242, %v4444
        %v4520 = vmul.f32 %v4243, %v4444
        %v4521 = vmul.f32 %v4244, %v4446
        %v4522 = vmul.f32 %v4245, %v4446
        %v4523 = vmul.f32 %v4246, %v4448
        %v4524 = vmul.f32 %v4247, %v4448
        %v4525 = vmul.f32 %v4248, %v4447
        %v4526 = vmul.f32 %v4249, %v4447
        %v4528 = vlaneseq
        %v4529 = vshrl.u32 %v4528, 7
        %v4530 = vsub.s32 0, %v4529
        %v4531 = vrot.slane %v3055, %v4530
        %v4532 = vlaneseq
        %v4533 = vshrl.u32 %v4532, 7
        %v4534 = vsub.s32 1, %v4533
        %v4535 = vrot.slane %v3055, %v4534
        %v4538 = vmul.f32 %v4475, %v4531
        %v4539 = vmul.f32 %v4476, %v4535
        %v4540 = vmul.f32 %v4477, %v4531
        %v4541 = vmul.f32 %v4478, %v4535
        %v4542 = vmul.f32 %v4479, %v4531
        %v4543 = vmul.f32 %v4480, %v4535
        %v4544 = vmul.f32 %v4481, %v4531
        %v4545 = vmul.f32 %v4482, %v4535
        %v4546 = vmul.f32 %v4483, %v4531
        %v4547 = vmul.f32 %v4484, %v4535
        %v4548 = vmul.f32 %v4485, %v4531
        %v4549 = vmul.f32 %v4486, %v4535
        %v4550 = vmul.f32 %v4487, %v4531
        %v4551 = vmul.f32 %v4488, %v4535
        %v4552 = vmul.f32 %v4489, %v4531
        %v4553 = vmul.f32 %v4490, %v4535
        %v4554 = vmul.f32 %v4491, %v4531
        %v4555 = vmul.f32 %v4492, %v4535
        %v4556 = vmul.f32 %v4493, %v4531
        %v4557 = vmul.f32 %v4494, %v4535
        %v4558 = vmul.f32 %v4495, %v4531
        %v4559 = vmul.f32 %v4496, %v4535
        %v4560 = vmul.f32 %v4497, %v4531
        %v4561 = vmul.f32 %v4498, %v4535
        %v4562 = vmul.f32 %v4499, %v4531
        %v4563 = vmul.f32 %v4500, %v4535
        %v4564 = vmul.f32 %v4501, %v4531
        %v4565 = vmul.f32 %v4502, %v4535
        %v4566 = vmul.f32 %v4503, %v4531
        %v4567 = vmul.f32 %v4504, %v4535
        %v4568 = vmul.f32 %v4505, %v4531
        %v4569 = vmul.f32 %v4506, %v4535
        %v4570 = vmul.f32 %v4507, %v4531
        %v4571 = vmul.f32 %v4508, %v4535
        %v4572 = vmul.f32 %v4509, %v4531
        %v4573 = vmul.f32 %v4510, %v4535
        %v4574 = vmul.f32 %v4511, %v4531
        %v4575 = vmul.f32 %v4512, %v4535
        %v4576 = vmul.f32 %v4513, %v4531
        %v4577 = vmul.f32 %v4514, %v4535
        %v4578 = vmul.f32 %v4515, %v4531
        %v4579 = vmul.f32 %v4516, %v4535
        %v4580 = vmul.f32 %v4517, %v4531
        %v4581 = vmul.f32 %v4518, %v4535
        %v4582 = vmul.f32 %v4519, %v4531
        %v4583 = vmul.f32 %v4520, %v4535
        %v4584 = vmul.f32 %v4521, %v4531
        %v4585 = vmul.f32 %v4522, %v4535
        %v4586 = vmul.f32 %v4523, %v4531
        %v4587 = vmul.f32 %v4524, %v4535
        %v4588 = vmul.f32 %v4525, %v4531
        %v4589 = vmul.f32 %v4526, %v4535
        %v4591 = vlaneseq
        %v4592 = vshrl.u32 %v4591, 7
        %v4593 = vsub.s32 0, %v4592
        %v4594 = vrot.slane %v3056, %v4593
        %v4595 = vlaneseq
        %v4596 = vshrl.u32 %v4595, 7
        %v4597 = vsub.s32 1, %v4596
        %v4598 = vrot.slane %v3056, %v4597
        %v4601 = vadd.f32 %v4538, %v4594
        %v4602 = vadd.f32 %v4539, %v4598
        %v4603 = vadd.f32 %v4540, %v4594
        %v4604 = vadd.f32 %v4541, %v4598
        %v4605 = vadd.f32 %v4542, %v4594
        %v4606 = vadd.f32 %v4543, %v4598
        %v4607 = vadd.f32 %v4544, %v4594
        %v4608 = vadd.f32 %v4545, %v4598
        %v4609 = vadd.f32 %v4546, %v4594
        %v4610 = vadd.f32 %v4547, %v4598
        %v4611 = vadd.f32 %v4548, %v4594
        %v4612 = vadd.f32 %v4549, %v4598
        %v4613 = vadd.f32 %v4550, %v4594
        %v4614 = vadd.f32 %v4551, %v4598
        %v4615 = vadd.f32 %v4552, %v4594
        %v4616 = vadd.f32 %v4553, %v4598
        %v4617 = vadd.f32 %v4554, %v4594
        %v4618 = vadd.f32 %v4555, %v4598
        %v4619 = vadd.f32 %v4556, %v4594
        %v4620 = vadd.f32 %v4557, %v4598
        %v4621 = vadd.f32 %v4558, %v4594
        %v4622 = vadd.f32 %v4559, %v4598
        %v4623 = vadd.f32 %v4560, %v4594
        %v4624 = vadd.f32 %v4561, %v4598
        %v4625 = vadd.f32 %v4562, %v4594
        %v4626 = vadd.f32 %v4563, %v4598
        %v4627 = vadd.f32 %v4564, %v4594
        %v4628 = vadd.f32 %v4565, %v4598
        %v4629 = vadd.f32 %v4566, %v4594
        %v4630 = vadd.f32 %v4567, %v4598
        %v4631 = vadd.f32 %v4568, %v4594
        %v4632 = vadd.f32 %v4569, %v4598
        %v4633 = vadd.f32 %v4570, %v4594
        %v4634 = vadd.f32 %v4571, %v4598
        %v4635 = vadd.f32 %v4572, %v4594
        %v4636 = vadd.f32 %v4573, %v4598
        %v4637 = vadd.f32 %v4574, %v4594
        %v4638 = vadd.f32 %v4575, %v4598
        %v4639 = vadd.f32 %v4576, %v4594
        %v4640 = vadd.f32 %v4577, %v4598
        %v4641 = vadd.f32 %v4578, %v4594
        %v4642 = vadd.f32 %v4579, %v4598
        %v4643 = vadd.f32 %v4580, %v4594
        %v4644 = vadd.f32 %v4581, %v4598
        %v4645 = vadd.f32 %v4582, %v4594
        %v4646 = vadd.f32 %v4583, %v4598
        %v4647 = vadd.f32 %v4584, %v4594
        %v4648 = vadd.f32 %v4585, %v4598
        %v4649 = vadd.f32 %v4586, %v4594
        %v4650 = vadd.f32 %v4587, %v4598
        %v4651 = vadd.f32 %v4588, %v4594
        %v4652 = vadd.f32 %v4589, %v4598
        %v4653 = vpack.c.bf16 %v4603, %v4601
        %v4654 = vpack.c.bf16 %v4604, %v4602
        %v4655 = vpack.c.bf16 %v4607, %v4605
        %v4656 = vpack.c.bf16 %v4608, %v4606
        %v4657 = vpack.c.bf16 %v4611, %v4609
        %v4658 = vpack.c.bf16 %v4612, %v4610
        %v4659 = vpack.c.bf16 %v4615, %v4613
        %v4660 = vpack.c.bf16 %v4616, %v4614
        %v4661 = vpack.c.bf16 %v4619, %v4617
        %v4662 = vpack.c.bf16 %v4620, %v4618
        %v4663 = vpack.c.bf16 %v4623, %v4621
        %v4664 = vpack.c.bf16 %v4624, %v4622
        %v4665 = vpack.c.bf16 %v4627, %v4625
        %v4666 = vpack.c.bf16 %v4628, %v4626
        %v4667 = vpack.c.bf16 %v4631, %v4629
        %v4668 = vpack.c.bf16 %v4632, %v4630
        %v4669 = vpack.c.bf16 %v4635, %v4633
        %v4670 = vpack.c.bf16 %v4636, %v4634
        %v4671 = vpack.c.bf16 %v4639, %v4637
        %v4672 = vpack.c.bf16 %v4640, %v4638
        %v4673 = vpack.c.bf16 %v4643, %v4641
        %v4674 = vpack.c.bf16 %v4644, %v4642
        %v4675 = vpack.c.bf16 %v4647, %v4645
        %v4676 = vpack.c.bf16 %v4648, %v4646
        %v4677 = vpack.c.bf16 %v4651, %v4649
        %v4678 = vpack.c.bf16 %v4652, %v4650
        %v4679 = vld [vmem:[#allocation9] sm:$0xf]
        %v4680 = vld [vmem:[#allocation9 + $0x4] sm:$0xf]
        %v4681 = vld [vmem:[#allocation9 + $0x8] sm:$0xf]
        %v4682 = vld [vmem:[#allocation9 + $0xc] sm:$0xf]
        %v4683 = vld [vmem:[#allocation9 + $0x10] sm:$0xf]
        %v4684 = vld [vmem:[#allocation9 + $0x14] sm:$0xf]
        %v4685 = vld [vmem:[#allocation9 + $0x18] sm:$0xf]
        %v4686 = vld [vmem:[#allocation9 + $0x1c] sm:$0xf]
        %v4687 = vld [vmem:[#allocation9 + $0x20] sm:$0xf]
        %v4688 = vld [vmem:[#allocation9 + $0x24] sm:$0xf]
        %v4689 = vld [vmem:[#allocation9 + $0x28] sm:$0xf]
        %v4690 = vld [vmem:[#allocation9 + $0x2c] sm:$0xf]
        %v4691 = vld [vmem:[#allocation9 + $0x30] sm:$0xf]
        %v4692 = vld [vmem:[#allocation9 + $0x34] sm:$0xf]
        %v4693 = vld [vmem:[#allocation9 + $0x38] sm:$0xf]
        %v4694 = vld [vmem:[#allocation9 + $0x3c] sm:$0xf]
        %v4695 = vld [vmem:[#allocation9 + $0x40] sm:$0xf]
        %v4696 = vld [vmem:[#allocation9 + $0x44] sm:$0xf]
        %v4697 = vld [vmem:[#allocation9 + $0x48] sm:$0xf]
        %v4698 = vld [vmem:[#allocation9 + $0x4c] sm:$0xf]
        %v4699 = vld [vmem:[#allocation9 + $0x50] sm:$0xf]
        %v4700 = vld [vmem:[#allocation9 + $0x54] sm:$0xf]
        %v4701 = vld [vmem:[#allocation9 + $0x58] sm:$0xf]
        %v4702 = vld [vmem:[#allocation9 + $0x5c] sm:$0xf]
        %v4703 = vld [vmem:[#allocation9 + $0x60] sm:$0xf]
        %v4704 = vld [vmem:[#allocation9 + $0x64] sm:$0xf]
        %v4705 = vld [vmem:[#allocation9 + $0x68] sm:$0xf]
        %v4706 = vld [vmem:[#allocation9 + $0x6c] sm:$0xf]
        %v4707 = vld [vmem:[#allocation9 + $0x70] sm:$0xf]
        %v4708 = vld [vmem:[#allocation9 + $0x74] sm:$0xf]
        %v4709 = vld [vmem:[#allocation9 + $0x78] sm:$0xf]
        %v4710 = vld [vmem:[#allocation9 + $0x7c] sm:$0xf]
        %vm4737 = vcmask 1044480
        %v4738 = vrot.slane %v4653, 3
        %v4739 = vrot.slane %v4655, 3
        %v4740 = vsel %vm4737, %v4738, %v4739
        %v4741 = vrot.slane %v4654, 3
        %v4742 = vrot.slane %v4656, 3
        %v4743 = vsel %vm4737, %v4741, %v4742
        %v4744 = vrot.slane %v4657, 3
        %v4745 = vsel %vm4737, %v4739, %v4744
        %v4746 = vrot.slane %v4658, 3
        %v4747 = vsel %vm4737, %v4742, %v4746
        %v4748 = vrot.slane %v4659, 3
        %v4749 = vsel %vm4737, %v4744, %v4748
        %v4750 = vrot.slane %v4660, 3
        %v4751 = vsel %vm4737, %v4746, %v4750
        %v4752 = vrot.slane %v4661, 3
        %v4753 = vsel %vm4737, %v4748, %v4752
        %v4754 = vrot.slane %v4662, 3
        %v4755 = vsel %vm4737, %v4750, %v4754
        %v4756 = vrot.slane %v4663, 3
        %v4757 = vsel %vm4737, %v4752, %v4756
        %v4758 = vrot.slane %v4664, 3
        %v4759 = vsel %vm4737, %v4754, %v4758
        %v4760 = vrot.slane %v4665, 3
        %v4761 = vsel %vm4737, %v4756, %v4760
        %v4762 = vrot.slane %v4666, 3
        %v4763 = vsel %vm4737, %v4758, %v4762
        %v4764 = vrot.slane %v4667, 3
        %v4765 = vsel %vm4737, %v4760, %v4764
        %v4766 = vrot.slane %v4668, 3
        %v4767 = vsel %vm4737, %v4762, %v4766
        %v4768 = vrot.slane %v4669, 3
        %v4769 = vsel %vm4737, %v4764, %v4768
        %v4770 = vrot.slane %v4670, 3
        %v4771 = vsel %vm4737, %v4766, %v4770
        %v4772 = vrot.slane %v4671, 3
        %v4773 = vsel %vm4737, %v4768, %v4772
        %v4774 = vrot.slane %v4672, 3
        %v4775 = vsel %vm4737, %v4770, %v4774
        %v4776 = vrot.slane %v4673, 3
        %v4777 = vsel %vm4737, %v4772, %v4776
        %v4778 = vrot.slane %v4674, 3
        %v4779 = vsel %vm4737, %v4774, %v4778
        %v4780 = vrot.slane %v4675, 3
        %v4781 = vsel %vm4737, %v4776, %v4780
        %v4782 = vrot.slane %v4676, 3
        %v4783 = vsel %vm4737, %v4778, %v4782
        %v4784 = vrot.slane %v4677, 3
        %v4785 = vsel %vm4737, %v4780, %v4784
        %v4786 = vrot.slane %v4678, 3
        %v4787 = vsel %vm4737, %v4782, %v4786
        %v4846 = vunpack.c.l.b16 %v4679
        %v4847 = vunpack.c.l.b16 %v4680
        %v4848 = vunpack.c.l.b16 %v4681
        %v4849 = vunpack.c.l.b16 %v4682
        %v4850 = vunpack.c.l.b16 %v4683
        %v4851 = vunpack.c.l.b16 %v4684
        %v4852 = vunpack.c.l.b16 %v4685
        %v4853 = vunpack.c.l.b16 %v4686
        %v4854 = vunpack.c.l.b16 %v4687
        %v4855 = vunpack.c.l.b16 %v4688
        %v4856 = vunpack.c.l.b16 %v4689
        %v4857 = vunpack.c.l.b16 %v4690
        %v4858 = vunpack.c.l.b16 %v4691
        %v4859 = vunpack.c.l.b16 %v4692
        %v4860 = vunpack.c.l.b16 %v4693
        %v4861 = vunpack.c.l.b16 %v4694
        %v4862 = vunpack.c.l.b16 %v4695
        %v4863 = vunpack.c.l.b16 %v4696
        %v4864 = vunpack.c.l.b16 %v4697
        %v4865 = vunpack.c.l.b16 %v4698
        %v4866 = vunpack.c.l.b16 %v4699
        %v4867 = vunpack.c.l.b16 %v4700
        %v4868 = vunpack.c.l.b16 %v4701
        %v4869 = vunpack.c.l.b16 %v4702
        %v4870 = vunpack.c.l.b16 %v4703
        %v4871 = vunpack.c.l.b16 %v4704
        %v4872 = vunpack.c.l.b16 %v4705
        %v4873 = vunpack.c.l.b16 %v4706
        %v4874 = vunpack.c.l.b16 %v4707
        %v4875 = vunpack.c.l.b16 %v4708
        %v4876 = vunpack.c.l.b16 %v4709
        %v4877 = vunpack.c.l.b16 %v4710
        %v4878 = vpack.c.b16 %v4847, %v4846
        %v4879 = vpack.c.b16 %v4849, %v4848
        %v4880 = vpack.c.b16 %v4851, %v4850
        %v4881 = vpack.c.b16 %v4853, %v4852
        %v4882 = vpack.c.b16 %v4855, %v4854
        %v4883 = vpack.c.b16 %v4857, %v4856
        %v4884 = vpack.c.b16 %v4859, %v4858
        %v4885 = vpack.c.b16 %v4861, %v4860
        %v4886 = vpack.c.b16 %v4863, %v4862
        %v4887 = vpack.c.b16 %v4865, %v4864
        %v4888 = vpack.c.b16 %v4867, %v4866
        %v4889 = vpack.c.b16 %v4869, %v4868
        %v4890 = vpack.c.b16 %v4871, %v4870
        %v4891 = vpack.c.b16 %v4873, %v4872
        %v4892 = vpack.c.b16 %v4875, %v4874
        %v4893 = vpack.c.b16 %v4877, %v4876
        %4910 = vmatprep.subr.bf16.mxu0 0
        %4911 = vmatpush1.bf16.msra.mxu0 %v4878
        %4912 = vmatprep.subr.bf16.mxu0 0
        %4913 = vmatpush1.bf16.msra.mxu0 %v4879
        %4914 = vmatprep.subr.bf16.mxu0 0
        %4915 = vmatpush1.bf16.msra.mxu0 %v4880
        %4916 = vmatprep.subr.bf16.mxu0 0
        %4917 = vmatpush1.bf16.msra.mxu0 %v4881
        %4918 = vmatprep.subr.bf16.mxu0 0
        %4919 = vmatpush1.bf16.msra.mxu0 %v4882
        %4920 = vmatprep.subr.bf16.mxu0 0
        %4921 = vmatpush1.bf16.msra.mxu0 %v4883
        %4922 = vmatprep.subr.bf16.mxu0 0
        %4923 = vmatpush1.bf16.msra.mxu0 %v4884
        %4924 = vmatprep.subr.bf16.mxu0 0
        %4925 = vmatpush1.bf16.msra.mxu0 %v4885
        %4926 = vmatprep.subr.bf16.mxu0 0
        %4927 = vmatpush1.bf16.msra.mxu0 %v4886
        %4928 = vmatprep.subr.bf16.mxu0 0
        %4929 = vmatpush1.bf16.msra.mxu0 %v4887
        %4930 = vmatprep.subr.bf16.mxu0 0
        %4931 = vmatpush1.bf16.msra.mxu0 %v4888
        %4932 = vmatprep.subr.bf16.mxu0 0
        %4933 = vmatpush1.bf16.msra.mxu0 %v4889
        %4934 = vmatprep.subr.bf16.mxu0 0
        %4935 = vmatpush1.bf16.msra.mxu0 %v4890
        %4936 = vmatprep.subr.bf16.mxu0 0
        %4937 = vmatpush1.bf16.msra.mxu0 %v4891
        %4938 = vmatprep.subr.bf16.mxu0 0
        %4939 = vmatpush1.bf16.msra.mxu0 %v4892
        %4940 = vmatprep.subr.bf16.mxu0 0
        %4941 = vmatpush1.bf16.msra.mxu0 %v4893
        %4942 = vmatprep.mubr.bf16.mxu0 %v4743
        %4943 = vmatmul.mubr.bf16.gmra.mrb[0].mxu0 %v4740
        %v4944 = vpop.f32.mrb[0].mxu0
        %v4945 = vadd.f32 0.0, %v4944
        %v4946 = vpop.f32.mrb[0].mxu0
        %v4947 = vpop.f32.mrb[0].mxu0
        %v4948 = vadd.f32 0.0, %v4947
        %v4949 = vpop.f32.mrb[0].mxu0
        %4950 = vmatprep.mubr.bf16.mxu0 %v4747
        %4951 = vmatmul.mubr.bf16.gmra.mrb[0].mxu0 %v4745
        %v4952 = vpop.f32.mrb[0].mxu0
        %v4953 = vadd.f32 0.0, %v4952
        %v4954 = vpop.f32.mrb[0].mxu0
        %v4955 = vpop.f32.mrb[0].mxu0
        %v4956 = vadd.f32 0.0, %v4955
        %v4957 = vpop.f32.mrb[0].mxu0
        %4958 = vmatprep.mubr.bf16.mxu0 %v4751
        %4959 = vmatmul.mubr.bf16.gmra.mrb[0].mxu0 %v4749
        %v4960 = vpop.f32.mrb[0].mxu0
        %v4961 = vadd.f32 0.0, %v4960
        %v4962 = vpop.f32.mrb[0].mxu0
        %v4963 = vpop.f32.mrb[0].mxu0
        %v4964 = vadd.f32 0.0, %v4963
        %v4965 = vpop.f32.mrb[0].mxu0
        %4966 = vmatprep.mubr.bf16.mxu0 %v4755
        %4967 = vmatmul.mubr.bf16.gmra.mrb[0].mxu0 %v4753
        %v4968 = vpop.f32.mrb[0].mxu0
        %v4969 = vadd.f32 0.0, %v4968
        %v4970 = vpop.f32.mrb[0].mxu0
        %v4971 = vpop.f32.mrb[0].mxu0
        %v4972 = vadd.f32 0.0, %v4971
        %v4973 = vpop.f32.mrb[0].mxu0
        %4974 = vmatprep.mubr.bf16.mxu0 %v4759
        %4975 = vmatmul.mubr.bf16.gmra.mrb[0].mxu0 %v4757
        %v4976 = vpop.f32.mrb[0].mxu0
        %v4977 = vadd.f32 0.0, %v4976
        %v4978 = vpop.f32.mrb[0].mxu0
        %v4979 = vpop.f32.mrb[0].mxu0
        %v4980 = vadd.f32 0.0, %v4979
        %v4981 = vpop.f32.mrb[0].mxu0
        %4982 = vmatprep.mubr.bf16.mxu0 %v4763
        %4983 = vmatmul.mubr.bf16.gmra.mrb[0].mxu0 %v4761
        %v4984 = vpop.f32.mrb[0].mxu0
        %v4985 = vadd.f32 0.0, %v4984
        %v4986 = vpop.f32.mrb[0].mxu0
        %v4987 = vpop.f32.mrb[0].mxu0
        %v4988 = vadd.f32 0.0, %v4987
        %v4989 = vpop.f32.mrb[0].mxu0
        %4990 = vmatprep.mubr.bf16.mxu0 %v4767
        %4991 = vmatmul.mubr.bf16.gmra.mrb[0].mxu0 %v4765
        %v4992 = vpop.f32.mrb[0].mxu0
        %v4993 = vadd.f32 0.0, %v4992
        %v4994 = vpop.f32.mrb[0].mxu0
        %v4995 = vpop.f32.mrb[0].mxu0
        %v4996 = vadd.f32 0.0, %v4995
        %v4997 = vpop.f32.mrb[0].mxu0
        %4998 = vmatprep.mubr.bf16.mxu0 %v4771
        %4999 = vmatmul.mubr.bf16.gmra.mrb[0].mxu0 %v4769
        %v5000 = vpop.f32.mrb[0].mxu0
        %v5001 = vadd.f32 0.0, %v5000
        %v5002 = vpop.f32.mrb[0].mxu0
        %v5003 = vpop.f32.mrb[0].mxu0
        %v5004 = vadd.f32 0.0, %v5003
        %v5005 = vpop.f32.mrb[0].mxu0
        %5006 = vmatprep.mubr.bf16.mxu0 %v4775
        %5007 = vmatmul.mubr.bf16.gmra.mrb[0].mxu0 %v4773
        %v5008 = vpop.f32.mrb[0].mxu0
        %v5009 = vadd.f32 0.0, %v5008
        %v5010 = vpop.f32.mrb[0].mxu0
        %v5011 = vpop.f32.mrb[0].mxu0
        %v5012 = vadd.f32 0.0, %v5011
        %v5013 = vpop.f32.mrb[0].mxu0
        %5014 = vmatprep.mubr.bf16.mxu0 %v4779
        %5015 = vmatmul.mubr.bf16.gmra.mrb[0].mxu0 %v4777
        %v5016 = vpop.f32.mrb[0].mxu0
        %v5017 = vadd.f32 0.0, %v5016
        %v5018 = vpop.f32.mrb[0].mxu0
        %v5019 = vpop.f32.mrb[0].mxu0
        %v5020 = vadd.f32 0.0, %v5019
        %v5021 = vpop.f32.mrb[0].mxu0
        %5022 = vmatprep.mubr.bf16.mxu0 %v4783
        %5023 = vmatmul.mubr.bf16.gmra.mrb[0].mxu0 %v4781
        %v5024 = vpop.f32.mrb[0].mxu0
        %v5025 = vadd.f32 0.0, %v5024
        %v5026 = vpop.f32.mrb[0].mxu0
        %v5027 = vpop.f32.mrb[0].mxu0
        %v5028 = vadd.f32 0.0, %v5027
        %v5029 = vpop.f32.mrb[0].mxu0
        %5030 = vmatprep.mubr.bf16.mxu0 %v4787
        %5031 = vmatmul.mubr.bf16.gmra.mrb[0].mxu0 %v4785
        %v5032 = vpop.f32.mrb[0].mxu0
        %v5033 = vadd.f32 0.0, %v5032
        %v5034 = vpop.f32.mrb[0].mxu0
        %v5035 = vpop.f32.mrb[0].mxu0
        %v5036 = vadd.f32 0.0, %v5035
        %v5037 = vpop.f32.mrb[0].mxu0
        %5038 = vmatprep.mubr.bf16.mxu0 %v4786
        %5039 = vmatmul.mubr.bf16.gmra.mrb[0].mxu0 %v4784
        %v5040 = vpop.f32.mrb[0].mxu0
        %v5041 = vadd.f32 0.0, %v5040
        %v5042 = vpop.f32.mrb[0].mxu0
        %v5043 = vpop.f32.mrb[0].mxu0
        %v5044 = vpop.f32.mrb[0].mxu0
        %5045 = vdwg.mxu0
        %v5046 = vadd.f32 %v367, %v4945
        %v5047 = vadd.f32 %v368, %v4948
        %v5048 = vadd.f32 %v369, %v4953
        %v5049 = vadd.f32 %v370, %v4956
        %v5050 = vadd.f32 %v371, %v4961
        %v5051 = vadd.f32 %v372, %v4964
        %v5052 = vadd.f32 %v373, %v4969
        %v5053 = vadd.f32 %v374, %v4972
        %v5054 = vadd.f32 %v375, %v4977
        %v5055 = vadd.f32 %v376, %v4980
        %v5056 = vadd.f32 %v377, %v4985
        %v5057 = vadd.f32 %v378, %v4988
        %v5058 = vadd.f32 %v379, %v4993
        %v5059 = vadd.f32 %v380, %v4996
        %v5060 = vadd.f32 %v381, %v5001
        %v5061 = vadd.f32 %v382, %v5004
        %v5062 = vadd.f32 %v383, %v5009
        %v5063 = vadd.f32 %v384, %v5012
        %v5064 = vadd.f32 %v385, %v5017
        %v5065 = vadd.f32 %v386, %v5020
        %v5066 = vadd.f32 %v387, %v5025
        %v5067 = vadd.f32 %v388, %v5028
        %v5068 = vadd.f32 %v389, %v5033
        %v5069 = vadd.f32 %v390, %v5036
        %v5070 = vadd.f32 %v391, %v5041
        %5071 = vst [vmem:[%s342] sm:$0xff] %v5046
        %5072 = vst [vmem:[%s342 + $0x8] sm:$0xff] %v5047
        %5073 = vst [vmem:[%s342 + $0x10] sm:$0xff] %v5048
        %5074 = vst [vmem:[%s342 + $0x18] sm:$0xff] %v5049
        %5075 = vst [vmem:[%s342 + $0x20] sm:$0xff] %v5050
        %5076 = vst [vmem:[%s342 + $0x28] sm:$0xff] %v5051
        %5077 = vst [vmem:[%s342 + $0x30] sm:$0xff] %v5052
        %5078 = vst [vmem:[%s342 + $0x38] sm:$0xff] %v5053
        %5079 = vst [vmem:[%s342 + $0x40] sm:$0xff] %v5054
        %5080 = vst [vmem:[%s342 + $0x48] sm:$0xff] %v5055
        %5081 = vst [vmem:[%s342 + $0x50] sm:$0xff] %v5056
        %5082 = vst [vmem:[%s342 + $0x58] sm:$0xff] %v5057
        %5083 = vst [vmem:[%s342 + $0x60] sm:$0xff] %v5058
        %5084 = vst [vmem:[%s342 + $0x68] sm:$0xff] %v5059
        %5085 = vst [vmem:[%s342 + $0x70] sm:$0xff] %v5060
        %5086 = vst [vmem:[%s342 + $0x78] sm:$0xff] %v5061
        %5087 = vst [vmem:[%s342 + $0x80] sm:$0xff] %v5062
        %5088 = vst [vmem:[%s342 + $0x88] sm:$0xff] %v5063
        %5089 = vst [vmem:[%s342 + $0x90] sm:$0xff] %v5064
        %5090 = vst [vmem:[%s342 + $0x98] sm:$0xff] %v5065
        %5091 = vst [vmem:[%s342 + $0xa0] sm:$0xff] %v5066
        %5092 = vst [vmem:[%s342 + $0xa8] sm:$0xff] %v5067
        %5093 = vst [vmem:[%s342 + $0xb0] sm:$0xff] %v5068
        %5094 = vst [vmem:[%s342 + $0xb8] sm:$0xff] %v5069
        %5095 = vst [vmem:[%s342 + $0xc0] sm:$0xff] %v5070
        %s5096 = sand.u32 %s216, 1
        %s5097 = scalar_lea.sflag [#allocation7], %s5096
        %s5098 = sand.u32 %s216, 1
        %s5099 = smul.addr %s5098, 200
        %s5100 = scalar_lea.vmem [#allocation12], %s5099
        // Predicated region
        $region69: #{tpu_custom_call.1} parent=51 // pred_check
          %p5101 = pneg %p226
        $region70: #{tpu_custom_call.1} parent=51 // pred_check_branch
          %5103 = sbr.rel (%p5101) target = $region72
        $region71: #{tpu_custom_call.1} parent=51 // pred_region
          %s5104 = smul.u32 25, %s31
          %s5106 = ssub.s32 3200, 3200
          %5107 = vsyncadd %s5097, %s5106
          %s5108 = smul.addr %s30, 25
          %s5109 = sadd.s32 %s5104, %s5108
          %s5110 = smul.addr %s5109, 128
          %s5111 = scalar_lea.hbm %s9, %s5110
          %s5112 = sshll.u32 %s5100, 4
          %s5113 = int_to_ptr.vmem [resolvable:$true] %s5112
          %5118 = dma.vmem_to_hbm [thread:$0]  %s5113, 3200, %s5111, %s5097, 128, 128, 8
        $region72: #{tpu_custom_call.1} parent=51 // pred_fallthru
          _
      $region52: #{tpu_custom_call.1} parent=5 // pred_fallthru
        _
      %p5119 = scmp.le.s32.totalorder 2, %s21
      // Predicated region
      $region73: #{tpu_custom_call.1} parent=5 // pred_check
        %p5120 = pneg %p5119
      $region74: #{tpu_custom_call.1} parent=5 // pred_check_branch
        %5122 = sbr.rel (%p5120) target = $region76
      $region75: #{tpu_custom_call.1} parent=5 // pred_region
        %s5123 = ssub.s32 %s21, 2
        // Predicated region
        $region77: #{tpu_custom_call.1} parent=75 // pred_check
          %p5124 = pneg %p232
        $region78: #{tpu_custom_call.1} parent=75 // pred_check_branch
          %5126 = sbr.rel (%p5124) target = $region80
        $region79: #{tpu_custom_call.1} parent=75 // pred_region
          %s5127 = sand.u32 %s217, 1
          %s5128 = scalar_lea.sflag [#allocation7], %s5127
          %s5129 = sand.u32 %s217, 1
          %s5130 = smul.addr %s5129, 200
          %s5131 = scalar_lea.vmem [#allocation12], %s5130
          %5132 = dma.done %s5128, 3200
        $region80: #{tpu_custom_call.1} parent=75 // pred_fallthru
          _
      $region76: #{tpu_custom_call.1} parent=5 // pred_fallthru
        _
    $region6: #{tpu_custom_call.1} parent=1 // loop_footer
      %s25 = sadd.s32 1, %s21
    $region7: #{tpu_custom_call.1} parent=1 // loop_footer_branch
      %20 = sbr.rel target = $region3
    $region8: #{tpu_custom_call.1} parent=1 // loop_exit
      _
    %5133 = vsyncpa [#allocation6], 1
    %s5134 = scalar_lea.sflag [#allocation6], 1
    %5135 = vsyncpa %s5134, 1
    %5136 = vsyncpa [#allocation10], 1
    %5137 = vsyncpa [#allocation7], 1
    %s5138 = scalar_lea.sflag [#allocation7], 1
    %5139 = vsyncpa %s5138, 1
    %5140 = vsyncpa [#allocation8], 1
    %s5141 = scalar_lea.sflag [#allocation8], 1
    %5142 = vsyncpa %s5141, 1
  %5143 = vsyncmov [#allocation4]
  %s5144 = vpop.sfrf %5143
  %p5145 = scmp.eq.s32.totalorder %s5144, 0
  %p5146 = pneg %p5145
  %5148 = shalt.err (%p5146)

</llo_original>
